<compile_context>
chip_gen: v7x
topology: tpu7x:2x2x1
jax: 0.10.0
libtpu: 0.0.40
codegen_flags: <defaults>
</compile_context>

<pallas_src>
import math

import jax
import jax.numpy as jnp
from jax.experimental import pallas as pl
from jax.experimental.pallas import tpu as pltpu


_LANE_TILE = 128   # planes per grid step (lane dimension of every vreg)
_HALO = 2          # halo needed by the 5-tap gaussian / motion stages


def _round_up(v, m):
    return (v + m - 1) // m * m


# ---------------------------------------------------------------------------
# Pallas kernel: fused S&P + separable gaussian + motion blur + erase + brightness
# ---------------------------------------------------------------------------
def _aug_kernel(g_ref, m_ref, badd_ref, xp_ref, salt_ref, pep_ref, erase_ref,
                out_ref, gbuf):
    H, W, _ = out_ref.shape

    # ---- zero the constant border of the motion-blur scratch only once ----
    # (scratch persists across grid steps; the interior is overwritten below)
    @pl.when(pl.program_id(0) == 0)
    def _():
        gbuf[...] = jnp.zeros_like(gbuf)

    # ---- salt & pepper (same (H, W) mask for every plane / tensor) ----
    x = xp_ref[...]                                       # (H+4, Wpr, 128)
    salt = salt_ref[...]                                  # (H+4, Wpr, 1)
    pep = pep_ref[...]
    x = jnp.where(pep > 0.5, 0.0, jnp.where(salt > 0.5, 1.0, x))

    # ---- separable 5-tap gaussian (reflect halo already in the data) ----
    row = g_ref[0] * x[:, 0:W, :]
    for j in range(1, 5):
        row = row + g_ref[j] * x[:, j:j + W, :]           # (H+4, W, 128)
    col = g_ref[0] * row[0:H, :, :]
    for i in range(1, 5):
        col = col + g_ref[i] * row[i:i + H, :, :]         # (H, W, 128)

    # ---- 5x5 motion blur with constant-zero border (kornia default) ----
    gbuf[_HALO:_HALO + H, _HALO:_HALO + W, :] = col
    acc = m_ref[0] * gbuf[0:H, 0:W, :]
    for t in range(1, 25):
        i, j = t // 5, t % 5
        acc = acc + m_ref[t] * gbuf[i:i + H, j:j + W, :]  # (H, W, 128)

    # ---- random erasing (value 0) + additive brightness + clamp [0, 1] ----
    y = acc * (1.0 - erase_ref[...])
    y = jnp.clip(y + badd_ref[0], 0.0, 1.0)
    out_ref[...] = y.astype(out_ref.dtype)


# ---------------------------------------------------------------------------
# Wrapper: fuse the five tensors into one lane-dense slab and launch once
# ---------------------------------------------------------------------------
def _apply_aug_fused(tensors, salt, pep, erase, g1, m5, b_add):
    shapes = [t.shape for t in tensors]
    dtypes = [t.dtype for t in tensors]
    H, W = shapes[0][2], shapes[0][3]

    common = jnp.result_type(*dtypes)
    out_dtype = common if jnp.issubdtype(common, jnp.floating) else jnp.float32

    # Fuse all planes of all tensors: (P, H, W) -> (H, W, P) with P on lanes.
    planes = [t.astype(jnp.float32).reshape(-1, H, W) for t in tensors]
    x = jnp.concatenate(planes, axis=0)                 # (P, H, W)
    P = x.shape[0]
    P_pad = _round_up(P, _LANE_TILE)
    Wh = W + 2 * _HALO
    Wpr = _round_up(Wh, 8)
    Hp = H + 2 * _HALO

    x = jnp.transpose(x, (1, 2, 0))                     # (H, W, P)
    x = jnp.pad(x, ((_HALO, _HALO), (_HALO, _HALO), (0, 0)), mode="reflect")
    x = jnp.pad(x, ((0, 0), (0, Wpr - Wh), (0, P_pad - P)))      # zero pad

    def _pad_mask(msk):
        m = jnp.pad(msk.astype(jnp.float32), _HALO, mode="reflect")
        m = jnp.pad(m, ((0, 0), (0, Wpr - Wh)))
        return m[:, :, None]                            # (Hp, Wpr, 1)

    salt_p = _pad_mask(salt)
    pep_p = _pad_mask(pep)
    erase3 = erase.astype(jnp.float32)[:, :, None]      # (H, W, 1)

    g = g1.astype(jnp.float32)                          # (5,)  gaussian taps
    m = m5.reshape(25).astype(jnp.float32)              # (25,) motion taps
    badd = jnp.reshape(b_add, (1,)).astype(jnp.float32)

    out = pl.pallas_call(
        _aug_kernel,
        out_shape=jax.ShapeDtypeStruct((H, W, P_pad), out_dtype),
        grid=(P_pad // _LANE_TILE,),
        in_specs=[
            pl.BlockSpec(memory_space=pltpu.MemorySpace.SMEM),       # gaussian taps
            pl.BlockSpec(memory_space=pltpu.MemorySpace.SMEM),       # motion taps
            pl.BlockSpec(memory_space=pltpu.MemorySpace.SMEM),       # brightness
            pl.BlockSpec((Hp, Wpr, _LANE_TILE), lambda i: (0, 0, i)),  # image slab
            pl.BlockSpec((Hp, Wpr, 1), lambda i: (0, 0, 0)),           # salt mask
            pl.BlockSpec((Hp, Wpr, 1), lambda i: (0, 0, 0)),           # pepper mask
            pl.BlockSpec((H, W, 1), lambda i: (0, 0, 0)),              # erase mask
        ],
        out_specs=pl.BlockSpec((H, W, _LANE_TILE), lambda i: (0, 0, i)),
        scratch_shapes=[pltpu.VMEM((H + 2 * _HALO, Wpr, _LANE_TILE),
                                   jnp.float32)],
        compiler_params=pltpu.CompilerParams(
            dimension_semantics=("parallel",),      # plane chunks independent (v7x 2 TCs)
            vmem_limit_bytes=48 * 1024 * 1024),     # explicit budget, fits v7x 64 MiB VMEM
    )(g, m, badd, x, salt_p, pep_p, erase3)

    out = jnp.transpose(out[:, :, :P], (2, 0, 1))       # (P, H, W)
    results, off = [], 0
    for shp, dt in zip(shapes, dtypes):
        n = shp[0] * shp[1]
        results.append(out[off:off + n].reshape(shp).astype(dt))
        off += n
    return tuple(results)


# ---------------------------------------------------------------------------
# Parameter construction (device-side, jittable)
# ---------------------------------------------------------------------------
def _gaussian_taps5(sigma):
    ax = jnp.arange(5, dtype=jnp.float32) - 2.0
    g = jnp.exp(-(ax * ax) / (2.0 * sigma * sigma))
    return g / jnp.sum(g)


def _motion_kernel5(angle_deg, direction):
    # TODO(synk): bilinear (not 'nearest') rotation approximation of
    # kornia.filters.get_motion_kernel2d.
    d = (jnp.clip(direction, -1.0, 1.0) + 1.0) / 2.0
    line = d + (1.0 - 2.0 * d) * jnp.arange(5, dtype=jnp.float32) / 4.0  # linspace(d, 1-d, 5)
    theta = angle_deg * (math.pi / 180.0)
    c, s = jnp.cos(theta), jnp.sin(theta)
    yy = jnp.arange(5, dtype=jnp.float32)[:, None] - 2.0
    xx = jnp.arange(5, dtype=jnp.float32)[None, :] - 2.0
    sx = c * xx + s * yy + 2.0           # inverse-rotated sample coordinates
    sy = -s * xx + c * yy + 2.0
    wy = jnp.maximum(0.0, 1.0 - jnp.abs(sy - 2.0))
    cols = jnp.arange(5, dtype=jnp.float32)
    wx = jnp.maximum(0.0, 1.0 - jnp.abs(sx[:, :, None] - cols))
    k = wy * jnp.sum(wx * line, axis=-1)
    return k / jnp.maximum(jnp.sum(k), 1e-8)


class Augmentation:
    """JAX/Pallas re-implementation of the PyTorch `Augmentation` module."""

    def __init__(self, random_salt_and_pep=0.0, random_gauss_blur=0.0,
                 random_motion_blur=0.0, random_erase=0.0,
                 random_brightness=0.0):
        self.snp_p = random_salt_and_pep
        self.gb_p = random_gauss_blur
        self.mb_p = random_motion_blur
        self.erase_p = random_erase
        self.brightness_p = random_brightness
        self._jit_augment = jax.jit(self._augment)

    # -- "forward_parameters": sampled once, shared by all five tensors --
    def _forward_parameters(self, key, H, W):
        ks = jax.random.split(key, 14)
        apply_snp = jax.random.uniform(ks[0]) < self.snp_p
        apply_gb = jax.random.uniform(ks[1]) < self.gb_p
        apply_mb = jax.random.uniform(ks[2]) < self.mb_p
        apply_er = jax.random.uniform(ks[3]) < self.erase_p
        apply_br = jax.random.uniform(ks[4]) < self.brightness_p

        # salt & pepper (amount=0.5, salt_vs_pepper=0.5, same_on_batch)
        u1 = jax.random.uniform(ks[5], (H, W))
        u2 = jax.random.uniform(ks[6], (H, W))
        noise = u1 < 0.5
        salt = jnp.where(apply_snp, (noise & (u2 < 0.5)).astype(jnp.float32), 0.0)
        pep = jnp.where(apply_snp, (noise & (u2 >= 0.5)).astype(jnp.float32), 0.0)

        # gaussian blur (5x5 separable, sigma ~ U(0.1, 2.0))
        sigma = jax.random.uniform(ks[7], minval=0.1, maxval=2.0)
        delta1 = jnp.zeros((5,), jnp.float32).at[2].set(1.0)
        g1 = jnp.where(apply_gb, _gaussian_taps5(sigma), delta1)

        # motion blur (ksize=5, angle ~ U(-30, 30), direction ~ U(-0.5, 0.5))
        angle = jax.random.uniform(ks[8], minval=-30.0, maxval=30.0)
        direction = jax.random.uniform(ks[9], minval=-0.5, maxval=0.5)
        delta2 = jnp.zeros((5, 5), jnp.float32).at[2, 2].set(1.0)
        m5 = jnp.where(apply_mb, _motion_kernel5(angle, direction), delta2)

        # random erasing (scale=(0.001, 0.001), ratio=(0.3, 1/0.3), value=0)
        area = 0.001 * H * W
        log_r = jax.random.uniform(ks[10], minval=math.log(0.3),
                                   maxval=math.log(1.0 / 0.3))
        ratio = jnp.exp(log_r)
        eh = jnp.clip(jnp.round(jnp.sqrt(area * ratio)), 1.0, float(H))
        ew = jnp.clip(jnp.round(jnp.sqrt(area / ratio)), 1.0, float(W))
        y0 = jnp.floor(jax.random.uniform(ks[11]) * (H - eh + 1.0))
        x0 = jnp.floor(jax.random.uniform(ks[12]) * (W - ew + 1.0))
        rows = jnp.arange(H, dtype=jnp.float32)[:, None]
        cols = jnp.arange(W, dtype=jnp.float32)[None, :]
        er = ((rows >= y0) & (rows < y0 + eh) &
              (cols >= x0) & (cols < x0 + ew)).astype(jnp.float32)
        erase = jnp.where(apply_er, er, 0.0)

        # brightness: kornia RandomBrightness is additive: clamp(x + (f - 1), 0, 1)
        factor = jax.random.uniform(ks[13], minval=0.2, maxval=2.0)
        b_add = jnp.where(apply_br, factor - 1.0, 0.0)

        return salt, pep, erase, g1, m5, b_add

    def _augment(self, frame1, frame2, frame3, target, mask, key):
        H, W = frame1.shape[2], frame1.shape[3]
        params = self._forward_parameters(key, H, W)
        return _apply_aug_fused((frame1, frame2, frame3, target, mask), *params)

    def forward(self, frame1, frame2, frame3, target, mask, key):
        if (self.snp_p == 0.0 and self.gb_p == 0.0 and self.mb_p == 0.0
                and self.erase_p == 0.0 and self.brightness_p == 0.0):
            return (frame1, frame2, frame3, target, mask)
        return self._jit_augment(frame1, frame2, frame3, target, mask, key)

    __call__ = forward


# ---------------------------------------------------------------------------
# Pure-jnp reference of the same pipeline (for correctness checking)
# ---------------------------------------------------------------------------
def _reference_apply(tensors, salt, pep, erase, g1, m5, b_add):
    shapes = [t.shape for t in tensors]
    dtypes = [t.dtype for t in tensors]
    H, W = shapes[0][2], shapes[0][3]
    x = jnp.concatenate([t.astype(jnp.float32).reshape(-1, H, W)
                         for t in tensors], axis=0)
    x = jnp.where(pep[None] > 0.5, 0.0, jnp.where(salt[None] > 0.5, 1.0, x))
    xp = jnp.pad(x, ((0, 0), (2, 2), (2, 2)), mode="reflect")
    row = sum(g1[j] * xp[:, :, j:j + W] for j in range(5))
    col = sum(g1[i] * row[:, i:i + H, :] for i in range(5))
    gp = jnp.pad(col, ((0, 0), (2, 2), (2, 2)))          # constant-0 border
    mot = sum(m5[i, j] * gp[:, i:i + H, j:j + W]
              for i in range(5) for j in range(5))
    y = mot * (1.0 - erase[None])
    y = jnp.clip(y + b_add, 0.0, 1.0)
    outs, off = [], 0
    for shp, dt in zip(shapes, dtypes):
        n = shp[0] * shp[1]
        outs.append(y[off:off + n].reshape(shp).astype(dt))
        off += n
    return tuple(outs)


# ---------------------------------------------------------------------------
# Demo
# ---------------------------------------------------------------------------
if __name__ == "__main__":
    key = jax.random.PRNGKey(0)
    k1, k2, k3, k4, k5, kparams = jax.random.split(key, 6)

    N, C, H, W = 2, 4, 16, 16
    frame1 = jax.random.uniform(k1, (N, C, H, W), dtype=jnp.float32)
    frame2 = jax.random.uniform(k2, (N, C, H, W), dtype=jnp.float32)
    frame3 = jax.random.uniform(k3, (N, C, H, W), dtype=jnp.float32)
    target = jax.random.uniform(k4, (N, C, H, W), dtype=jnp.float32)
    mask = (jax.random.uniform(k5, (N, 1, H, W)) > 0.5).astype(jnp.float32)

    # Identity path (all probabilities zero -> passthrough, as in PyTorch).
    aug_id = Augmentation()
    out_id = aug_id(frame1, frame2, frame3, target, mask, kparams)
    assert out_id[0] is frame1 and out_id[4] is mask

    # Active path: all augmentations enabled -> one fused Pallas kernel.
    aug = Augmentation(random_salt_and_pep=1.0, random_gauss_blur=1.0,
                       random_motion_blur=1.0, random_erase=1.0,
                       random_brightness=1.0)
    outs = aug(frame1, frame2, frame3, target, mask, kparams)
    outs = jax.block_until_ready(outs)

    assert outs[0].shape == (N, C, H, W)
    assert outs[4].shape == (N, 1, H, W)
    assert all(bool(jnp.all(jnp.isfinite(o))) for o in outs)
    assert all(bool(jnp.all((o >= 0.0) & (o <= 1.0))) for o in outs)

    # Correctness check: Pallas path vs pure-jnp reference with identical params.
    params = aug._forward_parameters(kparams, H, W)
    tensors = (frame1, frame2, frame3, target, mask)
    pallas_outs = jax.block_until_ready(_apply_aug_fused(tensors, *params))
    ref_outs = _reference_apply(tensors, *params)
    for got, want in zip(pallas_outs, ref_outs):
        err = float(jnp.max(jnp.abs(got - want)))
        assert err < 1e-4, f"mismatch vs reference: {err}"

    print("KERNEL_OK")
</pallas_src>

<mosaic_0001>
module attributes {stable_mosaic.version = 11 : i64} {
  func.func @_aug_kernel(%arg0: i32, %arg1: memref<5xf32, #tpu.memory_space<smem>>, %arg2: memref<25xf32, #tpu.memory_space<smem>>, %arg3: memref<1xf32, #tpu.memory_space<smem>>, %arg4: memref<20x24x128xf32, #tpu.memory_space<vmem>>, %arg5: memref<20x24x1xf32, #tpu.memory_space<vmem>>, %arg6: memref<20x24x1xf32, #tpu.memory_space<vmem>>, %arg7: memref<16x16x1xf32, #tpu.memory_space<vmem>>, %arg8: memref<16x16x128xf32, #tpu.memory_space<vmem>>, %arg9: memref<20x24x128xf32, #tpu.memory_space<vmem>>) attributes {dimension_semantics = [#tpu.dimension_semantics<parallel>], iteration_bounds = array<i64: 1>, scalar_prefetch = 0 : i64, scratch_operands = 1 : i64, tpu.core_type = #tpu.core_type<tc>, window_params = [{transform_indices = @transform_0, window_bounds = array<i64: 5>}, {transform_indices = @transform_1, window_bounds = array<i64: 25>}, {transform_indices = @transform_2, window_bounds = array<i64: 1>}, {transform_indices = @transform_3, window_bounds = array<i64: 20, 24, 128>}, {pipeline_mode = #tpu.pipeline_mode<synchronous>, transform_indices = @transform_4, window_bounds = array<i64: 20, 24, 1>}, {pipeline_mode = #tpu.pipeline_mode<synchronous>, transform_indices = @transform_5, window_bounds = array<i64: 20, 24, 1>}, {pipeline_mode = #tpu.pipeline_mode<synchronous>, transform_indices = @transform_6, window_bounds = array<i64: 16, 16, 1>}, {transform_indices = @transform_7, window_bounds = array<i64: 16, 16, 128>}]} {
    %c0_i32 = arith.constant 0 : i32
    %0 = arith.cmpi eq, %arg0, %c0_i32 : i32
    %1 = arith.extui %0 : i1 to i32
    %c0_i32_0 = arith.constant 0 : i32
    %2 = arith.cmpi ne, %1, %c0_i32_0 : i32
    scf.if %2 {
      %cst_111 = arith.constant 0.000000e+00 : f32
      %204 = vector.broadcast %cst_111 : f32 to vector<20x24x128xf32>
      %c0_112 = arith.constant 0 : index
      %c0_113 = arith.constant 0 : index
      %c0_114 = arith.constant 0 : index
      %205 = vector.load %arg9[%c0_112, %c0_113, %c0_114] : memref<20x24x128xf32, #tpu.memory_space<vmem>>, vector<20x24x128xf32>
      tpu.vector_store %arg9[%c0_112, %c0_113, %c0_114], %204 {strides = array<i32>} : memref<20x24x128xf32, #tpu.memory_space<vmem>>, vector<20x24x128xf32>,
    } else {
    }
    %c0 = arith.constant 0 : index
    %c0_1 = arith.constant 0 : index
    %c0_2 = arith.constant 0 : index
    %3 = vector.load %arg4[%c0, %c0_1, %c0_2] : memref<20x24x128xf32, #tpu.memory_space<vmem>>, vector<20x24x128xf32>
    %c0_3 = arith.constant 0 : index
    %c0_4 = arith.constant 0 : index
    %c0_5 = arith.constant 0 : index
    %4 = vector.load %arg5[%c0_3, %c0_4, %c0_5] : memref<20x24x1xf32, #tpu.memory_space<vmem>>, vector<20x24x1xf32>
    %c0_6 = arith.constant 0 : index
    %c0_7 = arith.constant 0 : index
    %c0_8 = arith.constant 0 : index
    %5 = vector.load %arg6[%c0_6, %c0_7, %c0_8] : memref<20x24x1xf32, #tpu.memory_space<vmem>>, vector<20x24x1xf32>
    %cst = arith.constant 5.000000e-01 : f32
    %6 = vector.broadcast %cst : f32 to vector<20x24x1xf32>
    %7 = arith.cmpf ogt, %5, %6 : vector<20x24x1xf32>
    %cst_9 = arith.constant 5.000000e-01 : f32
    %8 = vector.broadcast %cst_9 : f32 to vector<20x24x1xf32>
    %9 = arith.cmpf ogt, %4, %8 : vector<20x24x1xf32>
    %cst_10 = arith.constant 1.000000e+00 : f32
    %10 = vector.shape_cast %9 : vector<20x24x1xi1> to vector<20x24x1xi1>
    %11 = vector.broadcast %10 : vector<20x24x1xi1> to vector<20x24x128xi1>
    %12 = vector.broadcast %cst_10 : f32 to vector<20x24x128xf32>
    %13 = arith.select %11, %12, %3 : vector<20x24x128xi1>, vector<20x24x128xf32>
    %cst_11 = arith.constant 0.000000e+00 : f32
    %14 = vector.shape_cast %7 : vector<20x24x1xi1> to vector<20x24x1xi1>
    %15 = vector.broadcast %14 : vector<20x24x1xi1> to vector<20x24x128xi1>
    %16 = vector.broadcast %cst_11 : f32 to vector<20x24x128xf32>
    %17 = arith.select %15, %16, %13 : vector<20x24x128xi1>, vector<20x24x128xf32>
    %c0_12 = arith.constant 0 : index
    %18 = memref.load %arg1[%c0_12] : memref<5xf32, #tpu.memory_space<smem>>
    %19 = vector.extract_strided_slice %17 {offsets = [0, 0, 0], sizes = [20, 16, 128], strides = [1, 1, 1]} : vector<20x24x128xf32> to vector<20x16x128xf32>
    %20 = vector.broadcast %18 : f32 to vector<20x16x128xf32>
    %21 = arith.mulf %20, %19 : vector<20x16x128xf32>
    %c1 = arith.constant 1 : index
    %22 = memref.load %arg1[%c1] : memref<5xf32, #tpu.memory_space<smem>>
    %23 = vector.extract_strided_slice %17 {offsets = [0, 1, 0], sizes = [20, 16, 128], strides = [1, 1, 1]} : vector<20x24x128xf32> to vector<20x16x128xf32>
    %24 = vector.broadcast %22 : f32 to vector<20x16x128xf32>
    %25 = arith.mulf %24, %23 : vector<20x16x128xf32>
    %26 = arith.addf %21, %25 : vector<20x16x128xf32>
    %c2 = arith.constant 2 : index
    %27 = memref.load %arg1[%c2] : memref<5xf32, #tpu.memory_space<smem>>
    %28 = vector.extract_strided_slice %17 {offsets = [0, 2, 0], sizes = [20, 16, 128], strides = [1, 1, 1]} : vector<20x24x128xf32> to vector<20x16x128xf32>
    %29 = vector.broadcast %27 : f32 to vector<20x16x128xf32>
    %30 = arith.mulf %29, %28 : vector<20x16x128xf32>
    %31 = arith.addf %26, %30 : vector<20x16x128xf32>
    %c3 = arith.constant 3 : index
    %32 = memref.load %arg1[%c3] : memref<5xf32, #tpu.memory_space<smem>>
    %33 = vector.extract_strided_slice %17 {offsets = [0, 3, 0], sizes = [20, 16, 128], strides = [1, 1, 1]} : vector<20x24x128xf32> to vector<20x16x128xf32>
    %34 = vector.broadcast %32 : f32 to vector<20x16x128xf32>
    %35 = arith.mulf %34, %33 : vector<20x16x128xf32>
    %36 = arith.addf %31, %35 : vector<20x16x128xf32>
    %c4 = arith.constant 4 : index
    %37 = memref.load %arg1[%c4] : memref<5xf32, #tpu.memory_space<smem>>
    %38 = vector.extract_strided_slice %17 {offsets = [0, 4, 0], sizes = [20, 16, 128], strides = [1, 1, 1]} : vector<20x24x128xf32> to vector<20x16x128xf32>
    %39 = vector.broadcast %37 : f32 to vector<20x16x128xf32>
    %40 = arith.mulf %39, %38 : vector<20x16x128xf32>
    %41 = arith.addf %36, %40 : vector<20x16x128xf32>
    %c0_13 = arith.constant 0 : index
    %42 = memref.load %arg1[%c0_13] : memref<5xf32, #tpu.memory_space<smem>>
    %43 = vector.extract_strided_slice %41 {offsets = [0, 0, 0], sizes = [16, 16, 128], strides = [1, 1, 1]} : vector<20x16x128xf32> to vector<16x16x128xf32>
    %44 = vector.broadcast %42 : f32 to vector<16x16x128xf32>
    %45 = arith.mulf %44, %43 : vector<16x16x128xf32>
    %c1_14 = arith.constant 1 : index
    %46 = memref.load %arg1[%c1_14] : memref<5xf32, #tpu.memory_space<smem>>
    %47 = vector.extract_strided_slice %41 {offsets = [1, 0, 0], sizes = [16, 16, 128], strides = [1, 1, 1]} : vector<20x16x128xf32> to vector<16x16x128xf32>
    %48 = vector.broadcast %46 : f32 to vector<16x16x128xf32>
    %49 = arith.mulf %48, %47 : vector<16x16x128xf32>
    %50 = arith.addf %45, %49 : vector<16x16x128xf32>
    %c2_15 = arith.constant 2 : index
    %51 = memref.load %arg1[%c2_15] : memref<5xf32, #tpu.memory_space<smem>>
    %52 = vector.extract_strided_slice %41 {offsets = [2, 0, 0], sizes = [16, 16, 128], strides = [1, 1, 1]} : vector<20x16x128xf32> to vector<16x16x128xf32>
    %53 = vector.broadcast %51 : f32 to vector<16x16x128xf32>
    %54 = arith.mulf %53, %52 : vector<16x16x128xf32>
    %55 = arith.addf %50, %54 : vector<16x16x128xf32>
    %c3_16 = arith.constant 3 : index
    %56 = memref.load %arg1[%c3_16] : memref<5xf32, #tpu.memory_space<smem>>
    %57 = vector.extract_strided_slice %41 {offsets = [3, 0, 0], sizes = [16, 16, 128], strides = [1, 1, 1]} : vector<20x16x128xf32> to vector<16x16x128xf32>
    %58 = vector.broadcast %56 : f32 to vector<16x16x128xf32>
    %59 = arith.mulf %58, %57 : vector<16x16x128xf32>
    %60 = arith.addf %55, %59 : vector<16x16x128xf32>
    %c4_17 = arith.constant 4 : index
    %61 = memref.load %arg1[%c4_17] : memref<5xf32, #tpu.memory_space<smem>>
    %62 = vector.extract_strided_slice %41 {offsets = [4, 0, 0], sizes = [16, 16, 128], strides = [1, 1, 1]} : vector<20x16x128xf32> to vector<16x16x128xf32>
    %63 = vector.broadcast %61 : f32 to vector<16x16x128xf32>
    %64 = arith.mulf %63, %62 : vector<16x16x128xf32>
    %65 = arith.addf %60, %64 : vector<16x16x128xf32>
    %c2_18 = arith.constant 2 : index
    %c2_19 = arith.constant 2 : index
    %c0_20 = arith.constant 0 : index
    %66 = vector.load %arg9[%c2_18, %c2_19, %c0_20] : memref<20x24x128xf32, #tpu.memory_space<vmem>>, vector<16x16x128xf32>
    tpu.vector_store %arg9[%c2_18, %c2_19, %c0_20], %65 {strides = array<i32>} : memref<20x24x128xf32, #tpu.memory_space<vmem>>, vector<16x16x128xf32>,
    %c0_21 = arith.constant 0 : index
    %67 = memref.load %arg2[%c0_21] : memref<25xf32, #tpu.memory_space<smem>>
    %c0_22 = arith.constant 0 : index
    %c0_23 = arith.constant 0 : index
    %c0_24 = arith.constant 0 : index
    %68 = vector.load %arg9[%c0_22, %c0_23, %c0_24] : memref<20x24x128xf32, #tpu.memory_space<vmem>>, vector<16x16x128xf32>
    %69 = vector.broadcast %67 : f32 to vector<16x16x128xf32>
    %70 = arith.mulf %69, %68 : vector<16x16x128xf32>
    %c1_25 = arith.constant 1 : index
    %71 = memref.load %arg2[%c1_25] : memref<25xf32, #tpu.memory_space<smem>>
    %c0_26 = arith.constant 0 : index
    %c1_27 = arith.constant 1 : index
    %c0_28 = arith.constant 0 : index
    %72 = vector.load %arg9[%c0_26, %c1_27, %c0_28] : memref<20x24x128xf32, #tpu.memory_space<vmem>>, vector<16x16x128xf32>
    %73 = vector.broadcast %71 : f32 to vector<16x16x128xf32>
    %74 = arith.mulf %73, %72 : vector<16x16x128xf32>
    %75 = arith.addf %70, %74 : vector<16x16x128xf32>
    %c2_29 = arith.constant 2 : index
    %76 = memref.load %arg2[%c2_29] : memref<25xf32, #tpu.memory_space<smem>>
    %c0_30 = arith.constant 0 : index
    %c2_31 = arith.constant 2 : index
    %c0_32 = arith.constant 0 : index
    %77 = vector.load %arg9[%c0_30, %c2_31, %c0_32] : memref<20x24x128xf32, #tpu.memory_space<vmem>>, vector<16x16x128xf32>
    %78 = vector.broadcast %76 : f32 to vector<16x16x128xf32>
    %79 = arith.mulf %78, %77 : vector<16x16x128xf32>
    %80 = arith.addf %75, %79 : vector<16x16x128xf32>
    %c3_33 = arith.constant 3 : index
    %81 = memref.load %arg2[%c3_33] : memref<25xf32, #tpu.memory_space<smem>>
    %c0_34 = arith.constant 0 : index
    %c3_35 = arith.constant 3 : index
    %c0_36 = arith.constant 0 : index
    %82 = vector.load %arg9[%c0_34, %c3_35, %c0_36] : memref<20x24x128xf32, #tpu.memory_space<vmem>>, vector<16x16x128xf32>
    %83 = vector.broadcast %81 : f32 to vector<16x16x128xf32>
    %84 = arith.mulf %83, %82 : vector<16x16x128xf32>
    %85 = arith.addf %80, %84 : vector<16x16x128xf32>
    %c4_37 = arith.constant 4 : index
    %86 = memref.load %arg2[%c4_37] : memref<25xf32, #tpu.memory_space<smem>>
    %c0_38 = arith.constant 0 : index
    %c4_39 = arith.constant 4 : index
    %c0_40 = arith.constant 0 : index
    %87 = vector.load %arg9[%c0_38, %c4_39, %c0_40] : memref<20x24x128xf32, #tpu.memory_space<vmem>>, vector<16x16x128xf32>
    %88 = vector.broadcast %86 : f32 to vector<16x16x128xf32>
    %89 = arith.mulf %88, %87 : vector<16x16x128xf32>
    %90 = arith.addf %85, %89 : vector<16x16x128xf32>
    %c5 = arith.constant 5 : index
    %91 = memref.load %arg2[%c5] : memref<25xf32, #tpu.memory_space<smem>>
    %c1_41 = arith.constant 1 : index
    %c0_42 = arith.constant 0 : index
    %c0_43 = arith.constant 0 : index
    %92 = vector.load %arg9[%c1_41, %c0_42, %c0_43] : memref<20x24x128xf32, #tpu.memory_space<vmem>>, vector<16x16x128xf32>
    %93 = vector.broadcast %91 : f32 to vector<16x16x128xf32>
    %94 = arith.mulf %93, %92 : vector<16x16x128xf32>
    %95 = arith.addf %90, %94 : vector<16x16x128xf32>
    %c6 = arith.constant 6 : index
    %96 = memref.load %arg2[%c6] : memref<25xf32, #tpu.memory_space<smem>>
    %c1_44 = arith.constant 1 : index
    %c1_45 = arith.constant 1 : index
    %c0_46 = arith.constant 0 : index
    %97 = vector.load %arg9[%c1_44, %c1_45, %c0_46] : memref<20x24x128xf32, #tpu.memory_space<vmem>>, vector<16x16x128xf32>
    %98 = vector.broadcast %96 : f32 to vector<16x16x128xf32>
    %99 = arith.mulf %98, %97 : vector<16x16x128xf32>
    %100 = arith.addf %95, %99 : vector<16x16x128xf32>
    %c7 = arith.constant 7 : index
    %101 = memref.load %arg2[%c7] : memref<25xf32, #tpu.memory_space<smem>>
    %c1_47 = arith.constant 1 : index
    %c2_48 = arith.constant 2 : index
    %c0_49 = arith.constant 0 : index
    %102 = vector.load %arg9[%c1_47, %c2_48, %c0_49] : memref<20x24x128xf32, #tpu.memory_space<vmem>>, vector<16x16x128xf32>
    %103 = vector.broadcast %101 : f32 to vector<16x16x128xf32>
    %104 = arith.mulf %103, %102 : vector<16x16x128xf32>
    %105 = arith.addf %100, %104 : vector<16x16x128xf32>
    %c8 = arith.constant 8 : index
    %106 = memref.load %arg2[%c8] : memref<25xf32, #tpu.memory_space<smem>>
    %c1_50 = arith.constant 1 : index
    %c3_51 = arith.constant 3 : index
    %c0_52 = arith.constant 0 : index
    %107 = vector.load %arg9[%c1_50, %c3_51, %c0_52] : memref<20x24x128xf32, #tpu.memory_space<vmem>>, vector<16x16x128xf32>
    %108 = vector.broadcast %106 : f32 to vector<16x16x128xf32>
    %109 = arith.mulf %108, %107 : vector<16x16x128xf32>
    %110 = arith.addf %105, %109 : vector<16x16x128xf32>
    %c9 = arith.constant 9 : index
    %111 = memref.load %arg2[%c9] : memref<25xf32, #tpu.memory_space<smem>>
    %c1_53 = arith.constant 1 : index
    %c4_54 = arith.constant 4 : index
    %c0_55 = arith.constant 0 : index
    %112 = vector.load %arg9[%c1_53, %c4_54, %c0_55] : memref<20x24x128xf32, #tpu.memory_space<vmem>>, vector<16x16x128xf32>
    %113 = vector.broadcast %111 : f32 to vector<16x16x128xf32>
    %114 = arith.mulf %113, %112 : vector<16x16x128xf32>
    %115 = arith.addf %110, %114 : vector<16x16x128xf32>
    %c10 = arith.constant 10 : index
    %116 = memref.load %arg2[%c10] : memref<25xf32, #tpu.memory_space<smem>>
    %c2_56 = arith.constant 2 : index
    %c0_57 = arith.constant 0 : index
    %c0_58 = arith.constant 0 : index
    %117 = vector.load %arg9[%c2_56, %c0_57, %c0_58] : memref<20x24x128xf32, #tpu.memory_space<vmem>>, vector<16x16x128xf32>
    %118 = vector.broadcast %116 : f32 to vector<16x16x128xf32>
    %119 = arith.mulf %118, %117 : vector<16x16x128xf32>
    %120 = arith.addf %115, %119 : vector<16x16x128xf32>
    %c11 = arith.constant 11 : index
    %121 = memref.load %arg2[%c11] : memref<25xf32, #tpu.memory_space<smem>>
    %c2_59 = arith.constant 2 : index
    %c1_60 = arith.constant 1 : index
    %c0_61 = arith.constant 0 : index
    %122 = vector.load %arg9[%c2_59, %c1_60, %c0_61] : memref<20x24x128xf32, #tpu.memory_space<vmem>>, vector<16x16x128xf32>
    %123 = vector.broadcast %121 : f32 to vector<16x16x128xf32>
    %124 = arith.mulf %123, %122 : vector<16x16x128xf32>
    %125 = arith.addf %120, %124 : vector<16x16x128xf32>
    %c12 = arith.constant 12 : index
    %126 = memref.load %arg2[%c12] : memref<25xf32, #tpu.memory_space<smem>>
    %c2_62 = arith.constant 2 : index
    %c2_63 = arith.constant 2 : index
    %c0_64 = arith.constant 0 : index
    %127 = vector.load %arg9[%c2_62, %c2_63, %c0_64] : memref<20x24x128xf32, #tpu.memory_space<vmem>>, vector<16x16x128xf32>
    %128 = vector.broadcast %126 : f32 to vector<16x16x128xf32>
    %129 = arith.mulf %128, %127 : vector<16x16x128xf32>
    %130 = arith.addf %125, %129 : vector<16x16x128xf32>
    %c13 = arith.constant 13 : index
    %131 = memref.load %arg2[%c13] : memref<25xf32, #tpu.memory_space<smem>>
    %c2_65 = arith.constant 2 : index
    %c3_66 = arith.constant 3 : index
    %c0_67 = arith.constant 0 : index
    %132 = vector.load %arg9[%c2_65, %c3_66, %c0_67] : memref<20x24x128xf32, #tpu.memory_space<vmem>>, vector<16x16x128xf32>
    %133 = vector.broadcast %131 : f32 to vector<16x16x128xf32>
    %134 = arith.mulf %133, %132 : vector<16x16x128xf32>
    %135 = arith.addf %130, %134 : vector<16x16x128xf32>
    %c14 = arith.constant 14 : index
    %136 = memref.load %arg2[%c14] : memref<25xf32, #tpu.memory_space<smem>>
    %c2_68 = arith.constant 2 : index
    %c4_69 = arith.constant 4 : index
    %c0_70 = arith.constant 0 : index
    %137 = vector.load %arg9[%c2_68, %c4_69, %c0_70] : memref<20x24x128xf32, #tpu.memory_space<vmem>>, vector<16x16x128xf32>
    %138 = vector.broadcast %136 : f32 to vector<16x16x128xf32>
    %139 = arith.mulf %138, %137 : vector<16x16x128xf32>
    %140 = arith.addf %135, %139 : vector<16x16x128xf32>
    %c15 = arith.constant 15 : index
    %141 = memref.load %arg2[%c15] : memref<25xf32, #tpu.memory_space<smem>>
    %c3_71 = arith.constant 3 : index
    %c0_72 = arith.constant 0 : index
    %c0_73 = arith.constant 0 : index
    %142 = vector.load %arg9[%c3_71, %c0_72, %c0_73] : memref<20x24x128xf32, #tpu.memory_space<vmem>>, vector<16x16x128xf32>
    %143 = vector.broadcast %141 : f32 to vector<16x16x128xf32>
    %144 = arith.mulf %143, %142 : vector<16x16x128xf32>
    %145 = arith.addf %140, %144 : vector<16x16x128xf32>
    %c16 = arith.constant 16 : index
    %146 = memref.load %arg2[%c16] : memref<25xf32, #tpu.memory_space<smem>>
    %c3_74 = arith.constant 3 : index
    %c1_75 = arith.constant 1 : index
    %c0_76 = arith.constant 0 : index
    %147 = vector.load %arg9[%c3_74, %c1_75, %c0_76] : memref<20x24x128xf32, #tpu.memory_space<vmem>>, vector<16x16x128xf32>
    %148 = vector.broadcast %146 : f32 to vector<16x16x128xf32>
    %149 = arith.mulf %148, %147 : vector<16x16x128xf32>
    %150 = arith.addf %145, %149 : vector<16x16x128xf32>
    %c17 = arith.constant 17 : index
    %151 = memref.load %arg2[%c17] : memref<25xf32, #tpu.memory_space<smem>>
    %c3_77 = arith.constant 3 : index
    %c2_78 = arith.constant 2 : index
    %c0_79 = arith.constant 0 : index
    %152 = vector.load %arg9[%c3_77, %c2_78, %c0_79] : memref<20x24x128xf32, #tpu.memory_space<vmem>>, vector<16x16x128xf32>
    %153 = vector.broadcast %151 : f32 to vector<16x16x128xf32>
    %154 = arith.mulf %153, %152 : vector<16x16x128xf32>
    %155 = arith.addf %150, %154 : vector<16x16x128xf32>
    %c18 = arith.constant 18 : index
    %156 = memref.load %arg2[%c18] : memref<25xf32, #tpu.memory_space<smem>>
    %c3_80 = arith.constant 3 : index
    %c3_81 = arith.constant 3 : index
    %c0_82 = arith.constant 0 : index
    %157 = vector.load %arg9[%c3_80, %c3_81, %c0_82] : memref<20x24x128xf32, #tpu.memory_space<vmem>>, vector<16x16x128xf32>
    %158 = vector.broadcast %156 : f32 to vector<16x16x128xf32>
    %159 = arith.mulf %158, %157 : vector<16x16x128xf32>
    %160 = arith.addf %155, %159 : vector<16x16x128xf32>
    %c19 = arith.constant 19 : index
    %161 = memref.load %arg2[%c19] : memref<25xf32, #tpu.memory_space<smem>>
    %c3_83 = arith.constant 3 : index
    %c4_84 = arith.constant 4 : index
    %c0_85 = arith.constant 0 : index
    %162 = vector.load %arg9[%c3_83, %c4_84, %c0_85] : memref<20x24x128xf32, #tpu.memory_space<vmem>>, vector<16x16x128xf32>
    %163 = vector.broadcast %161 : f32 to vector<16x16x128xf32>
    %164 = arith.mulf %163, %162 : vector<16x16x128xf32>
    %165 = arith.addf %160, %164 : vector<16x16x128xf32>
    %c20 = arith.constant 20 : index
    %166 = memref.load %arg2[%c20] : memref<25xf32, #tpu.memory_space<smem>>
    %c4_86 = arith.constant 4 : index
    %c0_87 = arith.constant 0 : index
    %c0_88 = arith.constant 0 : index
    %167 = vector.load %arg9[%c4_86, %c0_87, %c0_88] : memref<20x24x128xf32, #tpu.memory_space<vmem>>, vector<16x16x128xf32>
    %168 = vector.broadcast %166 : f32 to vector<16x16x128xf32>
    %169 = arith.mulf %168, %167 : vector<16x16x128xf32>
    %170 = arith.addf %165, %169 : vector<16x16x128xf32>
    %c21 = arith.constant 21 : index
    %171 = memref.load %arg2[%c21] : memref<25xf32, #tpu.memory_space<smem>>
    %c4_89 = arith.constant 4 : index
    %c1_90 = arith.constant 1 : index
    %c0_91 = arith.constant 0 : index
    %172 = vector.load %arg9[%c4_89, %c1_90, %c0_91] : memref<20x24x128xf32, #tpu.memory_space<vmem>>, vector<16x16x128xf32>
    %173 = vector.broadcast %171 : f32 to vector<16x16x128xf32>
    %174 = arith.mulf %173, %172 : vector<16x16x128xf32>
    %175 = arith.addf %170, %174 : vector<16x16x128xf32>
    %c22 = arith.constant 22 : index
    %176 = memref.load %arg2[%c22] : memref<25xf32, #tpu.memory_space<smem>>
    %c4_92 = arith.constant 4 : index
    %c2_93 = arith.constant 2 : index
    %c0_94 = arith.constant 0 : index
    %177 = vector.load %arg9[%c4_92, %c2_93, %c0_94] : memref<20x24x128xf32, #tpu.memory_space<vmem>>, vector<16x16x128xf32>
    %178 = vector.broadcast %176 : f32 to vector<16x16x128xf32>
    %179 = arith.mulf %178, %177 : vector<16x16x128xf32>
    %180 = arith.addf %175, %179 : vector<16x16x128xf32>
    %c23 = arith.constant 23 : index
    %181 = memref.load %arg2[%c23] : memref<25xf32, #tpu.memory_space<smem>>
    %c4_95 = arith.constant 4 : index
    %c3_96 = arith.constant 3 : index
    %c0_97 = arith.constant 0 : index
    %182 = vector.load %arg9[%c4_95, %c3_96, %c0_97] : memref<20x24x128xf32, #tpu.memory_space<vmem>>, vector<16x16x128xf32>
    %183 = vector.broadcast %181 : f32 to vector<16x16x128xf32>
    %184 = arith.mulf %183, %182 : vector<16x16x128xf32>
    %185 = arith.addf %180, %184 : vector<16x16x128xf32>
    %c24 = arith.constant 24 : index
    %186 = memref.load %arg2[%c24] : memref<25xf32, #tpu.memory_space<smem>>
    %c4_98 = arith.constant 4 : index
    %c4_99 = arith.constant 4 : index
    %c0_100 = arith.constant 0 : index
    %187 = vector.load %arg9[%c4_98, %c4_99, %c0_100] : memref<20x24x128xf32, #tpu.memory_space<vmem>>, vector<16x16x128xf32>
    %188 = vector.broadcast %186 : f32 to vector<16x16x128xf32>
    %189 = arith.mulf %188, %187 : vector<16x16x128xf32>
    %190 = arith.addf %185, %189 : vector<16x16x128xf32>
    %c0_101 = arith.constant 0 : index
    %c0_102 = arith.constant 0 : index
    %c0_103 = arith.constant 0 : index
    %191 = vector.load %arg7[%c0_101, %c0_102, %c0_103] : memref<16x16x1xf32, #tpu.memory_space<vmem>>, vector<16x16x1xf32>
    %cst_104 = arith.constant 1.000000e+00 : f32
    %192 = vector.broadcast %cst_104 : f32 to vector<16x16x1xf32>
    %193 = arith.subf %192, %191 : vector<16x16x1xf32>
    %194 = vector.broadcast %193 : vector<16x16x1xf32> to vector<16x16x128xf32>
    %195 = arith.mulf %190, %194 : vector<16x16x128xf32>
    %c0_105 = arith.constant 0 : index
    %196 = memref.load %arg3[%c0_105] : memref<1xf32, #tpu.memory_space<smem>>
    %197 = vector.broadcast %196 : f32 to vector<16x16x128xf32>
    %198 = arith.addf %195, %197 : vector<16x16x128xf32>
    %cst_106 = arith.constant 0.000000e+00 : f32
    %cst_107 = arith.constant 1.000000e+00 : f32
    %199 = vector.broadcast %cst_106 : f32 to vector<16x16x128xf32>
    %200 = arith.maximumf %199, %198 : vector<16x16x128xf32>
    %201 = vector.broadcast %cst_107 : f32 to vector<16x16x128xf32>
    %202 = arith.minimumf %201, %200 : vector<16x16x128xf32>
    %c0_108 = arith.constant 0 : index
    %c0_109 = arith.constant 0 : index
    %c0_110 = arith.constant 0 : index
    %203 = vector.load %arg8[%c0_108, %c0_109, %c0_110] : memref<16x16x128xf32, #tpu.memory_space<vmem>>, vector<16x16x128xf32>
    tpu.vector_store %arg8[%c0_108, %c0_109, %c0_110], %202 {strides = array<i32>} : memref<16x16x128xf32, #tpu.memory_space<vmem>>, vector<16x16x128xf32>,
    return
  }
  func.func @transform_0(%arg0: i32) -> i32 {
    %c0_i32 = arith.constant 0 : i32
    %c0_i32_0 = arith.constant 0 : i32
    return %c0_i32 : i32
  }
  func.func @transform_1(%arg0: i32) -> i32 {
    %c0_i32 = arith.constant 0 : i32
    %c0_i32_0 = arith.constant 0 : i32
    return %c0_i32 : i32
  }
  func.func @transform_2(%arg0: i32) -> i32 {
    %c0_i32 = arith.constant 0 : i32
    %c0_i32_0 = arith.constant 0 : i32
    return %c0_i32 : i32
  }
  func.func @transform_3(%arg0: i32) -> (i32, i32, i32) {
    %c0_i32 = arith.constant 0 : i32
    %c0_i32_0 = arith.constant 0 : i32
    %c0_i32_1 = arith.constant 0 : i32
    return %c0_i32, %c0_i32_0, %arg0 : i32, i32, i32
  }
  func.func @transform_4(%arg0: i32) -> (i32, i32, i32) {
    %c0_i32 = arith.constant 0 : i32
    %c0_i32_0 = arith.constant 0 : i32
    %c0_i32_1 = arith.constant 0 : i32
    %c0_i32_2 = arith.constant 0 : i32
    return %c0_i32, %c0_i32_0, %c0_i32_1 : i32, i32, i32
  }
  func.func @transform_5(%arg0: i32) -> (i32, i32, i32) {
    %c0_i32 = arith.constant 0 : i32
    %c0_i32_0 = arith.constant 0 : i32
    %c0_i32_1 = arith.constant 0 : i32
    %c0_i32_2 = arith.constant 0 : i32
    return %c0_i32, %c0_i32_0, %c0_i32_1 : i32, i32, i32
  }
  func.func @transform_6(%arg0: i32) -> (i32, i32, i32) {
    %c0_i32 = arith.constant 0 : i32
    %c0_i32_0 = arith.constant 0 : i32
    %c0_i32_1 = arith.constant 0 : i32
    %c0_i32_2 = arith.constant 0 : i32
    return %c0_i32, %c0_i32_0, %c0_i32_1 : i32, i32, i32
  }
  func.func @transform_7(%arg0: i32) -> (i32, i32, i32) {
    %c0_i32 = arith.constant 0 : i32
    %c0_i32_0 = arith.constant 0 : i32
    %c0_i32_1 = arith.constant 0 : i32
    return %c0_i32, %c0_i32_0, %arg0 : i32, i32, i32
  }
}

</mosaic_0001>

<llo_original>
// kernel: _augment.1
$region0: #{_augment.1}
  #allocation0 [shape = 'u32[]', space=smem, size = 0x4, offset = 0x4, fixed_abs, tag = 'smem constant byte address 0x4 - core index']
  #allocation1 [shape = 'u32[144,128]{1,0:T(1,128)}', space=vmem, size = 0x12000, scoped, tag = 'internal scratch']
  #allocation2 [shape = 'f32[20,24,128]{2,1,0:T(8,128)}', space=vmem, size = 0x3c000, scoped, tag = 'scratch operand']
  #allocation3 [shape = 'f32[1]{0:T(128)S(6)}', space=smem, size = 0x200, scoped, tag = 'scoped memory for _augment.1']
  %s0 = inlined_call_operand.vmem [shape: f32[5], index: 0, kind: input, shape index: {}]
  %s1 = inlined_call_operand.vmem [shape: f32[25], index: 1, kind: input, shape index: {}]
  %s2 = inlined_call_operand.<no memory space> [shape: f32[1], index: 2, kind: input, shape index: {}]
  %s3 = inlined_call_operand.vmem [shape: f32[20,24,128], index: 3, kind: input, shape index: {}]
  %s4 = inlined_call_operand.vmem [shape: f32[20,24,1], index: 4, kind: input, shape index: {}]
  %s5 = inlined_call_operand.vmem [shape: f32[20,24,1], index: 5, kind: input, shape index: {}]
  %s6 = inlined_call_operand.vmem [shape: f32[16,16,1], index: 6, kind: input, shape index: {}]
  %s7 = inlined_call_operand.vmem [shape: f32[16,16,128], index: 7, kind: output, shape index: {}]
  %s8 = sld [smem:[#allocation0]]
  $region50: #{_augment.1} parent=0
    _
  %s10 = ssub.s32 1, %s8
  %s11 = scalar_select 0, %s10, %s8
  %12 = sst [smem:[#allocation3]] %s2
  $region1: #{_augment.1} parent=0
    #allocation4 [shape = 'u8[512]{0}', space=smem, size = 0x200, scoped, tag = 'input window, operand 0, single buffered']
    #allocation5 [shape = 's32[1]{0}', space=sflag, size = 0x4, scoped, tag = 'scoped memory for _augment.1']
    #allocation6 [shape = 'u8[512]{0}', space=smem, size = 0x200, scoped, tag = 'input window, operand 1, single buffered']
    #allocation7 [shape = 's32[1]{0}', space=sflag, size = 0x4, scoped, tag = 'scoped memory for _augment.1']
    %13 = vsyncpa [#allocation5], 0
    %14 = vsyncpa [#allocation7], 0
    // Predicated region
    $region2: #{_augment.1} parent=1 // pred_check
      _
    $region3: #{_augment.1} parent=1 // pred_check_branch
      %16 = sbr.rel (0) target = $region5
    $region4: #{_augment.1} parent=1 // pred_region
      %s18 = ssub.s32 16, 16
      %19 = vsyncadd [#allocation5], %s18
      %s21 = sshll.u32 %s0, 4
      %s22 = int_to_ptr.vmem [resolvable:$true] %s21
      %24 = dma.vmem_to_smem %s22, 16, [#allocation4], [#allocation5]
    $region5: #{_augment.1} parent=1 // pred_fallthru
      _
    // Predicated region
    $region6: #{_augment.1} parent=1 // pred_check
      _
    $region7: #{_augment.1} parent=1 // pred_check_branch
      %26 = sbr.rel (0) target = $region9
    $region8: #{_augment.1} parent=1 // pred_region
      %s28 = ssub.s32 16, 16
      %29 = vsyncadd [#allocation7], %s28
      %s31 = sshll.u32 %s1, 4
      %s32 = int_to_ptr.vmem [resolvable:$true] %s31
      %34 = dma.vmem_to_smem %s32, 16, [#allocation6], [#allocation7]
    $region9: #{_augment.1} parent=1 // pred_fallthru
      _
    // Predicated region
    $region10: #{_augment.1} parent=1 // pred_check
      _
    $region11: #{_augment.1} parent=1 // pred_check_branch
      %36 = sbr.rel (0) target = $region13
    $region12: #{_augment.1} parent=1 // pred_region
      _
    $region13: #{_augment.1} parent=1 // pred_fallthru
      _
    // Predicated region
    $region14: #{_augment.1} parent=1 // pred_check
      _
    $region15: #{_augment.1} parent=1 // pred_check_branch
      %38 = sbr.rel (0) target = $region17
    $region16: #{_augment.1} parent=1 // pred_region
      _
    $region17: #{_augment.1} parent=1 // pred_fallthru
      _
    // Predicated region
    $region18: #{_augment.1} parent=1 // pred_check
      _
    $region19: #{_augment.1} parent=1 // pred_check_branch
      %40 = sbr.rel (0) target = $region21
    $region20: #{_augment.1} parent=1 // pred_region
      _
    $region21: #{_augment.1} parent=1 // pred_fallthru
      _
    // Predicated region
    $region22: #{_augment.1} parent=1 // pred_check
      _
    $region23: #{_augment.1} parent=1 // pred_check_branch
      %42 = sbr.rel (0) target = $region25
    $region24: #{_augment.1} parent=1 // pred_region
      _
    $region25: #{_augment.1} parent=1 // pred_fallthru
      _
    // Predicated region
    $region26: #{_augment.1} parent=1 // pred_check
      _
    $region27: #{_augment.1} parent=1 // pred_check_branch
      %44 = sbr.rel (0) target = $region29
    $region28: #{_augment.1} parent=1 // pred_region
      _
    $region29: #{_augment.1} parent=1 // pred_fallthru
      _
    // Predicated region
    $region30: #{_augment.1} parent=1 // pred_check
      _
    $region31: #{_augment.1} parent=1 // pred_check_branch
      %46 = sbr.rel (0) target = $region33
    $region32: #{_augment.1} parent=1 // pred_region
      %47 = dma.done [#allocation5], 16
    $region33: #{_augment.1} parent=1 // pred_fallthru
      _
    // Predicated region
    $region34: #{_augment.1} parent=1 // pred_check
      _
    $region35: #{_augment.1} parent=1 // pred_check_branch
      %49 = sbr.rel (0) target = $region37
    $region36: #{_augment.1} parent=1 // pred_region
      %50 = dma.done [#allocation7], 16
    $region37: #{_augment.1} parent=1 // pred_fallthru
      _
    %51 = sfence
    %p52 = scmp.eq.s32.totalorder 0, 0
    // Predicated region
    $region38: #{_augment.1} parent=1 // pred_check
      %p53 = pneg %p52
    $region39: #{_augment.1} parent=1 // pred_check_branch
      %55 = sbr.rel (%p53) target = $region41
    $region40: #{_augment.1} parent=1 // pred_region
      %56 = vst [vmem:[#allocation2] sm:$0xff] 0.0
      %57 = vst [vmem:[#allocation2 + $0x8] sm:$0xff] 0.0
      %58 = vst [vmem:[#allocation2 + $0x10] sm:$0xff] 0.0
      %59 = vst [vmem:[#allocation2 + $0x18] sm:$0xff] 0.0
      %60 = vst [vmem:[#allocation2 + $0x20] sm:$0xff] 0.0
      %61 = vst [vmem:[#allocation2 + $0x28] sm:$0xff] 0.0
      %62 = vst [vmem:[#allocation2 + $0x30] sm:$0xff] 0.0
      %63 = vst [vmem:[#allocation2 + $0x38] sm:$0xff] 0.0
      %64 = vst [vmem:[#allocation2 + $0x40] sm:$0xff] 0.0
      %65 = vst [vmem:[#allocation2 + $0x48] sm:$0xff] 0.0
      %66 = vst [vmem:[#allocation2 + $0x50] sm:$0xff] 0.0
      %67 = vst [vmem:[#allocation2 + $0x58] sm:$0xff] 0.0
      %68 = vst [vmem:[#allocation2 + $0x60] sm:$0xff] 0.0
      %69 = vst [vmem:[#allocation2 + $0x68] sm:$0xff] 0.0
      %70 = vst [vmem:[#allocation2 + $0x70] sm:$0xff] 0.0
      %71 = vst [vmem:[#allocation2 + $0x78] sm:$0xff] 0.0
      %72 = vst [vmem:[#allocation2 + $0x80] sm:$0xff] 0.0
      %73 = vst [vmem:[#allocation2 + $0x88] sm:$0xff] 0.0
      %74 = vst [vmem:[#allocation2 + $0x90] sm:$0xff] 0.0
      %75 = vst [vmem:[#allocation2 + $0x98] sm:$0xff] 0.0
      %76 = vst [vmem:[#allocation2 + $0xa0] sm:$0xff] 0.0
      %77 = vst [vmem:[#allocation2 + $0xa8] sm:$0xff] 0.0
      %78 = vst [vmem:[#allocation2 + $0xb0] sm:$0xff] 0.0
      %79 = vst [vmem:[#allocation2 + $0xb8] sm:$0xff] 0.0
      %80 = vst [vmem:[#allocation2 + $0xc0] sm:$0xff] 0.0
      %81 = vst [vmem:[#allocation2 + $0xc8] sm:$0xff] 0.0
      %82 = vst [vmem:[#allocation2 + $0xd0] sm:$0xff] 0.0
      %83 = vst [vmem:[#allocation2 + $0xd8] sm:$0xff] 0.0
      %84 = vst [vmem:[#allocation2 + $0xe0] sm:$0xff] 0.0
      %85 = vst [vmem:[#allocation2 + $0xe8] sm:$0xff] 0.0
      %86 = vst [vmem:[#allocation2 + $0xf0] sm:$0xff] 0.0
      %87 = vst [vmem:[#allocation2 + $0xf8] sm:$0xff] 0.0
      %88 = vst [vmem:[#allocation2 + $0x100] sm:$0xff] 0.0
      %89 = vst [vmem:[#allocation2 + $0x108] sm:$0xff] 0.0
      %90 = vst [vmem:[#allocation2 + $0x110] sm:$0xff] 0.0
      %91 = vst [vmem:[#allocation2 + $0x118] sm:$0xff] 0.0
      %92 = vst [vmem:[#allocation2 + $0x120] sm:$0xff] 0.0
      %93 = vst [vmem:[#allocation2 + $0x128] sm:$0xff] 0.0
      %94 = vst [vmem:[#allocation2 + $0x130] sm:$0xff] 0.0
      %95 = vst [vmem:[#allocation2 + $0x138] sm:$0xff] 0.0
      %96 = vst [vmem:[#allocation2 + $0x140] sm:$0xff] 0.0
      %97 = vst [vmem:[#allocation2 + $0x148] sm:$0xff] 0.0
      %98 = vst [vmem:[#allocation2 + $0x150] sm:$0xff] 0.0
      %99 = vst [vmem:[#allocation2 + $0x158] sm:$0xff] 0.0
      %100 = vst [vmem:[#allocation2 + $0x160] sm:$0xff] 0.0
      %101 = vst [vmem:[#allocation2 + $0x168] sm:$0xff] 0.0
      %102 = vst [vmem:[#allocation2 + $0x170] sm:$0xff] 0.0
      %103 = vst [vmem:[#allocation2 + $0x178] sm:$0xff] 0.0
      %104 = vst [vmem:[#allocation2 + $0x180] sm:$0xff] 0.0
      %105 = vst [vmem:[#allocation2 + $0x188] sm:$0xff] 0.0
      %106 = vst [vmem:[#allocation2 + $0x190] sm:$0xff] 0.0
      %107 = vst [vmem:[#allocation2 + $0x198] sm:$0xff] 0.0
      %108 = vst [vmem:[#allocation2 + $0x1a0] sm:$0xff] 0.0
      %109 = vst [vmem:[#allocation2 + $0x1a8] sm:$0xff] 0.0
      %110 = vst [vmem:[#allocation2 + $0x1b0] sm:$0xff] 0.0
      %111 = vst [vmem:[#allocation2 + $0x1b8] sm:$0xff] 0.0
      %112 = vst [vmem:[#allocation2 + $0x1c0] sm:$0xff] 0.0
      %113 = vst [vmem:[#allocation2 + $0x1c8] sm:$0xff] 0.0
      %114 = vst [vmem:[#allocation2 + $0x1d0] sm:$0xff] 0.0
      %115 = vst [vmem:[#allocation2 + $0x1d8] sm:$0xff] 0.0
    $region41: #{_augment.1} parent=1 // pred_fallthru
      _
    %v116 = vld [vmem:[%s3] sm:$0xff]
    %v117 = vld [vmem:[%s3 + $0x8] sm:$0xff]
    %v118 = vld [vmem:[%s3 + $0x10] sm:$0xff]
    %v119 = vld [vmem:[%s3 + $0x18] sm:$0xff]
    %v120 = vld [vmem:[%s3 + $0x20] sm:$0xff]
    %v121 = vld [vmem:[%s3 + $0x28] sm:$0xff]
    %v122 = vld [vmem:[%s3 + $0x30] sm:$0xff]
    %v123 = vld [vmem:[%s3 + $0x38] sm:$0xff]
    %v124 = vld [vmem:[%s3 + $0x40] sm:$0xff]
    %v125 = vld [vmem:[%s3 + $0x48] sm:$0xff]
    %v126 = vld [vmem:[%s3 + $0x50] sm:$0xff]
    %v127 = vld [vmem:[%s3 + $0x58] sm:$0xff]
    %v128 = vld [vmem:[%s3 + $0x60] sm:$0xff]
    %v129 = vld [vmem:[%s3 + $0x68] sm:$0xff]
    %v130 = vld [vmem:[%s3 + $0x70] sm:$0xff]
    %v131 = vld [vmem:[%s3 + $0x78] sm:$0xff]
    %v132 = vld [vmem:[%s3 + $0x80] sm:$0xff]
    %v133 = vld [vmem:[%s3 + $0x88] sm:$0xff]
    %v134 = vld [vmem:[%s3 + $0x90] sm:$0xff]
    %v135 = vld [vmem:[%s3 + $0x98] sm:$0xff]
    %v136 = vld [vmem:[%s3 + $0xa0] sm:$0xff]
    %v137 = vld [vmem:[%s3 + $0xa8] sm:$0xff]
    %v138 = vld [vmem:[%s3 + $0xb0] sm:$0xff]
    %v139 = vld [vmem:[%s3 + $0xb8] sm:$0xff]
    %v140 = vld [vmem:[%s3 + $0xc0] sm:$0xff]
    %v141 = vld [vmem:[%s3 + $0xc8] sm:$0xff]
    %v142 = vld [vmem:[%s3 + $0xd0] sm:$0xff]
    %v143 = vld [vmem:[%s3 + $0xd8] sm:$0xff]
    %v144 = vld [vmem:[%s3 + $0xe0] sm:$0xff]
    %v145 = vld [vmem:[%s3 + $0xe8] sm:$0xff]
    %v146 = vld [vmem:[%s3 + $0xf0] sm:$0xff]
    %v147 = vld [vmem:[%s3 + $0xf8] sm:$0xff]
    %v148 = vld [vmem:[%s3 + $0x100] sm:$0xff]
    %v149 = vld [vmem:[%s3 + $0x108] sm:$0xff]
    %v150 = vld [vmem:[%s3 + $0x110] sm:$0xff]
    %v151 = vld [vmem:[%s3 + $0x118] sm:$0xff]
    %v152 = vld [vmem:[%s3 + $0x120] sm:$0xff]
    %v153 = vld [vmem:[%s3 + $0x128] sm:$0xff]
    %v154 = vld [vmem:[%s3 + $0x130] sm:$0xff]
    %v155 = vld [vmem:[%s3 + $0x138] sm:$0xff]
    %v156 = vld [vmem:[%s3 + $0x140] sm:$0xff]
    %v157 = vld [vmem:[%s3 + $0x148] sm:$0xff]
    %v158 = vld [vmem:[%s3 + $0x150] sm:$0xff]
    %v159 = vld [vmem:[%s3 + $0x158] sm:$0xff]
    %v160 = vld [vmem:[%s3 + $0x160] sm:$0xff]
    %v161 = vld [vmem:[%s3 + $0x168] sm:$0xff]
    %v162 = vld [vmem:[%s3 + $0x170] sm:$0xff]
    %v163 = vld [vmem:[%s3 + $0x178] sm:$0xff]
    %v164 = vld [vmem:[%s3 + $0x180] sm:$0xff]
    %v165 = vld [vmem:[%s3 + $0x188] sm:$0xff]
    %v166 = vld [vmem:[%s3 + $0x190] sm:$0xff]
    %v167 = vld [vmem:[%s3 + $0x198] sm:$0xff]
    %v168 = vld [vmem:[%s3 + $0x1a0] sm:$0xff]
    %v169 = vld [vmem:[%s3 + $0x1a8] sm:$0xff]
    %v170 = vld [vmem:[%s3 + $0x1b0] sm:$0xff]
    %v171 = vld [vmem:[%s3 + $0x1b8] sm:$0xff]
    %v172 = vld [vmem:[%s3 + $0x1c0] sm:$0xff]
    %v173 = vld [vmem:[%s3 + $0x1c8] sm:$0xff]
    %v174 = vld [vmem:[%s3 + $0x1d0] sm:$0xff]
    %v175 = vld [vmem:[%s3 + $0x1d8] sm:$0xff]
    %v176 = vld [vmem:[%s4] sm:$0xff]
    %v177 = vld [vmem:[%s4 + $0x8] sm:$0xff]
    %v178 = vld [vmem:[%s4 + $0x10] sm:$0xff]
    %v179 = vld [vmem:[%s4 + $0x18] sm:$0xff]
    %v180 = vld [vmem:[%s4 + $0x20] sm:$0xff]
    %v181 = vld [vmem:[%s4 + $0x28] sm:$0xff]
    %v182 = vld [vmem:[%s4 + $0x30] sm:$0xff]
    %v183 = vld [vmem:[%s4 + $0x38] sm:$0xff]
    %v184 = vld [vmem:[%s4 + $0x40] sm:$0xff]
    %v185 = vld [vmem:[%s4 + $0x48] sm:$0xff]
    %v186 = vld [vmem:[%s4 + $0x50] sm:$0xff]
    %v187 = vld [vmem:[%s4 + $0x58] sm:$0xff]
    %v188 = vld [vmem:[%s4 + $0x60] sm:$0xff]
    %v189 = vld [vmem:[%s4 + $0x68] sm:$0xff]
    %v190 = vld [vmem:[%s4 + $0x70] sm:$0xff]
    %v191 = vld [vmem:[%s4 + $0x78] sm:$0xff]
    %v192 = vld [vmem:[%s4 + $0x80] sm:$0xff]
    %v193 = vld [vmem:[%s4 + $0x88] sm:$0xff]
    %v194 = vld [vmem:[%s4 + $0x90] sm:$0xff]
    %v195 = vld [vmem:[%s4 + $0x98] sm:$0xff]
    %v196 = vld [vmem:[%s4 + $0xa0] sm:$0xff]
    %v197 = vld [vmem:[%s4 + $0xa8] sm:$0xff]
    %v198 = vld [vmem:[%s4 + $0xb0] sm:$0xff]
    %v199 = vld [vmem:[%s4 + $0xb8] sm:$0xff]
    %v200 = vld [vmem:[%s4 + $0xc0] sm:$0xff]
    %v201 = vld [vmem:[%s4 + $0xc8] sm:$0xff]
    %v202 = vld [vmem:[%s4 + $0xd0] sm:$0xff]
    %v203 = vld [vmem:[%s4 + $0xd8] sm:$0xff]
    %v204 = vld [vmem:[%s4 + $0xe0] sm:$0xff]
    %v205 = vld [vmem:[%s4 + $0xe8] sm:$0xff]
    %v206 = vld [vmem:[%s4 + $0xf0] sm:$0xff]
    %v207 = vld [vmem:[%s4 + $0xf8] sm:$0xff]
    %v208 = vld [vmem:[%s4 + $0x100] sm:$0xff]
    %v209 = vld [vmem:[%s4 + $0x108] sm:$0xff]
    %v210 = vld [vmem:[%s4 + $0x110] sm:$0xff]
    %v211 = vld [vmem:[%s4 + $0x118] sm:$0xff]
    %v212 = vld [vmem:[%s4 + $0x120] sm:$0xff]
    %v213 = vld [vmem:[%s4 + $0x128] sm:$0xff]
    %v214 = vld [vmem:[%s4 + $0x130] sm:$0xff]
    %v215 = vld [vmem:[%s4 + $0x138] sm:$0xff]
    %v216 = vld [vmem:[%s4 + $0x140] sm:$0xff]
    %v217 = vld [vmem:[%s4 + $0x148] sm:$0xff]
    %v218 = vld [vmem:[%s4 + $0x150] sm:$0xff]
    %v219 = vld [vmem:[%s4 + $0x158] sm:$0xff]
    %v220 = vld [vmem:[%s4 + $0x160] sm:$0xff]
    %v221 = vld [vmem:[%s4 + $0x168] sm:$0xff]
    %v222 = vld [vmem:[%s4 + $0x170] sm:$0xff]
    %v223 = vld [vmem:[%s4 + $0x178] sm:$0xff]
    %v224 = vld [vmem:[%s4 + $0x180] sm:$0xff]
    %v225 = vld [vmem:[%s4 + $0x188] sm:$0xff]
    %v226 = vld [vmem:[%s4 + $0x190] sm:$0xff]
    %v227 = vld [vmem:[%s4 + $0x198] sm:$0xff]
    %v228 = vld [vmem:[%s4 + $0x1a0] sm:$0xff]
    %v229 = vld [vmem:[%s4 + $0x1a8] sm:$0xff]
    %v230 = vld [vmem:[%s4 + $0x1b0] sm:$0xff]
    %v231 = vld [vmem:[%s4 + $0x1b8] sm:$0xff]
    %v232 = vld [vmem:[%s4 + $0x1c0] sm:$0xff]
    %v233 = vld [vmem:[%s4 + $0x1c8] sm:$0xff]
    %v234 = vld [vmem:[%s4 + $0x1d0] sm:$0xff]
    %v235 = vld [vmem:[%s4 + $0x1d8] sm:$0xff]
    %v236 = vld [vmem:[%s5] sm:$0xff]
    %v237 = vld [vmem:[%s5 + $0x8] sm:$0xff]
    %v238 = vld [vmem:[%s5 + $0x10] sm:$0xff]
    %v239 = vld [vmem:[%s5 + $0x18] sm:$0xff]
    %v240 = vld [vmem:[%s5 + $0x20] sm:$0xff]
    %v241 = vld [vmem:[%s5 + $0x28] sm:$0xff]
    %v242 = vld [vmem:[%s5 + $0x30] sm:$0xff]
    %v243 = vld [vmem:[%s5 + $0x38] sm:$0xff]
    %v244 = vld [vmem:[%s5 + $0x40] sm:$0xff]
    %v245 = vld [vmem:[%s5 + $0x48] sm:$0xff]
    %v246 = vld [vmem:[%s5 + $0x50] sm:$0xff]
    %v247 = vld [vmem:[%s5 + $0x58] sm:$0xff]
    %v248 = vld [vmem:[%s5 + $0x60] sm:$0xff]
    %v249 = vld [vmem:[%s5 + $0x68] sm:$0xff]
    %v250 = vld [vmem:[%s5 + $0x70] sm:$0xff]
    %v251 = vld [vmem:[%s5 + $0x78] sm:$0xff]
    %v252 = vld [vmem:[%s5 + $0x80] sm:$0xff]
    %v253 = vld [vmem:[%s5 + $0x88] sm:$0xff]
    %v254 = vld [vmem:[%s5 + $0x90] sm:$0xff]
    %v255 = vld [vmem:[%s5 + $0x98] sm:$0xff]
    %v256 = vld [vmem:[%s5 + $0xa0] sm:$0xff]
    %v257 = vld [vmem:[%s5 + $0xa8] sm:$0xff]
    %v258 = vld [vmem:[%s5 + $0xb0] sm:$0xff]
    %v259 = vld [vmem:[%s5 + $0xb8] sm:$0xff]
    %v260 = vld [vmem:[%s5 + $0xc0] sm:$0xff]
    %v261 = vld [vmem:[%s5 + $0xc8] sm:$0xff]
    %v262 = vld [vmem:[%s5 + $0xd0] sm:$0xff]
    %v263 = vld [vmem:[%s5 + $0xd8] sm:$0xff]
    %v264 = vld [vmem:[%s5 + $0xe0] sm:$0xff]
    %v265 = vld [vmem:[%s5 + $0xe8] sm:$0xff]
    %v266 = vld [vmem:[%s5 + $0xf0] sm:$0xff]
    %v267 = vld [vmem:[%s5 + $0xf8] sm:$0xff]
    %v268 = vld [vmem:[%s5 + $0x100] sm:$0xff]
    %v269 = vld [vmem:[%s5 + $0x108] sm:$0xff]
    %v270 = vld [vmem:[%s5 + $0x110] sm:$0xff]
    %v271 = vld [vmem:[%s5 + $0x118] sm:$0xff]
    %v272 = vld [vmem:[%s5 + $0x120] sm:$0xff]
    %v273 = vld [vmem:[%s5 + $0x128] sm:$0xff]
    %v274 = vld [vmem:[%s5 + $0x130] sm:$0xff]
    %v275 = vld [vmem:[%s5 + $0x138] sm:$0xff]
    %v276 = vld [vmem:[%s5 + $0x140] sm:$0xff]
    %v277 = vld [vmem:[%s5 + $0x148] sm:$0xff]
    %v278 = vld [vmem:[%s5 + $0x150] sm:$0xff]
    %v279 = vld [vmem:[%s5 + $0x158] sm:$0xff]
    %v280 = vld [vmem:[%s5 + $0x160] sm:$0xff]
    %v281 = vld [vmem:[%s5 + $0x168] sm:$0xff]
    %v282 = vld [vmem:[%s5 + $0x170] sm:$0xff]
    %v283 = vld [vmem:[%s5 + $0x178] sm:$0xff]
    %v284 = vld [vmem:[%s5 + $0x180] sm:$0xff]
    %v285 = vld [vmem:[%s5 + $0x188] sm:$0xff]
    %v286 = vld [vmem:[%s5 + $0x190] sm:$0xff]
    %v287 = vld [vmem:[%s5 + $0x198] sm:$0xff]
    %v288 = vld [vmem:[%s5 + $0x1a0] sm:$0xff]
    %v289 = vld [vmem:[%s5 + $0x1a8] sm:$0xff]
    %v290 = vld [vmem:[%s5 + $0x1b0] sm:$0xff]
    %v291 = vld [vmem:[%s5 + $0x1b8] sm:$0xff]
    %v292 = vld [vmem:[%s5 + $0x1c0] sm:$0xff]
    %v293 = vld [vmem:[%s5 + $0x1c8] sm:$0xff]
    %v294 = vld [vmem:[%s5 + $0x1d0] sm:$0xff]
    %v295 = vld [vmem:[%s5 + $0x1d8] sm:$0xff]
    %vm296 = vcmp.gt.f32.partialorder %v236, 0.5
    %vm297 = vcmp.gt.f32.partialorder %v237, 0.5
    %vm298 = vcmp.gt.f32.partialorder %v238, 0.5
    %vm299 = vcmp.gt.f32.partialorder %v239, 0.5
    %vm300 = vcmp.gt.f32.partialorder %v240, 0.5
    %vm301 = vcmp.gt.f32.partialorder %v241, 0.5
    %vm302 = vcmp.gt.f32.partialorder %v242, 0.5
    %vm303 = vcmp.gt.f32.partialorder %v243, 0.5
    %vm304 = vcmp.gt.f32.partialorder %v244, 0.5
    %vm305 = vcmp.gt.f32.partialorder %v245, 0.5
    %vm306 = vcmp.gt.f32.partialorder %v246, 0.5
    %vm307 = vcmp.gt.f32.partialorder %v247, 0.5
    %vm308 = vcmp.gt.f32.partialorder %v248, 0.5
    %vm309 = vcmp.gt.f32.partialorder %v249, 0.5
    %vm310 = vcmp.gt.f32.partialorder %v250, 0.5
    %vm311 = vcmp.gt.f32.partialorder %v251, 0.5
    %vm312 = vcmp.gt.f32.partialorder %v252, 0.5
    %vm313 = vcmp.gt.f32.partialorder %v253, 0.5
    %vm314 = vcmp.gt.f32.partialorder %v254, 0.5
    %vm315 = vcmp.gt.f32.partialorder %v255, 0.5
    %vm316 = vcmp.gt.f32.partialorder %v256, 0.5
    %vm317 = vcmp.gt.f32.partialorder %v257, 0.5
    %vm318 = vcmp.gt.f32.partialorder %v258, 0.5
    %vm319 = vcmp.gt.f32.partialorder %v259, 0.5
    %vm320 = vcmp.gt.f32.partialorder %v260, 0.5
    %vm321 = vcmp.gt.f32.partialorder %v261, 0.5
    %vm322 = vcmp.gt.f32.partialorder %v262, 0.5
    %vm323 = vcmp.gt.f32.partialorder %v263, 0.5
    %vm324 = vcmp.gt.f32.partialorder %v264, 0.5
    %vm325 = vcmp.gt.f32.partialorder %v265, 0.5
    %vm326 = vcmp.gt.f32.partialorder %v266, 0.5
    %vm327 = vcmp.gt.f32.partialorder %v267, 0.5
    %vm328 = vcmp.gt.f32.partialorder %v268, 0.5
    %vm329 = vcmp.gt.f32.partialorder %v269, 0.5
    %vm330 = vcmp.gt.f32.partialorder %v270, 0.5
    %vm331 = vcmp.gt.f32.partialorder %v271, 0.5
    %vm332 = vcmp.gt.f32.partialorder %v272, 0.5
    %vm333 = vcmp.gt.f32.partialorder %v273, 0.5
    %vm334 = vcmp.gt.f32.partialorder %v274, 0.5
    %vm335 = vcmp.gt.f32.partialorder %v275, 0.5
    %vm336 = vcmp.gt.f32.partialorder %v276, 0.5
    %vm337 = vcmp.gt.f32.partialorder %v277, 0.5
    %vm338 = vcmp.gt.f32.partialorder %v278, 0.5
    %vm339 = vcmp.gt.f32.partialorder %v279, 0.5
    %vm340 = vcmp.gt.f32.partialorder %v280, 0.5
    %vm341 = vcmp.gt.f32.partialorder %v281, 0.5
    %vm342 = vcmp.gt.f32.partialorder %v282, 0.5
    %vm343 = vcmp.gt.f32.partialorder %v283, 0.5
    %vm344 = vcmp.gt.f32.partialorder %v284, 0.5
    %vm345 = vcmp.gt.f32.partialorder %v285, 0.5
    %vm346 = vcmp.gt.f32.partialorder %v286, 0.5
    %vm347 = vcmp.gt.f32.partialorder %v287, 0.5
    %vm348 = vcmp.gt.f32.partialorder %v288, 0.5
    %vm349 = vcmp.gt.f32.partialorder %v289, 0.5
    %vm350 = vcmp.gt.f32.partialorder %v290, 0.5
    %vm351 = vcmp.gt.f32.partialorder %v291, 0.5
    %vm352 = vcmp.gt.f32.partialorder %v292, 0.5
    %vm353 = vcmp.gt.f32.partialorder %v293, 0.5
    %vm354 = vcmp.gt.f32.partialorder %v294, 0.5
    %vm355 = vcmp.gt.f32.partialorder %v295, 0.5
    %vm356 = vcmp.gt.f32.partialorder %v176, 0.5
    %vm357 = vcmp.gt.f32.partialorder %v177, 0.5
    %vm358 = vcmp.gt.f32.partialorder %v178, 0.5
    %vm359 = vcmp.gt.f32.partialorder %v179, 0.5
    %vm360 = vcmp.gt.f32.partialorder %v180, 0.5
    %vm361 = vcmp.gt.f32.partialorder %v181, 0.5
    %vm362 = vcmp.gt.f32.partialorder %v182, 0.5
    %vm363 = vcmp.gt.f32.partialorder %v183, 0.5
    %vm364 = vcmp.gt.f32.partialorder %v184, 0.5
    %vm365 = vcmp.gt.f32.partialorder %v185, 0.5
    %vm366 = vcmp.gt.f32.partialorder %v186, 0.5
    %vm367 = vcmp.gt.f32.partialorder %v187, 0.5
    %vm368 = vcmp.gt.f32.partialorder %v188, 0.5
    %vm369 = vcmp.gt.f32.partialorder %v189, 0.5
    %vm370 = vcmp.gt.f32.partialorder %v190, 0.5
    %vm371 = vcmp.gt.f32.partialorder %v191, 0.5
    %vm372 = vcmp.gt.f32.partialorder %v192, 0.5
    %vm373 = vcmp.gt.f32.partialorder %v193, 0.5
    %vm374 = vcmp.gt.f32.partialorder %v194, 0.5
    %vm375 = vcmp.gt.f32.partialorder %v195, 0.5
    %vm376 = vcmp.gt.f32.partialorder %v196, 0.5
    %vm377 = vcmp.gt.f32.partialorder %v197, 0.5
    %vm378 = vcmp.gt.f32.partialorder %v198, 0.5
    %vm379 = vcmp.gt.f32.partialorder %v199, 0.5
    %vm380 = vcmp.gt.f32.partialorder %v200, 0.5
    %vm381 = vcmp.gt.f32.partialorder %v201, 0.5
    %vm382 = vcmp.gt.f32.partialorder %v202, 0.5
    %vm383 = vcmp.gt.f32.partialorder %v203, 0.5
    %vm384 = vcmp.gt.f32.partialorder %v204, 0.5
    %vm385 = vcmp.gt.f32.partialorder %v205, 0.5
    %vm386 = vcmp.gt.f32.partialorder %v206, 0.5
    %vm387 = vcmp.gt.f32.partialorder %v207, 0.5
    %vm388 = vcmp.gt.f32.partialorder %v208, 0.5
    %vm389 = vcmp.gt.f32.partialorder %v209, 0.5
    %vm390 = vcmp.gt.f32.partialorder %v210, 0.5
    %vm391 = vcmp.gt.f32.partialorder %v211, 0.5
    %vm392 = vcmp.gt.f32.partialorder %v212, 0.5
    %vm393 = vcmp.gt.f32.partialorder %v213, 0.5
    %vm394 = vcmp.gt.f32.partialorder %v214, 0.5
    %vm395 = vcmp.gt.f32.partialorder %v215, 0.5
    %vm396 = vcmp.gt.f32.partialorder %v216, 0.5
    %vm397 = vcmp.gt.f32.partialorder %v217, 0.5
    %vm398 = vcmp.gt.f32.partialorder %v218, 0.5
    %vm399 = vcmp.gt.f32.partialorder %v219, 0.5
    %vm400 = vcmp.gt.f32.partialorder %v220, 0.5
    %vm401 = vcmp.gt.f32.partialorder %v221, 0.5
    %vm402 = vcmp.gt.f32.partialorder %v222, 0.5
    %vm403 = vcmp.gt.f32.partialorder %v223, 0.5
    %vm404 = vcmp.gt.f32.partialorder %v224, 0.5
    %vm405 = vcmp.gt.f32.partialorder %v225, 0.5
    %vm406 = vcmp.gt.f32.partialorder %v226, 0.5
    %vm407 = vcmp.gt.f32.partialorder %v227, 0.5
    %vm408 = vcmp.gt.f32.partialorder %v228, 0.5
    %vm409 = vcmp.gt.f32.partialorder %v229, 0.5
    %vm410 = vcmp.gt.f32.partialorder %v230, 0.5
    %vm411 = vcmp.gt.f32.partialorder %v231, 0.5
    %vm412 = vcmp.gt.f32.partialorder %v232, 0.5
    %vm413 = vcmp.gt.f32.partialorder %v233, 0.5
    %vm414 = vcmp.gt.f32.partialorder %v234, 0.5
    %vm415 = vcmp.gt.f32.partialorder %v235, 0.5
    %v416 = vsel %vm356, 1, 0
    %v417 = vsel %vm357, 1, 0
    %v418 = vsel %vm358, 1, 0
    %v419 = vsel %vm359, 1, 0
    %v420 = vsel %vm360, 1, 0
    %v421 = vsel %vm361, 1, 0
    %v422 = vsel %vm362, 1, 0
    %v423 = vsel %vm363, 1, 0
    %v424 = vsel %vm364, 1, 0
    %v425 = vsel %vm365, 1, 0
    %v426 = vsel %vm366, 1, 0
    %v427 = vsel %vm367, 1, 0
    %v428 = vsel %vm368, 1, 0
    %v429 = vsel %vm369, 1, 0
    %v430 = vsel %vm370, 1, 0
    %v431 = vsel %vm371, 1, 0
    %v432 = vsel %vm372, 1, 0
    %v433 = vsel %vm373, 1, 0
    %v434 = vsel %vm374, 1, 0
    %v435 = vsel %vm375, 1, 0
    %v436 = vsel %vm376, 1, 0
    %v437 = vsel %vm377, 1, 0
    %v438 = vsel %vm378, 1, 0
    %v439 = vsel %vm379, 1, 0
    %v440 = vsel %vm380, 1, 0
    %v441 = vsel %vm381, 1, 0
    %v442 = vsel %vm382, 1, 0
    %v443 = vsel %vm383, 1, 0
    %v444 = vsel %vm384, 1, 0
    %v445 = vsel %vm385, 1, 0
    %v446 = vsel %vm386, 1, 0
    %v447 = vsel %vm387, 1, 0
    %v448 = vsel %vm388, 1, 0
    %v449 = vsel %vm389, 1, 0
    %v450 = vsel %vm390, 1, 0
    %v451 = vsel %vm391, 1, 0
    %v452 = vsel %vm392, 1, 0
    %v453 = vsel %vm393, 1, 0
    %v454 = vsel %vm394, 1, 0
    %v455 = vsel %vm395, 1, 0
    %v456 = vsel %vm396, 1, 0
    %v457 = vsel %vm397, 1, 0
    %v458 = vsel %vm398, 1, 0
    %v459 = vsel %vm399, 1, 0
    %v460 = vsel %vm400, 1, 0
    %v461 = vsel %vm401, 1, 0
    %v462 = vsel %vm402, 1, 0
    %v463 = vsel %vm403, 1, 0
    %v464 = vsel %vm404, 1, 0
    %v465 = vsel %vm405, 1, 0
    %v466 = vsel %vm406, 1, 0
    %v467 = vsel %vm407, 1, 0
    %v468 = vsel %vm408, 1, 0
    %v469 = vsel %vm409, 1, 0
    %v470 = vsel %vm410, 1, 0
    %v471 = vsel %vm411, 1, 0
    %v472 = vsel %vm412, 1, 0
    %v473 = vsel %vm413, 1, 0
    %v474 = vsel %vm414, 1, 0
    %v475 = vsel %vm415, 1, 0
    %476 = vset.pattern.permute.xlu0 0
    %477 = vperm.xlu0 %476, %v416
    %v478 = vpop.permute.xlu0 %477
    %479 = vset.pattern.permute.xlu0 0
    %480 = vperm.xlu0 %479, %v417
    %v481 = vpop.permute.xlu0 %480
    %482 = vset.pattern.permute.xlu0 0
    %483 = vperm.xlu0 %482, %v418
    %v484 = vpop.permute.xlu0 %483
    %485 = vset.pattern.permute.xlu0 0
    %486 = vperm.xlu0 %485, %v419
    %v487 = vpop.permute.xlu0 %486
    %488 = vset.pattern.permute.xlu0 0
    %489 = vperm.xlu0 %488, %v420
    %v490 = vpop.permute.xlu0 %489
    %491 = vset.pattern.permute.xlu0 0
    %492 = vperm.xlu0 %491, %v421
    %v493 = vpop.permute.xlu0 %492
    %494 = vset.pattern.permute.xlu0 0
    %495 = vperm.xlu0 %494, %v422
    %v496 = vpop.permute.xlu0 %495
    %497 = vset.pattern.permute.xlu0 0
    %498 = vperm.xlu0 %497, %v423
    %v499 = vpop.permute.xlu0 %498
    %500 = vset.pattern.permute.xlu0 0
    %501 = vperm.xlu0 %500, %v424
    %v502 = vpop.permute.xlu0 %501
    %503 = vset.pattern.permute.xlu0 0
    %504 = vperm.xlu0 %503, %v425
    %v505 = vpop.permute.xlu0 %504
    %506 = vset.pattern.permute.xlu0 0
    %507 = vperm.xlu0 %506, %v426
    %v508 = vpop.permute.xlu0 %507
    %509 = vset.pattern.permute.xlu0 0
    %510 = vperm.xlu0 %509, %v427
    %v511 = vpop.permute.xlu0 %510
    %512 = vset.pattern.permute.xlu0 0
    %513 = vperm.xlu0 %512, %v428
    %v514 = vpop.permute.xlu0 %513
    %515 = vset.pattern.permute.xlu0 0
    %516 = vperm.xlu0 %515, %v429
    %v517 = vpop.permute.xlu0 %516
    %518 = vset.pattern.permute.xlu0 0
    %519 = vperm.xlu0 %518, %v430
    %v520 = vpop.permute.xlu0 %519
    %521 = vset.pattern.permute.xlu0 0
    %522 = vperm.xlu0 %521, %v431
    %v523 = vpop.permute.xlu0 %522
    %524 = vset.pattern.permute.xlu0 0
    %525 = vperm.xlu0 %524, %v432
    %v526 = vpop.permute.xlu0 %525
    %527 = vset.pattern.permute.xlu0 0
    %528 = vperm.xlu0 %527, %v433
    %v529 = vpop.permute.xlu0 %528
    %530 = vset.pattern.permute.xlu0 0
    %531 = vperm.xlu0 %530, %v434
    %v532 = vpop.permute.xlu0 %531
    %533 = vset.pattern.permute.xlu0 0
    %534 = vperm.xlu0 %533, %v435
    %v535 = vpop.permute.xlu0 %534
    %536 = vset.pattern.permute.xlu0 0
    %537 = vperm.xlu0 %536, %v436
    %v538 = vpop.permute.xlu0 %537
    %539 = vset.pattern.permute.xlu0 0
    %540 = vperm.xlu0 %539, %v437
    %v541 = vpop.permute.xlu0 %540
    %542 = vset.pattern.permute.xlu0 0
    %543 = vperm.xlu0 %542, %v438
    %v544 = vpop.permute.xlu0 %543
    %545 = vset.pattern.permute.xlu0 0
    %546 = vperm.xlu0 %545, %v439
    %v547 = vpop.permute.xlu0 %546
    %548 = vset.pattern.permute.xlu0 0
    %549 = vperm.xlu0 %548, %v440
    %v550 = vpop.permute.xlu0 %549
    %551 = vset.pattern.permute.xlu0 0
    %552 = vperm.xlu0 %551, %v441
    %v553 = vpop.permute.xlu0 %552
    %554 = vset.pattern.permute.xlu0 0
    %555 = vperm.xlu0 %554, %v442
    %v556 = vpop.permute.xlu0 %555
    %557 = vset.pattern.permute.xlu0 0
    %558 = vperm.xlu0 %557, %v443
    %v559 = vpop.permute.xlu0 %558
    %560 = vset.pattern.permute.xlu0 0
    %561 = vperm.xlu0 %560, %v444
    %v562 = vpop.permute.xlu0 %561
    %563 = vset.pattern.permute.xlu0 0
    %564 = vperm.xlu0 %563, %v445
    %v565 = vpop.permute.xlu0 %564
    %566 = vset.pattern.permute.xlu0 0
    %567 = vperm.xlu0 %566, %v446
    %v568 = vpop.permute.xlu0 %567
    %569 = vset.pattern.permute.xlu0 0
    %570 = vperm.xlu0 %569, %v447
    %v571 = vpop.permute.xlu0 %570
    %572 = vset.pattern.permute.xlu0 0
    %573 = vperm.xlu0 %572, %v448
    %v574 = vpop.permute.xlu0 %573
    %575 = vset.pattern.permute.xlu0 0
    %576 = vperm.xlu0 %575, %v449
    %v577 = vpop.permute.xlu0 %576
    %578 = vset.pattern.permute.xlu0 0
    %579 = vperm.xlu0 %578, %v450
    %v580 = vpop.permute.xlu0 %579
    %581 = vset.pattern.permute.xlu0 0
    %582 = vperm.xlu0 %581, %v451
    %v583 = vpop.permute.xlu0 %582
    %584 = vset.pattern.permute.xlu0 0
    %585 = vperm.xlu0 %584, %v452
    %v586 = vpop.permute.xlu0 %585
    %587 = vset.pattern.permute.xlu0 0
    %588 = vperm.xlu0 %587, %v453
    %v589 = vpop.permute.xlu0 %588
    %590 = vset.pattern.permute.xlu0 0
    %591 = vperm.xlu0 %590, %v454
    %v592 = vpop.permute.xlu0 %591
    %593 = vset.pattern.permute.xlu0 0
    %594 = vperm.xlu0 %593, %v455
    %v595 = vpop.permute.xlu0 %594
    %596 = vset.pattern.permute.xlu0 0
    %597 = vperm.xlu0 %596, %v456
    %v598 = vpop.permute.xlu0 %597
    %599 = vset.pattern.permute.xlu0 0
    %600 = vperm.xlu0 %599, %v457
    %v601 = vpop.permute.xlu0 %600
    %602 = vset.pattern.permute.xlu0 0
    %603 = vperm.xlu0 %602, %v458
    %v604 = vpop.permute.xlu0 %603
    %605 = vset.pattern.permute.xlu0 0
    %606 = vperm.xlu0 %605, %v459
    %v607 = vpop.permute.xlu0 %606
    %608 = vset.pattern.permute.xlu0 0
    %609 = vperm.xlu0 %608, %v460
    %v610 = vpop.permute.xlu0 %609
    %611 = vset.pattern.permute.xlu0 0
    %612 = vperm.xlu0 %611, %v461
    %v613 = vpop.permute.xlu0 %612
    %614 = vset.pattern.permute.xlu0 0
    %615 = vperm.xlu0 %614, %v462
    %v616 = vpop.permute.xlu0 %615
    %617 = vset.pattern.permute.xlu0 0
    %618 = vperm.xlu0 %617, %v463
    %v619 = vpop.permute.xlu0 %618
    %620 = vset.pattern.permute.xlu0 0
    %621 = vperm.xlu0 %620, %v464
    %v622 = vpop.permute.xlu0 %621
    %623 = vset.pattern.permute.xlu0 0
    %624 = vperm.xlu0 %623, %v465
    %v625 = vpop.permute.xlu0 %624
    %626 = vset.pattern.permute.xlu0 0
    %627 = vperm.xlu0 %626, %v466
    %v628 = vpop.permute.xlu0 %627
    %629 = vset.pattern.permute.xlu0 0
    %630 = vperm.xlu0 %629, %v467
    %v631 = vpop.permute.xlu0 %630
    %632 = vset.pattern.permute.xlu0 0
    %633 = vperm.xlu0 %632, %v468
    %v634 = vpop.permute.xlu0 %633
    %635 = vset.pattern.permute.xlu0 0
    %636 = vperm.xlu0 %635, %v469
    %v637 = vpop.permute.xlu0 %636
    %638 = vset.pattern.permute.xlu0 0
    %639 = vperm.xlu0 %638, %v470
    %v640 = vpop.permute.xlu0 %639
    %641 = vset.pattern.permute.xlu0 0
    %642 = vperm.xlu0 %641, %v471
    %v643 = vpop.permute.xlu0 %642
    %644 = vset.pattern.permute.xlu0 0
    %645 = vperm.xlu0 %644, %v472
    %v646 = vpop.permute.xlu0 %645
    %647 = vset.pattern.permute.xlu0 0
    %648 = vperm.xlu0 %647, %v473
    %v649 = vpop.permute.xlu0 %648
    %650 = vset.pattern.permute.xlu0 0
    %651 = vperm.xlu0 %650, %v474
    %v652 = vpop.permute.xlu0 %651
    %653 = vset.pattern.permute.xlu0 0
    %654 = vperm.xlu0 %653, %v475
    %v655 = vpop.permute.xlu0 %654
    %vm656 = vcmp.eq.s32.totalorder %v478, 1
    %vm657 = vcmp.eq.s32.totalorder %v481, 1
    %vm658 = vcmp.eq.s32.totalorder %v484, 1
    %vm659 = vcmp.eq.s32.totalorder %v487, 1
    %vm660 = vcmp.eq.s32.totalorder %v490, 1
    %vm661 = vcmp.eq.s32.totalorder %v493, 1
    %vm662 = vcmp.eq.s32.totalorder %v496, 1
    %vm663 = vcmp.eq.s32.totalorder %v499, 1
    %vm664 = vcmp.eq.s32.totalorder %v502, 1
    %vm665 = vcmp.eq.s32.totalorder %v505, 1
    %vm666 = vcmp.eq.s32.totalorder %v508, 1
    %vm667 = vcmp.eq.s32.totalorder %v511, 1
    %vm668 = vcmp.eq.s32.totalorder %v514, 1
    %vm669 = vcmp.eq.s32.totalorder %v517, 1
    %vm670 = vcmp.eq.s32.totalorder %v520, 1
    %vm671 = vcmp.eq.s32.totalorder %v523, 1
    %vm672 = vcmp.eq.s32.totalorder %v526, 1
    %vm673 = vcmp.eq.s32.totalorder %v529, 1
    %vm674 = vcmp.eq.s32.totalorder %v532, 1
    %vm675 = vcmp.eq.s32.totalorder %v535, 1
    %vm676 = vcmp.eq.s32.totalorder %v538, 1
    %vm677 = vcmp.eq.s32.totalorder %v541, 1
    %vm678 = vcmp.eq.s32.totalorder %v544, 1
    %vm679 = vcmp.eq.s32.totalorder %v547, 1
    %vm680 = vcmp.eq.s32.totalorder %v550, 1
    %vm681 = vcmp.eq.s32.totalorder %v553, 1
    %vm682 = vcmp.eq.s32.totalorder %v556, 1
    %vm683 = vcmp.eq.s32.totalorder %v559, 1
    %vm684 = vcmp.eq.s32.totalorder %v562, 1
    %vm685 = vcmp.eq.s32.totalorder %v565, 1
    %vm686 = vcmp.eq.s32.totalorder %v568, 1
    %vm687 = vcmp.eq.s32.totalorder %v571, 1
    %vm688 = vcmp.eq.s32.totalorder %v574, 1
    %vm689 = vcmp.eq.s32.totalorder %v577, 1
    %vm690 = vcmp.eq.s32.totalorder %v580, 1
    %vm691 = vcmp.eq.s32.totalorder %v583, 1
    %vm692 = vcmp.eq.s32.totalorder %v586, 1
    %vm693 = vcmp.eq.s32.totalorder %v589, 1
    %vm694 = vcmp.eq.s32.totalorder %v592, 1
    %vm695 = vcmp.eq.s32.totalorder %v595, 1
    %vm696 = vcmp.eq.s32.totalorder %v598, 1
    %vm697 = vcmp.eq.s32.totalorder %v601, 1
    %vm698 = vcmp.eq.s32.totalorder %v604, 1
    %vm699 = vcmp.eq.s32.totalorder %v607, 1
    %vm700 = vcmp.eq.s32.totalorder %v610, 1
    %vm701 = vcmp.eq.s32.totalorder %v613, 1
    %vm702 = vcmp.eq.s32.totalorder %v616, 1
    %vm703 = vcmp.eq.s32.totalorder %v619, 1
    %vm704 = vcmp.eq.s32.totalorder %v622, 1
    %vm705 = vcmp.eq.s32.totalorder %v625, 1
    %vm706 = vcmp.eq.s32.totalorder %v628, 1
    %vm707 = vcmp.eq.s32.totalorder %v631, 1
    %vm708 = vcmp.eq.s32.totalorder %v634, 1
    %vm709 = vcmp.eq.s32.totalorder %v637, 1
    %vm710 = vcmp.eq.s32.totalorder %v640, 1
    %vm711 = vcmp.eq.s32.totalorder %v643, 1
    %vm712 = vcmp.eq.s32.totalorder %v646, 1
    %vm713 = vcmp.eq.s32.totalorder %v649, 1
    %vm714 = vcmp.eq.s32.totalorder %v652, 1
    %vm715 = vcmp.eq.s32.totalorder %v655, 1
    %v716 = vsel %vm656, 1.0, %v116
    %v717 = vsel %vm657, 1.0, %v117
    %v718 = vsel %vm658, 1.0, %v118
    %v719 = vsel %vm659, 1.0, %v119
    %v720 = vsel %vm660, 1.0, %v120
    %v721 = vsel %vm661, 1.0, %v121
    %v722 = vsel %vm662, 1.0, %v122
    %v723 = vsel %vm663, 1.0, %v123
    %v724 = vsel %vm664, 1.0, %v124
    %v725 = vsel %vm665, 1.0, %v125
    %v726 = vsel %vm666, 1.0, %v126
    %v727 = vsel %vm667, 1.0, %v127
    %v728 = vsel %vm668, 1.0, %v128
    %v729 = vsel %vm669, 1.0, %v129
    %v730 = vsel %vm670, 1.0, %v130
    %v731 = vsel %vm671, 1.0, %v131
    %v732 = vsel %vm672, 1.0, %v132
    %v733 = vsel %vm673, 1.0, %v133
    %v734 = vsel %vm674, 1.0, %v134
    %v735 = vsel %vm675, 1.0, %v135
    %v736 = vsel %vm676, 1.0, %v136
    %v737 = vsel %vm677, 1.0, %v137
    %v738 = vsel %vm678, 1.0, %v138
    %v739 = vsel %vm679, 1.0, %v139
    %v740 = vsel %vm680, 1.0, %v140
    %v741 = vsel %vm681, 1.0, %v141
    %v742 = vsel %vm682, 1.0, %v142
    %v743 = vsel %vm683, 1.0, %v143
    %v744 = vsel %vm684, 1.0, %v144
    %v745 = vsel %vm685, 1.0, %v145
    %v746 = vsel %vm686, 1.0, %v146
    %v747 = vsel %vm687, 1.0, %v147
    %v748 = vsel %vm688, 1.0, %v148
    %v749 = vsel %vm689, 1.0, %v149
    %v750 = vsel %vm690, 1.0, %v150
    %v751 = vsel %vm691, 1.0, %v151
    %v752 = vsel %vm692, 1.0, %v152
    %v753 = vsel %vm693, 1.0, %v153
    %v754 = vsel %vm694, 1.0, %v154
    %v755 = vsel %vm695, 1.0, %v155
    %v756 = vsel %vm696, 1.0, %v156
    %v757 = vsel %vm697, 1.0, %v157
    %v758 = vsel %vm698, 1.0, %v158
    %v759 = vsel %vm699, 1.0, %v159
    %v760 = vsel %vm700, 1.0, %v160
    %v761 = vsel %vm701, 1.0, %v161
    %v762 = vsel %vm702, 1.0, %v162
    %v763 = vsel %vm703, 1.0, %v163
    %v764 = vsel %vm704, 1.0, %v164
    %v765 = vsel %vm705, 1.0, %v165
    %v766 = vsel %vm706, 1.0, %v166
    %v767 = vsel %vm707, 1.0, %v167
    %v768 = vsel %vm708, 1.0, %v168
    %v769 = vsel %vm709, 1.0, %v169
    %v770 = vsel %vm710, 1.0, %v170
    %v771 = vsel %vm711, 1.0, %v171
    %v772 = vsel %vm712, 1.0, %v172
    %v773 = vsel %vm713, 1.0, %v173
    %v774 = vsel %vm714, 1.0, %v174
    %v775 = vsel %vm715, 1.0, %v175
    %v776 = vsel %vm296, 1, 0
    %v777 = vsel %vm297, 1, 0
    %v778 = vsel %vm298, 1, 0
    %v779 = vsel %vm299, 1, 0
    %v780 = vsel %vm300, 1, 0
    %v781 = vsel %vm301, 1, 0
    %v782 = vsel %vm302, 1, 0
    %v783 = vsel %vm303, 1, 0
    %v784 = vsel %vm304, 1, 0
    %v785 = vsel %vm305, 1, 0
    %v786 = vsel %vm306, 1, 0
    %v787 = vsel %vm307, 1, 0
    %v788 = vsel %vm308, 1, 0
    %v789 = vsel %vm309, 1, 0
    %v790 = vsel %vm310, 1, 0
    %v791 = vsel %vm311, 1, 0
    %v792 = vsel %vm312, 1, 0
    %v793 = vsel %vm313, 1, 0
    %v794 = vsel %vm314, 1, 0
    %v795 = vsel %vm315, 1, 0
    %v796 = vsel %vm316, 1, 0
    %v797 = vsel %vm317, 1, 0
    %v798 = vsel %vm318, 1, 0
    %v799 = vsel %vm319, 1, 0
    %v800 = vsel %vm320, 1, 0
    %v801 = vsel %vm321, 1, 0
    %v802 = vsel %vm322, 1, 0
    %v803 = vsel %vm323, 1, 0
    %v804 = vsel %vm324, 1, 0
    %v805 = vsel %vm325, 1, 0
    %v806 = vsel %vm326, 1, 0
    %v807 = vsel %vm327, 1, 0
    %v808 = vsel %vm328, 1, 0
    %v809 = vsel %vm329, 1, 0
    %v810 = vsel %vm330, 1, 0
    %v811 = vsel %vm331, 1, 0
    %v812 = vsel %vm332, 1, 0
    %v813 = vsel %vm333, 1, 0
    %v814 = vsel %vm334, 1, 0
    %v815 = vsel %vm335, 1, 0
    %v816 = vsel %vm336, 1, 0
    %v817 = vsel %vm337, 1, 0
    %v818 = vsel %vm338, 1, 0
    %v819 = vsel %vm339, 1, 0
    %v820 = vsel %vm340, 1, 0
    %v821 = vsel %vm341, 1, 0
    %v822 = vsel %vm342, 1, 0
    %v823 = vsel %vm343, 1, 0
    %v824 = vsel %vm344, 1, 0
    %v825 = vsel %vm345, 1, 0
    %v826 = vsel %vm346, 1, 0
    %v827 = vsel %vm347, 1, 0
    %v828 = vsel %vm348, 1, 0
    %v829 = vsel %vm349, 1, 0
    %v830 = vsel %vm350, 1, 0
    %v831 = vsel %vm351, 1, 0
    %v832 = vsel %vm352, 1, 0
    %v833 = vsel %vm353, 1, 0
    %v834 = vsel %vm354, 1, 0
    %v835 = vsel %vm355, 1, 0
    %836 = vset.pattern.permute.xlu0 0
    %837 = vperm.xlu0 %836, %v776
    %v838 = vpop.permute.xlu0 %837
    %839 = vset.pattern.permute.xlu0 0
    %840 = vperm.xlu0 %839, %v777
    %v841 = vpop.permute.xlu0 %840
    %842 = vset.pattern.permute.xlu0 0
    %843 = vperm.xlu0 %842, %v778
    %v844 = vpop.permute.xlu0 %843
    %845 = vset.pattern.permute.xlu0 0
    %846 = vperm.xlu0 %845, %v779
    %v847 = vpop.permute.xlu0 %846
    %848 = vset.pattern.permute.xlu0 0
    %849 = vperm.xlu0 %848, %v780
    %v850 = vpop.permute.xlu0 %849
    %851 = vset.pattern.permute.xlu0 0
    %852 = vperm.xlu0 %851, %v781
    %v853 = vpop.permute.xlu0 %852
    %854 = vset.pattern.permute.xlu0 0
    %855 = vperm.xlu0 %854, %v782
    %v856 = vpop.permute.xlu0 %855
    %857 = vset.pattern.permute.xlu0 0
    %858 = vperm.xlu0 %857, %v783
    %v859 = vpop.permute.xlu0 %858
    %860 = vset.pattern.permute.xlu0 0
    %861 = vperm.xlu0 %860, %v784
    %v862 = vpop.permute.xlu0 %861
    %863 = vset.pattern.permute.xlu0 0
    %864 = vperm.xlu0 %863, %v785
    %v865 = vpop.permute.xlu0 %864
    %866 = vset.pattern.permute.xlu0 0
    %867 = vperm.xlu0 %866, %v786
    %v868 = vpop.permute.xlu0 %867
    %869 = vset.pattern.permute.xlu0 0
    %870 = vperm.xlu0 %869, %v787
    %v871 = vpop.permute.xlu0 %870
    %872 = vset.pattern.permute.xlu0 0
    %873 = vperm.xlu0 %872, %v788
    %v874 = vpop.permute.xlu0 %873
    %875 = vset.pattern.permute.xlu0 0
    %876 = vperm.xlu0 %875, %v789
    %v877 = vpop.permute.xlu0 %876
    %878 = vset.pattern.permute.xlu0 0
    %879 = vperm.xlu0 %878, %v790
    %v880 = vpop.permute.xlu0 %879
    %881 = vset.pattern.permute.xlu0 0
    %882 = vperm.xlu0 %881, %v791
    %v883 = vpop.permute.xlu0 %882
    %884 = vset.pattern.permute.xlu0 0
    %885 = vperm.xlu0 %884, %v792
    %v886 = vpop.permute.xlu0 %885
    %887 = vset.pattern.permute.xlu0 0
    %888 = vperm.xlu0 %887, %v793
    %v889 = vpop.permute.xlu0 %888
    %890 = vset.pattern.permute.xlu0 0
    %891 = vperm.xlu0 %890, %v794
    %v892 = vpop.permute.xlu0 %891
    %893 = vset.pattern.permute.xlu0 0
    %894 = vperm.xlu0 %893, %v795
    %v895 = vpop.permute.xlu0 %894
    %896 = vset.pattern.permute.xlu0 0
    %897 = vperm.xlu0 %896, %v796
    %v898 = vpop.permute.xlu0 %897
    %899 = vset.pattern.permute.xlu0 0
    %900 = vperm.xlu0 %899, %v797
    %v901 = vpop.permute.xlu0 %900
    %902 = vset.pattern.permute.xlu0 0
    %903 = vperm.xlu0 %902, %v798
    %v904 = vpop.permute.xlu0 %903
    %905 = vset.pattern.permute.xlu0 0
    %906 = vperm.xlu0 %905, %v799
    %v907 = vpop.permute.xlu0 %906
    %908 = vset.pattern.permute.xlu0 0
    %909 = vperm.xlu0 %908, %v800
    %v910 = vpop.permute.xlu0 %909
    %911 = vset.pattern.permute.xlu0 0
    %912 = vperm.xlu0 %911, %v801
    %v913 = vpop.permute.xlu0 %912
    %914 = vset.pattern.permute.xlu0 0
    %915 = vperm.xlu0 %914, %v802
    %v916 = vpop.permute.xlu0 %915
    %917 = vset.pattern.permute.xlu0 0
    %918 = vperm.xlu0 %917, %v803
    %v919 = vpop.permute.xlu0 %918
    %920 = vset.pattern.permute.xlu0 0
    %921 = vperm.xlu0 %920, %v804
    %v922 = vpop.permute.xlu0 %921
    %923 = vset.pattern.permute.xlu0 0
    %924 = vperm.xlu0 %923, %v805
    %v925 = vpop.permute.xlu0 %924
    %926 = vset.pattern.permute.xlu0 0
    %927 = vperm.xlu0 %926, %v806
    %v928 = vpop.permute.xlu0 %927
    %929 = vset.pattern.permute.xlu0 0
    %930 = vperm.xlu0 %929, %v807
    %v931 = vpop.permute.xlu0 %930
    %932 = vset.pattern.permute.xlu0 0
    %933 = vperm.xlu0 %932, %v808
    %v934 = vpop.permute.xlu0 %933
    %935 = vset.pattern.permute.xlu0 0
    %936 = vperm.xlu0 %935, %v809
    %v937 = vpop.permute.xlu0 %936
    %938 = vset.pattern.permute.xlu0 0
    %939 = vperm.xlu0 %938, %v810
    %v940 = vpop.permute.xlu0 %939
    %941 = vset.pattern.permute.xlu0 0
    %942 = vperm.xlu0 %941, %v811
    %v943 = vpop.permute.xlu0 %942
    %944 = vset.pattern.permute.xlu0 0
    %945 = vperm.xlu0 %944, %v812
    %v946 = vpop.permute.xlu0 %945
    %947 = vset.pattern.permute.xlu0 0
    %948 = vperm.xlu0 %947, %v813
    %v949 = vpop.permute.xlu0 %948
    %950 = vset.pattern.permute.xlu0 0
    %951 = vperm.xlu0 %950, %v814
    %v952 = vpop.permute.xlu0 %951
    %953 = vset.pattern.permute.xlu0 0
    %954 = vperm.xlu0 %953, %v815
    %v955 = vpop.permute.xlu0 %954
    %956 = vset.pattern.permute.xlu0 0
    %957 = vperm.xlu0 %956, %v816
    %v958 = vpop.permute.xlu0 %957
    %959 = vset.pattern.permute.xlu0 0
    %960 = vperm.xlu0 %959, %v817
    %v961 = vpop.permute.xlu0 %960
    %962 = vset.pattern.permute.xlu0 0
    %963 = vperm.xlu0 %962, %v818
    %v964 = vpop.permute.xlu0 %963
    %965 = vset.pattern.permute.xlu0 0
    %966 = vperm.xlu0 %965, %v819
    %v967 = vpop.permute.xlu0 %966
    %968 = vset.pattern.permute.xlu0 0
    %969 = vperm.xlu0 %968, %v820
    %v970 = vpop.permute.xlu0 %969
    %971 = vset.pattern.permute.xlu0 0
    %972 = vperm.xlu0 %971, %v821
    %v973 = vpop.permute.xlu0 %972
    %974 = vset.pattern.permute.xlu0 0
    %975 = vperm.xlu0 %974, %v822
    %v976 = vpop.permute.xlu0 %975
    %977 = vset.pattern.permute.xlu0 0
    %978 = vperm.xlu0 %977, %v823
    %v979 = vpop.permute.xlu0 %978
    %980 = vset.pattern.permute.xlu0 0
    %981 = vperm.xlu0 %980, %v824
    %v982 = vpop.permute.xlu0 %981
    %983 = vset.pattern.permute.xlu0 0
    %984 = vperm.xlu0 %983, %v825
    %v985 = vpop.permute.xlu0 %984
    %986 = vset.pattern.permute.xlu0 0
    %987 = vperm.xlu0 %986, %v826
    %v988 = vpop.permute.xlu0 %987
    %989 = vset.pattern.permute.xlu0 0
    %990 = vperm.xlu0 %989, %v827
    %v991 = vpop.permute.xlu0 %990
    %992 = vset.pattern.permute.xlu0 0
    %993 = vperm.xlu0 %992, %v828
    %v994 = vpop.permute.xlu0 %993
    %995 = vset.pattern.permute.xlu0 0
    %996 = vperm.xlu0 %995, %v829
    %v997 = vpop.permute.xlu0 %996
    %998 = vset.pattern.permute.xlu0 0
    %999 = vperm.xlu0 %998, %v830
    %v1000 = vpop.permute.xlu0 %999
    %1001 = vset.pattern.permute.xlu0 0
    %1002 = vperm.xlu0 %1001, %v831
    %v1003 = vpop.permute.xlu0 %1002
    %1004 = vset.pattern.permute.xlu0 0
    %1005 = vperm.xlu0 %1004, %v832
    %v1006 = vpop.permute.xlu0 %1005
    %1007 = vset.pattern.permute.xlu0 0
    %1008 = vperm.xlu0 %1007, %v833
    %v1009 = vpop.permute.xlu0 %1008
    %1010 = vset.pattern.permute.xlu0 0
    %1011 = vperm.xlu0 %1010, %v834
    %v1012 = vpop.permute.xlu0 %1011
    %1013 = vset.pattern.permute.xlu0 0
    %1014 = vperm.xlu0 %1013, %v835
    %v1015 = vpop.permute.xlu0 %1014
    %vm1016 = vcmp.eq.s32.totalorder %v838, 1
    %vm1017 = vcmp.eq.s32.totalorder %v841, 1
    %vm1018 = vcmp.eq.s32.totalorder %v844, 1
    %vm1019 = vcmp.eq.s32.totalorder %v847, 1
    %vm1020 = vcmp.eq.s32.totalorder %v850, 1
    %vm1021 = vcmp.eq.s32.totalorder %v853, 1
    %vm1022 = vcmp.eq.s32.totalorder %v856, 1
    %vm1023 = vcmp.eq.s32.totalorder %v859, 1
    %vm1024 = vcmp.eq.s32.totalorder %v862, 1
    %vm1025 = vcmp.eq.s32.totalorder %v865, 1
    %vm1026 = vcmp.eq.s32.totalorder %v868, 1
    %vm1027 = vcmp.eq.s32.totalorder %v871, 1
    %vm1028 = vcmp.eq.s32.totalorder %v874, 1
    %vm1029 = vcmp.eq.s32.totalorder %v877, 1
    %vm1030 = vcmp.eq.s32.totalorder %v880, 1
    %vm1031 = vcmp.eq.s32.totalorder %v883, 1
    %vm1032 = vcmp.eq.s32.totalorder %v886, 1
    %vm1033 = vcmp.eq.s32.totalorder %v889, 1
    %vm1034 = vcmp.eq.s32.totalorder %v892, 1
    %vm1035 = vcmp.eq.s32.totalorder %v895, 1
    %vm1036 = vcmp.eq.s32.totalorder %v898, 1
    %vm1037 = vcmp.eq.s32.totalorder %v901, 1
    %vm1038 = vcmp.eq.s32.totalorder %v904, 1
    %vm1039 = vcmp.eq.s32.totalorder %v907, 1
    %vm1040 = vcmp.eq.s32.totalorder %v910, 1
    %vm1041 = vcmp.eq.s32.totalorder %v913, 1
    %vm1042 = vcmp.eq.s32.totalorder %v916, 1
    %vm1043 = vcmp.eq.s32.totalorder %v919, 1
    %vm1044 = vcmp.eq.s32.totalorder %v922, 1
    %vm1045 = vcmp.eq.s32.totalorder %v925, 1
    %vm1046 = vcmp.eq.s32.totalorder %v928, 1
    %vm1047 = vcmp.eq.s32.totalorder %v931, 1
    %vm1048 = vcmp.eq.s32.totalorder %v934, 1
    %vm1049 = vcmp.eq.s32.totalorder %v937, 1
    %vm1050 = vcmp.eq.s32.totalorder %v940, 1
    %vm1051 = vcmp.eq.s32.totalorder %v943, 1
    %vm1052 = vcmp.eq.s32.totalorder %v946, 1
    %vm1053 = vcmp.eq.s32.totalorder %v949, 1
    %vm1054 = vcmp.eq.s32.totalorder %v952, 1
    %vm1055 = vcmp.eq.s32.totalorder %v955, 1
    %vm1056 = vcmp.eq.s32.totalorder %v958, 1
    %vm1057 = vcmp.eq.s32.totalorder %v961, 1
    %vm1058 = vcmp.eq.s32.totalorder %v964, 1
    %vm1059 = vcmp.eq.s32.totalorder %v967, 1
    %vm1060 = vcmp.eq.s32.totalorder %v970, 1
    %vm1061 = vcmp.eq.s32.totalorder %v973, 1
    %vm1062 = vcmp.eq.s32.totalorder %v976, 1
    %vm1063 = vcmp.eq.s32.totalorder %v979, 1
    %vm1064 = vcmp.eq.s32.totalorder %v982, 1
    %vm1065 = vcmp.eq.s32.totalorder %v985, 1
    %vm1066 = vcmp.eq.s32.totalorder %v988, 1
    %vm1067 = vcmp.eq.s32.totalorder %v991, 1
    %vm1068 = vcmp.eq.s32.totalorder %v994, 1
    %vm1069 = vcmp.eq.s32.totalorder %v997, 1
    %vm1070 = vcmp.eq.s32.totalorder %v1000, 1
    %vm1071 = vcmp.eq.s32.totalorder %v1003, 1
    %vm1072 = vcmp.eq.s32.totalorder %v1006, 1
    %vm1073 = vcmp.eq.s32.totalorder %v1009, 1
    %vm1074 = vcmp.eq.s32.totalorder %v1012, 1
    %vm1075 = vcmp.eq.s32.totalorder %v1015, 1
    %v1076 = vsel %vm1016, 0.0, %v716
    %v1077 = vsel %vm1017, 0.0, %v717
    %v1078 = vsel %vm1018, 0.0, %v718
    %v1079 = vsel %vm1019, 0.0, %v719
    %v1080 = vsel %vm1020, 0.0, %v720
    %v1081 = vsel %vm1021, 0.0, %v721
    %v1082 = vsel %vm1022, 0.0, %v722
    %v1083 = vsel %vm1023, 0.0, %v723
    %v1084 = vsel %vm1024, 0.0, %v724
    %v1085 = vsel %vm1025, 0.0, %v725
    %v1086 = vsel %vm1026, 0.0, %v726
    %v1087 = vsel %vm1027, 0.0, %v727
    %v1088 = vsel %vm1028, 0.0, %v728
    %v1089 = vsel %vm1029, 0.0, %v729
    %v1090 = vsel %vm1030, 0.0, %v730
    %v1091 = vsel %vm1031, 0.0, %v731
    %v1092 = vsel %vm1032, 0.0, %v732
    %v1093 = vsel %vm1033, 0.0, %v733
    %v1094 = vsel %vm1034, 0.0, %v734
    %v1095 = vsel %vm1035, 0.0, %v735
    %v1096 = vsel %vm1036, 0.0, %v736
    %v1097 = vsel %vm1037, 0.0, %v737
    %v1098 = vsel %vm1038, 0.0, %v738
    %v1099 = vsel %vm1039, 0.0, %v739
    %v1100 = vsel %vm1040, 0.0, %v740
    %v1101 = vsel %vm1041, 0.0, %v741
    %v1102 = vsel %vm1042, 0.0, %v742
    %v1103 = vsel %vm1043, 0.0, %v743
    %v1104 = vsel %vm1044, 0.0, %v744
    %v1105 = vsel %vm1045, 0.0, %v745
    %v1106 = vsel %vm1046, 0.0, %v746
    %v1107 = vsel %vm1047, 0.0, %v747
    %v1108 = vsel %vm1048, 0.0, %v748
    %v1109 = vsel %vm1049, 0.0, %v749
    %v1110 = vsel %vm1050, 0.0, %v750
    %v1111 = vsel %vm1051, 0.0, %v751
    %v1112 = vsel %vm1052, 0.0, %v752
    %v1113 = vsel %vm1053, 0.0, %v753
    %v1114 = vsel %vm1054, 0.0, %v754
    %v1115 = vsel %vm1055, 0.0, %v755
    %v1116 = vsel %vm1056, 0.0, %v756
    %v1117 = vsel %vm1057, 0.0, %v757
    %v1118 = vsel %vm1058, 0.0, %v758
    %v1119 = vsel %vm1059, 0.0, %v759
    %v1120 = vsel %vm1060, 0.0, %v760
    %v1121 = vsel %vm1061, 0.0, %v761
    %v1122 = vsel %vm1062, 0.0, %v762
    %v1123 = vsel %vm1063, 0.0, %v763
    %v1124 = vsel %vm1064, 0.0, %v764
    %v1125 = vsel %vm1065, 0.0, %v765
    %v1126 = vsel %vm1066, 0.0, %v766
    %v1127 = vsel %vm1067, 0.0, %v767
    %v1128 = vsel %vm1068, 0.0, %v768
    %v1129 = vsel %vm1069, 0.0, %v769
    %v1130 = vsel %vm1070, 0.0, %v770
    %v1131 = vsel %vm1071, 0.0, %v771
    %v1132 = vsel %vm1072, 0.0, %v772
    %v1133 = vsel %vm1073, 0.0, %v773
    %v1134 = vsel %vm1074, 0.0, %v774
    %v1135 = vsel %vm1075, 0.0, %v775
    %s1136 = sld [smem:[#allocation4]]
    %v1137 = vstv %s1136
    %v1138 = vmul.f32 %v1137, %v1076
    %v1139 = vmul.f32 %v1137, %v1077
    %v1140 = vmul.f32 %v1137, %v1079
    %v1141 = vmul.f32 %v1137, %v1080
    %v1142 = vmul.f32 %v1137, %v1082
    %v1143 = vmul.f32 %v1137, %v1083
    %v1144 = vmul.f32 %v1137, %v1085
    %v1145 = vmul.f32 %v1137, %v1086
    %v1146 = vmul.f32 %v1137, %v1088
    %v1147 = vmul.f32 %v1137, %v1089
    %v1148 = vmul.f32 %v1137, %v1091
    %v1149 = vmul.f32 %v1137, %v1092
    %v1150 = vmul.f32 %v1137, %v1094
    %v1151 = vmul.f32 %v1137, %v1095
    %v1152 = vmul.f32 %v1137, %v1097
    %v1153 = vmul.f32 %v1137, %v1098
    %v1154 = vmul.f32 %v1137, %v1100
    %v1155 = vmul.f32 %v1137, %v1101
    %v1156 = vmul.f32 %v1137, %v1103
    %v1157 = vmul.f32 %v1137, %v1104
    %v1158 = vmul.f32 %v1137, %v1106
    %v1159 = vmul.f32 %v1137, %v1107
    %v1160 = vmul.f32 %v1137, %v1109
    %v1161 = vmul.f32 %v1137, %v1110
    %v1162 = vmul.f32 %v1137, %v1112
    %v1163 = vmul.f32 %v1137, %v1113
    %v1164 = vmul.f32 %v1137, %v1115
    %v1165 = vmul.f32 %v1137, %v1116
    %v1166 = vmul.f32 %v1137, %v1118
    %v1167 = vmul.f32 %v1137, %v1119
    %v1168 = vmul.f32 %v1137, %v1121
    %v1169 = vmul.f32 %v1137, %v1122
    %v1170 = vmul.f32 %v1137, %v1124
    %v1171 = vmul.f32 %v1137, %v1125
    %v1172 = vmul.f32 %v1137, %v1127
    %v1173 = vmul.f32 %v1137, %v1128
    %v1174 = vmul.f32 %v1137, %v1130
    %v1175 = vmul.f32 %v1137, %v1131
    %v1176 = vmul.f32 %v1137, %v1133
    %v1177 = vmul.f32 %v1137, %v1134
    %s1178 = sld [smem:[#allocation4 + $0x1]]
    %v1179 = vstv %s1178
    %v1180 = vmul.f32 %v1179, %v1076
    %v1181 = vmul.f32 %v1179, %v1077
    %v1182 = vmul.f32 %v1179, %v1078
    %v1183 = vmul.f32 %v1179, %v1079
    %v1184 = vmul.f32 %v1179, %v1080
    %v1185 = vmul.f32 %v1179, %v1081
    %v1186 = vmul.f32 %v1179, %v1082
    %v1187 = vmul.f32 %v1179, %v1083
    %v1188 = vmul.f32 %v1179, %v1084
    %v1189 = vmul.f32 %v1179, %v1085
    %v1190 = vmul.f32 %v1179, %v1086
    %v1191 = vmul.f32 %v1179, %v1087
    %v1192 = vmul.f32 %v1179, %v1088
    %v1193 = vmul.f32 %v1179, %v1089
    %v1194 = vmul.f32 %v1179, %v1090
    %v1195 = vmul.f32 %v1179, %v1091
    %v1196 = vmul.f32 %v1179, %v1092
    %v1197 = vmul.f32 %v1179, %v1093
    %v1198 = vmul.f32 %v1179, %v1094
    %v1199 = vmul.f32 %v1179, %v1095
    %v1200 = vmul.f32 %v1179, %v1096
    %v1201 = vmul.f32 %v1179, %v1097
    %v1202 = vmul.f32 %v1179, %v1098
    %v1203 = vmul.f32 %v1179, %v1099
    %v1204 = vmul.f32 %v1179, %v1100
    %v1205 = vmul.f32 %v1179, %v1101
    %v1206 = vmul.f32 %v1179, %v1102
    %v1207 = vmul.f32 %v1179, %v1103
    %v1208 = vmul.f32 %v1179, %v1104
    %v1209 = vmul.f32 %v1179, %v1105
    %v1210 = vmul.f32 %v1179, %v1106
    %v1211 = vmul.f32 %v1179, %v1107
    %v1212 = vmul.f32 %v1179, %v1108
    %v1213 = vmul.f32 %v1179, %v1109
    %v1214 = vmul.f32 %v1179, %v1110
    %v1215 = vmul.f32 %v1179, %v1111
    %v1216 = vmul.f32 %v1179, %v1112
    %v1217 = vmul.f32 %v1179, %v1113
    %v1218 = vmul.f32 %v1179, %v1114
    %v1219 = vmul.f32 %v1179, %v1115
    %v1220 = vmul.f32 %v1179, %v1116
    %v1221 = vmul.f32 %v1179, %v1117
    %v1222 = vmul.f32 %v1179, %v1118
    %v1223 = vmul.f32 %v1179, %v1119
    %v1224 = vmul.f32 %v1179, %v1120
    %v1225 = vmul.f32 %v1179, %v1121
    %v1226 = vmul.f32 %v1179, %v1122
    %v1227 = vmul.f32 %v1179, %v1123
    %v1228 = vmul.f32 %v1179, %v1124
    %v1229 = vmul.f32 %v1179, %v1125
    %v1230 = vmul.f32 %v1179, %v1126
    %v1231 = vmul.f32 %v1179, %v1127
    %v1232 = vmul.f32 %v1179, %v1128
    %v1233 = vmul.f32 %v1179, %v1129
    %v1234 = vmul.f32 %v1179, %v1130
    %v1235 = vmul.f32 %v1179, %v1131
    %v1236 = vmul.f32 %v1179, %v1132
    %v1237 = vmul.f32 %v1179, %v1133
    %v1238 = vmul.f32 %v1179, %v1134
    %v1239 = vmul.f32 %v1179, %v1135
    %vm1300 = vcmask 1046528
    %v1301 = vrot.slane %v1180, 1
    %v1302 = vrot.slane %v1181, 1
    %v1303 = vsel %vm1300, %v1301, %v1302
    %v1304 = vrot.slane %v1182, 1
    %v1305 = vsel %vm1300, %v1302, %v1304
    %v1306 = vrot.slane %v1183, 1
    %v1307 = vrot.slane %v1184, 1
    %v1308 = vsel %vm1300, %v1306, %v1307
    %v1309 = vrot.slane %v1185, 1
    %v1310 = vsel %vm1300, %v1307, %v1309
    %v1311 = vrot.slane %v1186, 1
    %v1312 = vrot.slane %v1187, 1
    %v1313 = vsel %vm1300, %v1311, %v1312
    %v1314 = vrot.slane %v1188, 1
    %v1315 = vsel %vm1300, %v1312, %v1314
    %v1316 = vrot.slane %v1189, 1
    %v1317 = vrot.slane %v1190, 1
    %v1318 = vsel %vm1300, %v1316, %v1317
    %v1319 = vrot.slane %v1191, 1
    %v1320 = vsel %vm1300, %v1317, %v1319
    %v1321 = vrot.slane %v1192, 1
    %v1322 = vrot.slane %v1193, 1
    %v1323 = vsel %vm1300, %v1321, %v1322
    %v1324 = vrot.slane %v1194, 1
    %v1325 = vsel %vm1300, %v1322, %v1324
    %v1326 = vrot.slane %v1195, 1
    %v1327 = vrot.slane %v1196, 1
    %v1328 = vsel %vm1300, %v1326, %v1327
    %v1329 = vrot.slane %v1197, 1
    %v1330 = vsel %vm1300, %v1327, %v1329
    %v1331 = vrot.slane %v1198, 1
    %v1332 = vrot.slane %v1199, 1
    %v1333 = vsel %vm1300, %v1331, %v1332
    %v1334 = vrot.slane %v1200, 1
    %v1335 = vsel %vm1300, %v1332, %v1334
    %v1336 = vrot.slane %v1201, 1
    %v1337 = vrot.slane %v1202, 1
    %v1338 = vsel %vm1300, %v1336, %v1337
    %v1339 = vrot.slane %v1203, 1
    %v1340 = vsel %vm1300, %v1337, %v1339
    %v1341 = vrot.slane %v1204, 1
    %v1342 = vrot.slane %v1205, 1
    %v1343 = vsel %vm1300, %v1341, %v1342
    %v1344 = vrot.slane %v1206, 1
    %v1345 = vsel %vm1300, %v1342, %v1344
    %v1346 = vrot.slane %v1207, 1
    %v1347 = vrot.slane %v1208, 1
    %v1348 = vsel %vm1300, %v1346, %v1347
    %v1349 = vrot.slane %v1209, 1
    %v1350 = vsel %vm1300, %v1347, %v1349
    %v1351 = vrot.slane %v1210, 1
    %v1352 = vrot.slane %v1211, 1
    %v1353 = vsel %vm1300, %v1351, %v1352
    %v1354 = vrot.slane %v1212, 1
    %v1355 = vsel %vm1300, %v1352, %v1354
    %v1356 = vrot.slane %v1213, 1
    %v1357 = vrot.slane %v1214, 1
    %v1358 = vsel %vm1300, %v1356, %v1357
    %v1359 = vrot.slane %v1215, 1
    %v1360 = vsel %vm1300, %v1357, %v1359
    %v1361 = vrot.slane %v1216, 1
    %v1362 = vrot.slane %v1217, 1
    %v1363 = vsel %vm1300, %v1361, %v1362
    %v1364 = vrot.slane %v1218, 1
    %v1365 = vsel %vm1300, %v1362, %v1364
    %v1366 = vrot.slane %v1219, 1
    %v1367 = vrot.slane %v1220, 1
    %v1368 = vsel %vm1300, %v1366, %v1367
    %v1369 = vrot.slane %v1221, 1
    %v1370 = vsel %vm1300, %v1367, %v1369
    %v1371 = vrot.slane %v1222, 1
    %v1372 = vrot.slane %v1223, 1
    %v1373 = vsel %vm1300, %v1371, %v1372
    %v1374 = vrot.slane %v1224, 1
    %v1375 = vsel %vm1300, %v1372, %v1374
    %v1376 = vrot.slane %v1225, 1
    %v1377 = vrot.slane %v1226, 1
    %v1378 = vsel %vm1300, %v1376, %v1377
    %v1379 = vrot.slane %v1227, 1
    %v1380 = vsel %vm1300, %v1377, %v1379
    %v1381 = vrot.slane %v1228, 1
    %v1382 = vrot.slane %v1229, 1
    %v1383 = vsel %vm1300, %v1381, %v1382
    %v1384 = vrot.slane %v1230, 1
    %v1385 = vsel %vm1300, %v1382, %v1384
    %v1386 = vrot.slane %v1231, 1
    %v1387 = vrot.slane %v1232, 1
    %v1388 = vsel %vm1300, %v1386, %v1387
    %v1389 = vrot.slane %v1233, 1
    %v1390 = vsel %vm1300, %v1387, %v1389
    %v1391 = vrot.slane %v1234, 1
    %v1392 = vrot.slane %v1235, 1
    %v1393 = vsel %vm1300, %v1391, %v1392
    %v1394 = vrot.slane %v1236, 1
    %v1395 = vsel %vm1300, %v1392, %v1394
    %v1396 = vrot.slane %v1237, 1
    %v1397 = vrot.slane %v1238, 1
    %v1398 = vsel %vm1300, %v1396, %v1397
    %v1399 = vrot.slane %v1239, 1
    %v1400 = vsel %vm1300, %v1397, %v1399
    %v1441 = vadd.f32 %v1138, %v1303
    %v1442 = vadd.f32 %v1139, %v1305
    %v1443 = vadd.f32 %v1140, %v1308
    %v1444 = vadd.f32 %v1141, %v1310
    %v1445 = vadd.f32 %v1142, %v1313
    %v1446 = vadd.f32 %v1143, %v1315
    %v1447 = vadd.f32 %v1144, %v1318
    %v1448 = vadd.f32 %v1145, %v1320
    %v1449 = vadd.f32 %v1146, %v1323
    %v1450 = vadd.f32 %v1147, %v1325
    %v1451 = vadd.f32 %v1148, %v1328
    %v1452 = vadd.f32 %v1149, %v1330
    %v1453 = vadd.f32 %v1150, %v1333
    %v1454 = vadd.f32 %v1151, %v1335
    %v1455 = vadd.f32 %v1152, %v1338
    %v1456 = vadd.f32 %v1153, %v1340
    %v1457 = vadd.f32 %v1154, %v1343
    %v1458 = vadd.f32 %v1155, %v1345
    %v1459 = vadd.f32 %v1156, %v1348
    %v1460 = vadd.f32 %v1157, %v1350
    %v1461 = vadd.f32 %v1158, %v1353
    %v1462 = vadd.f32 %v1159, %v1355
    %v1463 = vadd.f32 %v1160, %v1358
    %v1464 = vadd.f32 %v1161, %v1360
    %v1465 = vadd.f32 %v1162, %v1363
    %v1466 = vadd.f32 %v1163, %v1365
    %v1467 = vadd.f32 %v1164, %v1368
    %v1468 = vadd.f32 %v1165, %v1370
    %v1469 = vadd.f32 %v1166, %v1373
    %v1470 = vadd.f32 %v1167, %v1375
    %v1471 = vadd.f32 %v1168, %v1378
    %v1472 = vadd.f32 %v1169, %v1380
    %v1473 = vadd.f32 %v1170, %v1383
    %v1474 = vadd.f32 %v1171, %v1385
    %v1475 = vadd.f32 %v1172, %v1388
    %v1476 = vadd.f32 %v1173, %v1390
    %v1477 = vadd.f32 %v1174, %v1393
    %v1478 = vadd.f32 %v1175, %v1395
    %v1479 = vadd.f32 %v1176, %v1398
    %v1480 = vadd.f32 %v1177, %v1400
    %s1481 = sld [smem:[#allocation4 + $0x2]]
    %v1482 = vstv %s1481
    %v1483 = vmul.f32 %v1482, %v1076
    %v1484 = vmul.f32 %v1482, %v1077
    %v1485 = vmul.f32 %v1482, %v1078
    %v1486 = vmul.f32 %v1482, %v1079
    %v1487 = vmul.f32 %v1482, %v1080
    %v1488 = vmul.f32 %v1482, %v1081
    %v1489 = vmul.f32 %v1482, %v1082
    %v1490 = vmul.f32 %v1482, %v1083
    %v1491 = vmul.f32 %v1482, %v1084
    %v1492 = vmul.f32 %v1482, %v1085
    %v1493 = vmul.f32 %v1482, %v1086
    %v1494 = vmul.f32 %v1482, %v1087
    %v1495 = vmul.f32 %v1482, %v1088
    %v1496 = vmul.f32 %v1482, %v1089
    %v1497 = vmul.f32 %v1482, %v1090
    %v1498 = vmul.f32 %v1482, %v1091
    %v1499 = vmul.f32 %v1482, %v1092
    %v1500 = vmul.f32 %v1482, %v1093
    %v1501 = vmul.f32 %v1482, %v1094
    %v1502 = vmul.f32 %v1482, %v1095
    %v1503 = vmul.f32 %v1482, %v1096
    %v1504 = vmul.f32 %v1482, %v1097
    %v1505 = vmul.f32 %v1482, %v1098
    %v1506 = vmul.f32 %v1482, %v1099
    %v1507 = vmul.f32 %v1482, %v1100
    %v1508 = vmul.f32 %v1482, %v1101
    %v1509 = vmul.f32 %v1482, %v1102
    %v1510 = vmul.f32 %v1482, %v1103
    %v1511 = vmul.f32 %v1482, %v1104
    %v1512 = vmul.f32 %v1482, %v1105
    %v1513 = vmul.f32 %v1482, %v1106
    %v1514 = vmul.f32 %v1482, %v1107
    %v1515 = vmul.f32 %v1482, %v1108
    %v1516 = vmul.f32 %v1482, %v1109
    %v1517 = vmul.f32 %v1482, %v1110
    %v1518 = vmul.f32 %v1482, %v1111
    %v1519 = vmul.f32 %v1482, %v1112
    %v1520 = vmul.f32 %v1482, %v1113
    %v1521 = vmul.f32 %v1482, %v1114
    %v1522 = vmul.f32 %v1482, %v1115
    %v1523 = vmul.f32 %v1482, %v1116
    %v1524 = vmul.f32 %v1482, %v1117
    %v1525 = vmul.f32 %v1482, %v1118
    %v1526 = vmul.f32 %v1482, %v1119
    %v1527 = vmul.f32 %v1482, %v1120
    %v1528 = vmul.f32 %v1482, %v1121
    %v1529 = vmul.f32 %v1482, %v1122
    %v1530 = vmul.f32 %v1482, %v1123
    %v1531 = vmul.f32 %v1482, %v1124
    %v1532 = vmul.f32 %v1482, %v1125
    %v1533 = vmul.f32 %v1482, %v1126
    %v1534 = vmul.f32 %v1482, %v1127
    %v1535 = vmul.f32 %v1482, %v1128
    %v1536 = vmul.f32 %v1482, %v1129
    %v1537 = vmul.f32 %v1482, %v1130
    %v1538 = vmul.f32 %v1482, %v1131
    %v1539 = vmul.f32 %v1482, %v1132
    %v1540 = vmul.f32 %v1482, %v1133
    %v1541 = vmul.f32 %v1482, %v1134
    %v1542 = vmul.f32 %v1482, %v1135
    %vm1603 = vcmask 1045504
    %v1604 = vrot.slane %v1483, 2
    %v1605 = vrot.slane %v1484, 2
    %v1606 = vsel %vm1603, %v1604, %v1605
    %v1607 = vrot.slane %v1485, 2
    %v1608 = vsel %vm1603, %v1605, %v1607
    %v1609 = vrot.slane %v1486, 2
    %v1610 = vrot.slane %v1487, 2
    %v1611 = vsel %vm1603, %v1609, %v1610
    %v1612 = vrot.slane %v1488, 2
    %v1613 = vsel %vm1603, %v1610, %v1612
    %v1614 = vrot.slane %v1489, 2
    %v1615 = vrot.slane %v1490, 2
    %v1616 = vsel %vm1603, %v1614, %v1615
    %v1617 = vrot.slane %v1491, 2
    %v1618 = vsel %vm1603, %v1615, %v1617
    %v1619 = vrot.slane %v1492, 2
    %v1620 = vrot.slane %v1493, 2
    %v1621 = vsel %vm1603, %v1619, %v1620
    %v1622 = vrot.slane %v1494, 2
    %v1623 = vsel %vm1603, %v1620, %v1622
    %v1624 = vrot.slane %v1495, 2
    %v1625 = vrot.slane %v1496, 2
    %v1626 = vsel %vm1603, %v1624, %v1625
    %v1627 = vrot.slane %v1497, 2
    %v1628 = vsel %vm1603, %v1625, %v1627
    %v1629 = vrot.slane %v1498, 2
    %v1630 = vrot.slane %v1499, 2
    %v1631 = vsel %vm1603, %v1629, %v1630
    %v1632 = vrot.slane %v1500, 2
    %v1633 = vsel %vm1603, %v1630, %v1632
    %v1634 = vrot.slane %v1501, 2
    %v1635 = vrot.slane %v1502, 2
    %v1636 = vsel %vm1603, %v1634, %v1635
    %v1637 = vrot.slane %v1503, 2
    %v1638 = vsel %vm1603, %v1635, %v1637
    %v1639 = vrot.slane %v1504, 2
    %v1640 = vrot.slane %v1505, 2
    %v1641 = vsel %vm1603, %v1639, %v1640
    %v1642 = vrot.slane %v1506, 2
    %v1643 = vsel %vm1603, %v1640, %v1642
    %v1644 = vrot.slane %v1507, 2
    %v1645 = vrot.slane %v1508, 2
    %v1646 = vsel %vm1603, %v1644, %v1645
    %v1647 = vrot.slane %v1509, 2
    %v1648 = vsel %vm1603, %v1645, %v1647
    %v1649 = vrot.slane %v1510, 2
    %v1650 = vrot.slane %v1511, 2
    %v1651 = vsel %vm1603, %v1649, %v1650
    %v1652 = vrot.slane %v1512, 2
    %v1653 = vsel %vm1603, %v1650, %v1652
    %v1654 = vrot.slane %v1513, 2
    %v1655 = vrot.slane %v1514, 2
    %v1656 = vsel %vm1603, %v1654, %v1655
    %v1657 = vrot.slane %v1515, 2
    %v1658 = vsel %vm1603, %v1655, %v1657
    %v1659 = vrot.slane %v1516, 2
    %v1660 = vrot.slane %v1517, 2
    %v1661 = vsel %vm1603, %v1659, %v1660
    %v1662 = vrot.slane %v1518, 2
    %v1663 = vsel %vm1603, %v1660, %v1662
    %v1664 = vrot.slane %v1519, 2
    %v1665 = vrot.slane %v1520, 2
    %v1666 = vsel %vm1603, %v1664, %v1665
    %v1667 = vrot.slane %v1521, 2
    %v1668 = vsel %vm1603, %v1665, %v1667
    %v1669 = vrot.slane %v1522, 2
    %v1670 = vrot.slane %v1523, 2
    %v1671 = vsel %vm1603, %v1669, %v1670
    %v1672 = vrot.slane %v1524, 2
    %v1673 = vsel %vm1603, %v1670, %v1672
    %v1674 = vrot.slane %v1525, 2
    %v1675 = vrot.slane %v1526, 2
    %v1676 = vsel %vm1603, %v1674, %v1675
    %v1677 = vrot.slane %v1527, 2
    %v1678 = vsel %vm1603, %v1675, %v1677
    %v1679 = vrot.slane %v1528, 2
    %v1680 = vrot.slane %v1529, 2
    %v1681 = vsel %vm1603, %v1679, %v1680
    %v1682 = vrot.slane %v1530, 2
    %v1683 = vsel %vm1603, %v1680, %v1682
    %v1684 = vrot.slane %v1531, 2
    %v1685 = vrot.slane %v1532, 2
    %v1686 = vsel %vm1603, %v1684, %v1685
    %v1687 = vrot.slane %v1533, 2
    %v1688 = vsel %vm1603, %v1685, %v1687
    %v1689 = vrot.slane %v1534, 2
    %v1690 = vrot.slane %v1535, 2
    %v1691 = vsel %vm1603, %v1689, %v1690
    %v1692 = vrot.slane %v1536, 2
    %v1693 = vsel %vm1603, %v1690, %v1692
    %v1694 = vrot.slane %v1537, 2
    %v1695 = vrot.slane %v1538, 2
    %v1696 = vsel %vm1603, %v1694, %v1695
    %v1697 = vrot.slane %v1539, 2
    %v1698 = vsel %vm1603, %v1695, %v1697
    %v1699 = vrot.slane %v1540, 2
    %v1700 = vrot.slane %v1541, 2
    %v1701 = vsel %vm1603, %v1699, %v1700
    %v1702 = vrot.slane %v1542, 2
    %v1703 = vsel %vm1603, %v1700, %v1702
    %v1744 = vadd.f32 %v1441, %v1606
    %v1745 = vadd.f32 %v1442, %v1608
    %v1746 = vadd.f32 %v1443, %v1611
    %v1747 = vadd.f32 %v1444, %v1613
    %v1748 = vadd.f32 %v1445, %v1616
    %v1749 = vadd.f32 %v1446, %v1618
    %v1750 = vadd.f32 %v1447, %v1621
    %v1751 = vadd.f32 %v1448, %v1623
    %v1752 = vadd.f32 %v1449, %v1626
    %v1753 = vadd.f32 %v1450, %v1628
    %v1754 = vadd.f32 %v1451, %v1631
    %v1755 = vadd.f32 %v1452, %v1633
    %v1756 = vadd.f32 %v1453, %v1636
    %v1757 = vadd.f32 %v1454, %v1638
    %v1758 = vadd.f32 %v1455, %v1641
    %v1759 = vadd.f32 %v1456, %v1643
    %v1760 = vadd.f32 %v1457, %v1646
    %v1761 = vadd.f32 %v1458, %v1648
    %v1762 = vadd.f32 %v1459, %v1651
    %v1763 = vadd.f32 %v1460, %v1653
    %v1764 = vadd.f32 %v1461, %v1656
    %v1765 = vadd.f32 %v1462, %v1658
    %v1766 = vadd.f32 %v1463, %v1661
    %v1767 = vadd.f32 %v1464, %v1663
    %v1768 = vadd.f32 %v1465, %v1666
    %v1769 = vadd.f32 %v1466, %v1668
    %v1770 = vadd.f32 %v1467, %v1671
    %v1771 = vadd.f32 %v1468, %v1673
    %v1772 = vadd.f32 %v1469, %v1676
    %v1773 = vadd.f32 %v1470, %v1678
    %v1774 = vadd.f32 %v1471, %v1681
    %v1775 = vadd.f32 %v1472, %v1683
    %v1776 = vadd.f32 %v1473, %v1686
    %v1777 = vadd.f32 %v1474, %v1688
    %v1778 = vadd.f32 %v1475, %v1691
    %v1779 = vadd.f32 %v1476, %v1693
    %v1780 = vadd.f32 %v1477, %v1696
    %v1781 = vadd.f32 %v1478, %v1698
    %v1782 = vadd.f32 %v1479, %v1701
    %v1783 = vadd.f32 %v1480, %v1703
    %s1784 = sld [smem:[#allocation4 + $0x3]]
    %v1785 = vstv %s1784
    %v1786 = vmul.f32 %v1785, %v1076
    %v1787 = vmul.f32 %v1785, %v1077
    %v1788 = vmul.f32 %v1785, %v1078
    %v1789 = vmul.f32 %v1785, %v1079
    %v1790 = vmul.f32 %v1785, %v1080
    %v1791 = vmul.f32 %v1785, %v1081
    %v1792 = vmul.f32 %v1785, %v1082
    %v1793 = vmul.f32 %v1785, %v1083
    %v1794 = vmul.f32 %v1785, %v1084
    %v1795 = vmul.f32 %v1785, %v1085
    %v1796 = vmul.f32 %v1785, %v1086
    %v1797 = vmul.f32 %v1785, %v1087
    %v1798 = vmul.f32 %v1785, %v1088
    %v1799 = vmul.f32 %v1785, %v1089
    %v1800 = vmul.f32 %v1785, %v1090
    %v1801 = vmul.f32 %v1785, %v1091
    %v1802 = vmul.f32 %v1785, %v1092
    %v1803 = vmul.f32 %v1785, %v1093
    %v1804 = vmul.f32 %v1785, %v1094
    %v1805 = vmul.f32 %v1785, %v1095
    %v1806 = vmul.f32 %v1785, %v1096
    %v1807 = vmul.f32 %v1785, %v1097
    %v1808 = vmul.f32 %v1785, %v1098
    %v1809 = vmul.f32 %v1785, %v1099
    %v1810 = vmul.f32 %v1785, %v1100
    %v1811 = vmul.f32 %v1785, %v1101
    %v1812 = vmul.f32 %v1785, %v1102
    %v1813 = vmul.f32 %v1785, %v1103
    %v1814 = vmul.f32 %v1785, %v1104
    %v1815 = vmul.f32 %v1785, %v1105
    %v1816 = vmul.f32 %v1785, %v1106
    %v1817 = vmul.f32 %v1785, %v1107
    %v1818 = vmul.f32 %v1785, %v1108
    %v1819 = vmul.f32 %v1785, %v1109
    %v1820 = vmul.f32 %v1785, %v1110
    %v1821 = vmul.f32 %v1785, %v1111
    %v1822 = vmul.f32 %v1785, %v1112
    %v1823 = vmul.f32 %v1785, %v1113
    %v1824 = vmul.f32 %v1785, %v1114
    %v1825 = vmul.f32 %v1785, %v1115
    %v1826 = vmul.f32 %v1785, %v1116
    %v1827 = vmul.f32 %v1785, %v1117
    %v1828 = vmul.f32 %v1785, %v1118
    %v1829 = vmul.f32 %v1785, %v1119
    %v1830 = vmul.f32 %v1785, %v1120
    %v1831 = vmul.f32 %v1785, %v1121
    %v1832 = vmul.f32 %v1785, %v1122
    %v1833 = vmul.f32 %v1785, %v1123
    %v1834 = vmul.f32 %v1785, %v1124
    %v1835 = vmul.f32 %v1785, %v1125
    %v1836 = vmul.f32 %v1785, %v1126
    %v1837 = vmul.f32 %v1785, %v1127
    %v1838 = vmul.f32 %v1785, %v1128
    %v1839 = vmul.f32 %v1785, %v1129
    %v1840 = vmul.f32 %v1785, %v1130
    %v1841 = vmul.f32 %v1785, %v1131
    %v1842 = vmul.f32 %v1785, %v1132
    %v1843 = vmul.f32 %v1785, %v1133
    %v1844 = vmul.f32 %v1785, %v1134
    %v1845 = vmul.f32 %v1785, %v1135
    %vm1906 = vcmask 1044480
    %v1907 = vrot.slane %v1786, 3
    %v1908 = vrot.slane %v1787, 3
    %v1909 = vsel %vm1906, %v1907, %v1908
    %v1910 = vrot.slane %v1788, 3
    %v1911 = vsel %vm1906, %v1908, %v1910
    %v1912 = vrot.slane %v1789, 3
    %v1913 = vrot.slane %v1790, 3
    %v1914 = vsel %vm1906, %v1912, %v1913
    %v1915 = vrot.slane %v1791, 3
    %v1916 = vsel %vm1906, %v1913, %v1915
    %v1917 = vrot.slane %v1792, 3
    %v1918 = vrot.slane %v1793, 3
    %v1919 = vsel %vm1906, %v1917, %v1918
    %v1920 = vrot.slane %v1794, 3
    %v1921 = vsel %vm1906, %v1918, %v1920
    %v1922 = vrot.slane %v1795, 3
    %v1923 = vrot.slane %v1796, 3
    %v1924 = vsel %vm1906, %v1922, %v1923
    %v1925 = vrot.slane %v1797, 3
    %v1926 = vsel %vm1906, %v1923, %v1925
    %v1927 = vrot.slane %v1798, 3
    %v1928 = vrot.slane %v1799, 3
    %v1929 = vsel %vm1906, %v1927, %v1928
    %v1930 = vrot.slane %v1800, 3
    %v1931 = vsel %vm1906, %v1928, %v1930
    %v1932 = vrot.slane %v1801, 3
    %v1933 = vrot.slane %v1802, 3
    %v1934 = vsel %vm1906, %v1932, %v1933
    %v1935 = vrot.slane %v1803, 3
    %v1936 = vsel %vm1906, %v1933, %v1935
    %v1937 = vrot.slane %v1804, 3
    %v1938 = vrot.slane %v1805, 3
    %v1939 = vsel %vm1906, %v1937, %v1938
    %v1940 = vrot.slane %v1806, 3
    %v1941 = vsel %vm1906, %v1938, %v1940
    %v1942 = vrot.slane %v1807, 3
    %v1943 = vrot.slane %v1808, 3
    %v1944 = vsel %vm1906, %v1942, %v1943
    %v1945 = vrot.slane %v1809, 3
    %v1946 = vsel %vm1906, %v1943, %v1945
    %v1947 = vrot.slane %v1810, 3
    %v1948 = vrot.slane %v1811, 3
    %v1949 = vsel %vm1906, %v1947, %v1948
    %v1950 = vrot.slane %v1812, 3
    %v1951 = vsel %vm1906, %v1948, %v1950
    %v1952 = vrot.slane %v1813, 3
    %v1953 = vrot.slane %v1814, 3
    %v1954 = vsel %vm1906, %v1952, %v1953
    %v1955 = vrot.slane %v1815, 3
    %v1956 = vsel %vm1906, %v1953, %v1955
    %v1957 = vrot.slane %v1816, 3
    %v1958 = vrot.slane %v1817, 3
    %v1959 = vsel %vm1906, %v1957, %v1958
    %v1960 = vrot.slane %v1818, 3
    %v1961 = vsel %vm1906, %v1958, %v1960
    %v1962 = vrot.slane %v1819, 3
    %v1963 = vrot.slane %v1820, 3
    %v1964 = vsel %vm1906, %v1962, %v1963
    %v1965 = vrot.slane %v1821, 3
    %v1966 = vsel %vm1906, %v1963, %v1965
    %v1967 = vrot.slane %v1822, 3
    %v1968 = vrot.slane %v1823, 3
    %v1969 = vsel %vm1906, %v1967, %v1968
    %v1970 = vrot.slane %v1824, 3
    %v1971 = vsel %vm1906, %v1968, %v1970
    %v1972 = vrot.slane %v1825, 3
    %v1973 = vrot.slane %v1826, 3
    %v1974 = vsel %vm1906, %v1972, %v1973
    %v1975 = vrot.slane %v1827, 3
    %v1976 = vsel %vm1906, %v1973, %v1975
    %v1977 = vrot.slane %v1828, 3
    %v1978 = vrot.slane %v1829, 3
    %v1979 = vsel %vm1906, %v1977, %v1978
    %v1980 = vrot.slane %v1830, 3
    %v1981 = vsel %vm1906, %v1978, %v1980
    %v1982 = vrot.slane %v1831, 3
    %v1983 = vrot.slane %v1832, 3
    %v1984 = vsel %vm1906, %v1982, %v1983
    %v1985 = vrot.slane %v1833, 3
    %v1986 = vsel %vm1906, %v1983, %v1985
    %v1987 = vrot.slane %v1834, 3
    %v1988 = vrot.slane %v1835, 3
    %v1989 = vsel %vm1906, %v1987, %v1988
    %v1990 = vrot.slane %v1836, 3
    %v1991 = vsel %vm1906, %v1988, %v1990
    %v1992 = vrot.slane %v1837, 3
    %v1993 = vrot.slane %v1838, 3
    %v1994 = vsel %vm1906, %v1992, %v1993
    %v1995 = vrot.slane %v1839, 3
    %v1996 = vsel %vm1906, %v1993, %v1995
    %v1997 = vrot.slane %v1840, 3
    %v1998 = vrot.slane %v1841, 3
    %v1999 = vsel %vm1906, %v1997, %v1998
    %v2000 = vrot.slane %v1842, 3
    %v2001 = vsel %vm1906, %v1998, %v2000
    %v2002 = vrot.slane %v1843, 3
    %v2003 = vrot.slane %v1844, 3
    %v2004 = vsel %vm1906, %v2002, %v2003
    %v2005 = vrot.slane %v1845, 3
    %v2006 = vsel %vm1906, %v2003, %v2005
    %v2047 = vadd.f32 %v1744, %v1909
    %v2048 = vadd.f32 %v1745, %v1911
    %v2049 = vadd.f32 %v1746, %v1914
    %v2050 = vadd.f32 %v1747, %v1916
    %v2051 = vadd.f32 %v1748, %v1919
    %v2052 = vadd.f32 %v1749, %v1921
    %v2053 = vadd.f32 %v1750, %v1924
    %v2054 = vadd.f32 %v1751, %v1926
    %v2055 = vadd.f32 %v1752, %v1929
    %v2056 = vadd.f32 %v1753, %v1931
    %v2057 = vadd.f32 %v1754, %v1934
    %v2058 = vadd.f32 %v1755, %v1936
    %v2059 = vadd.f32 %v1756, %v1939
    %v2060 = vadd.f32 %v1757, %v1941
    %v2061 = vadd.f32 %v1758, %v1944
    %v2062 = vadd.f32 %v1759, %v1946
    %v2063 = vadd.f32 %v1760, %v1949
    %v2064 = vadd.f32 %v1761, %v1951
    %v2065 = vadd.f32 %v1762, %v1954
    %v2066 = vadd.f32 %v1763, %v1956
    %v2067 = vadd.f32 %v1764, %v1959
    %v2068 = vadd.f32 %v1765, %v1961
    %v2069 = vadd.f32 %v1766, %v1964
    %v2070 = vadd.f32 %v1767, %v1966
    %v2071 = vadd.f32 %v1768, %v1969
    %v2072 = vadd.f32 %v1769, %v1971
    %v2073 = vadd.f32 %v1770, %v1974
    %v2074 = vadd.f32 %v1771, %v1976
    %v2075 = vadd.f32 %v1772, %v1979
    %v2076 = vadd.f32 %v1773, %v1981
    %v2077 = vadd.f32 %v1774, %v1984
    %v2078 = vadd.f32 %v1775, %v1986
    %v2079 = vadd.f32 %v1776, %v1989
    %v2080 = vadd.f32 %v1777, %v1991
    %v2081 = vadd.f32 %v1778, %v1994
    %v2082 = vadd.f32 %v1779, %v1996
    %v2083 = vadd.f32 %v1780, %v1999
    %v2084 = vadd.f32 %v1781, %v2001
    %v2085 = vadd.f32 %v1782, %v2004
    %v2086 = vadd.f32 %v1783, %v2006
    %s2087 = sld [smem:[#allocation4 + $0x4]]
    %v2088 = vstv %s2087
    %v2089 = vmul.f32 %v2088, %v1076
    %v2090 = vmul.f32 %v2088, %v1077
    %v2091 = vmul.f32 %v2088, %v1078
    %v2092 = vmul.f32 %v2088, %v1079
    %v2093 = vmul.f32 %v2088, %v1080
    %v2094 = vmul.f32 %v2088, %v1081
    %v2095 = vmul.f32 %v2088, %v1082
    %v2096 = vmul.f32 %v2088, %v1083
    %v2097 = vmul.f32 %v2088, %v1084
    %v2098 = vmul.f32 %v2088, %v1085
    %v2099 = vmul.f32 %v2088, %v1086
    %v2100 = vmul.f32 %v2088, %v1087
    %v2101 = vmul.f32 %v2088, %v1088
    %v2102 = vmul.f32 %v2088, %v1089
    %v2103 = vmul.f32 %v2088, %v1090
    %v2104 = vmul.f32 %v2088, %v1091
    %v2105 = vmul.f32 %v2088, %v1092
    %v2106 = vmul.f32 %v2088, %v1093
    %v2107 = vmul.f32 %v2088, %v1094
    %v2108 = vmul.f32 %v2088, %v1095
    %v2109 = vmul.f32 %v2088, %v1096
    %v2110 = vmul.f32 %v2088, %v1097
    %v2111 = vmul.f32 %v2088, %v1098
    %v2112 = vmul.f32 %v2088, %v1099
    %v2113 = vmul.f32 %v2088, %v1100
    %v2114 = vmul.f32 %v2088, %v1101
    %v2115 = vmul.f32 %v2088, %v1102
    %v2116 = vmul.f32 %v2088, %v1103
    %v2117 = vmul.f32 %v2088, %v1104
    %v2118 = vmul.f32 %v2088, %v1105
    %v2119 = vmul.f32 %v2088, %v1106
    %v2120 = vmul.f32 %v2088, %v1107
    %v2121 = vmul.f32 %v2088, %v1108
    %v2122 = vmul.f32 %v2088, %v1109
    %v2123 = vmul.f32 %v2088, %v1110
    %v2124 = vmul.f32 %v2088, %v1111
    %v2125 = vmul.f32 %v2088, %v1112
    %v2126 = vmul.f32 %v2088, %v1113
    %v2127 = vmul.f32 %v2088, %v1114
    %v2128 = vmul.f32 %v2088, %v1115
    %v2129 = vmul.f32 %v2088, %v1116
    %v2130 = vmul.f32 %v2088, %v1117
    %v2131 = vmul.f32 %v2088, %v1118
    %v2132 = vmul.f32 %v2088, %v1119
    %v2133 = vmul.f32 %v2088, %v1120
    %v2134 = vmul.f32 %v2088, %v1121
    %v2135 = vmul.f32 %v2088, %v1122
    %v2136 = vmul.f32 %v2088, %v1123
    %v2137 = vmul.f32 %v2088, %v1124
    %v2138 = vmul.f32 %v2088, %v1125
    %v2139 = vmul.f32 %v2088, %v1126
    %v2140 = vmul.f32 %v2088, %v1127
    %v2141 = vmul.f32 %v2088, %v1128
    %v2142 = vmul.f32 %v2088, %v1129
    %v2143 = vmul.f32 %v2088, %v1130
    %v2144 = vmul.f32 %v2088, %v1131
    %v2145 = vmul.f32 %v2088, %v1132
    %v2146 = vmul.f32 %v2088, %v1133
    %v2147 = vmul.f32 %v2088, %v1134
    %v2148 = vmul.f32 %v2088, %v1135
    %vm2209 = vcmask 1043456
    %v2210 = vrot.slane %v2089, 4
    %v2211 = vrot.slane %v2090, 4
    %v2212 = vsel %vm2209, %v2210, %v2211
    %v2213 = vrot.slane %v2091, 4
    %v2214 = vsel %vm2209, %v2211, %v2213
    %v2215 = vrot.slane %v2092, 4
    %v2216 = vrot.slane %v2093, 4
    %v2217 = vsel %vm2209, %v2215, %v2216
    %v2218 = vrot.slane %v2094, 4
    %v2219 = vsel %vm2209, %v2216, %v2218
    %v2220 = vrot.slane %v2095, 4
    %v2221 = vrot.slane %v2096, 4
    %v2222 = vsel %vm2209, %v2220, %v2221
    %v2223 = vrot.slane %v2097, 4
    %v2224 = vsel %vm2209, %v2221, %v2223
    %v2225 = vrot.slane %v2098, 4
    %v2226 = vrot.slane %v2099, 4
    %v2227 = vsel %vm2209, %v2225, %v2226
    %v2228 = vrot.slane %v2100, 4
    %v2229 = vsel %vm2209, %v2226, %v2228
    %v2230 = vrot.slane %v2101, 4
    %v2231 = vrot.slane %v2102, 4
    %v2232 = vsel %vm2209, %v2230, %v2231
    %v2233 = vrot.slane %v2103, 4
    %v2234 = vsel %vm2209, %v2231, %v2233
    %v2235 = vrot.slane %v2104, 4
    %v2236 = vrot.slane %v2105, 4
    %v2237 = vsel %vm2209, %v2235, %v2236
    %v2238 = vrot.slane %v2106, 4
    %v2239 = vsel %vm2209, %v2236, %v2238
    %v2240 = vrot.slane %v2107, 4
    %v2241 = vrot.slane %v2108, 4
    %v2242 = vsel %vm2209, %v2240, %v2241
    %v2243 = vrot.slane %v2109, 4
    %v2244 = vsel %vm2209, %v2241, %v2243
    %v2245 = vrot.slane %v2110, 4
    %v2246 = vrot.slane %v2111, 4
    %v2247 = vsel %vm2209, %v2245, %v2246
    %v2248 = vrot.slane %v2112, 4
    %v2249 = vsel %vm2209, %v2246, %v2248
    %v2250 = vrot.slane %v2113, 4
    %v2251 = vrot.slane %v2114, 4
    %v2252 = vsel %vm2209, %v2250, %v2251
    %v2253 = vrot.slane %v2115, 4
    %v2254 = vsel %vm2209, %v2251, %v2253
    %v2255 = vrot.slane %v2116, 4
    %v2256 = vrot.slane %v2117, 4
    %v2257 = vsel %vm2209, %v2255, %v2256
    %v2258 = vrot.slane %v2118, 4
    %v2259 = vsel %vm2209, %v2256, %v2258
    %v2260 = vrot.slane %v2119, 4
    %v2261 = vrot.slane %v2120, 4
    %v2262 = vsel %vm2209, %v2260, %v2261
    %v2263 = vrot.slane %v2121, 4
    %v2264 = vsel %vm2209, %v2261, %v2263
    %v2265 = vrot.slane %v2122, 4
    %v2266 = vrot.slane %v2123, 4
    %v2267 = vsel %vm2209, %v2265, %v2266
    %v2268 = vrot.slane %v2124, 4
    %v2269 = vsel %vm2209, %v2266, %v2268
    %v2270 = vrot.slane %v2125, 4
    %v2271 = vrot.slane %v2126, 4
    %v2272 = vsel %vm2209, %v2270, %v2271
    %v2273 = vrot.slane %v2127, 4
    %v2274 = vsel %vm2209, %v2271, %v2273
    %v2275 = vrot.slane %v2128, 4
    %v2276 = vrot.slane %v2129, 4
    %v2277 = vsel %vm2209, %v2275, %v2276
    %v2278 = vrot.slane %v2130, 4
    %v2279 = vsel %vm2209, %v2276, %v2278
    %v2280 = vrot.slane %v2131, 4
    %v2281 = vrot.slane %v2132, 4
    %v2282 = vsel %vm2209, %v2280, %v2281
    %v2283 = vrot.slane %v2133, 4
    %v2284 = vsel %vm2209, %v2281, %v2283
    %v2285 = vrot.slane %v2134, 4
    %v2286 = vrot.slane %v2135, 4
    %v2287 = vsel %vm2209, %v2285, %v2286
    %v2288 = vrot.slane %v2136, 4
    %v2289 = vsel %vm2209, %v2286, %v2288
    %v2290 = vrot.slane %v2137, 4
    %v2291 = vrot.slane %v2138, 4
    %v2292 = vsel %vm2209, %v2290, %v2291
    %v2293 = vrot.slane %v2139, 4
    %v2294 = vsel %vm2209, %v2291, %v2293
    %v2295 = vrot.slane %v2140, 4
    %v2296 = vrot.slane %v2141, 4
    %v2297 = vsel %vm2209, %v2295, %v2296
    %v2298 = vrot.slane %v2142, 4
    %v2299 = vsel %vm2209, %v2296, %v2298
    %v2300 = vrot.slane %v2143, 4
    %v2301 = vrot.slane %v2144, 4
    %v2302 = vsel %vm2209, %v2300, %v2301
    %v2303 = vrot.slane %v2145, 4
    %v2304 = vsel %vm2209, %v2301, %v2303
    %v2305 = vrot.slane %v2146, 4
    %v2306 = vrot.slane %v2147, 4
    %v2307 = vsel %vm2209, %v2305, %v2306
    %v2308 = vrot.slane %v2148, 4
    %v2309 = vsel %vm2209, %v2306, %v2308
    %v2350 = vadd.f32 %v2047, %v2212
    %v2351 = vadd.f32 %v2048, %v2214
    %v2352 = vadd.f32 %v2049, %v2217
    %v2353 = vadd.f32 %v2050, %v2219
    %v2354 = vadd.f32 %v2051, %v2222
    %v2355 = vadd.f32 %v2052, %v2224
    %v2356 = vadd.f32 %v2053, %v2227
    %v2357 = vadd.f32 %v2054, %v2229
    %v2358 = vadd.f32 %v2055, %v2232
    %v2359 = vadd.f32 %v2056, %v2234
    %v2360 = vadd.f32 %v2057, %v2237
    %v2361 = vadd.f32 %v2058, %v2239
    %v2362 = vadd.f32 %v2059, %v2242
    %v2363 = vadd.f32 %v2060, %v2244
    %v2364 = vadd.f32 %v2061, %v2247
    %v2365 = vadd.f32 %v2062, %v2249
    %v2366 = vadd.f32 %v2063, %v2252
    %v2367 = vadd.f32 %v2064, %v2254
    %v2368 = vadd.f32 %v2065, %v2257
    %v2369 = vadd.f32 %v2066, %v2259
    %v2370 = vadd.f32 %v2067, %v2262
    %v2371 = vadd.f32 %v2068, %v2264
    %v2372 = vadd.f32 %v2069, %v2267
    %v2373 = vadd.f32 %v2070, %v2269
    %v2374 = vadd.f32 %v2071, %v2272
    %v2375 = vadd.f32 %v2072, %v2274
    %v2376 = vadd.f32 %v2073, %v2277
    %v2377 = vadd.f32 %v2074, %v2279
    %v2378 = vadd.f32 %v2075, %v2282
    %v2379 = vadd.f32 %v2076, %v2284
    %v2380 = vadd.f32 %v2077, %v2287
    %v2381 = vadd.f32 %v2078, %v2289
    %v2382 = vadd.f32 %v2079, %v2292
    %v2383 = vadd.f32 %v2080, %v2294
    %v2384 = vadd.f32 %v2081, %v2297
    %v2385 = vadd.f32 %v2082, %v2299
    %v2386 = vadd.f32 %v2083, %v2302
    %v2387 = vadd.f32 %v2084, %v2304
    %v2388 = vadd.f32 %v2085, %v2307
    %v2389 = vadd.f32 %v2086, %v2309
    %v2390 = vmul.f32 %v1137, %v2350
    %v2391 = vmul.f32 %v1137, %v2351
    %v2392 = vmul.f32 %v1137, %v2352
    %v2393 = vmul.f32 %v1137, %v2353
    %v2394 = vmul.f32 %v1137, %v2354
    %v2395 = vmul.f32 %v1137, %v2355
    %v2396 = vmul.f32 %v1137, %v2356
    %v2397 = vmul.f32 %v1137, %v2357
    %v2398 = vmul.f32 %v1137, %v2358
    %v2399 = vmul.f32 %v1137, %v2359
    %v2400 = vmul.f32 %v1137, %v2360
    %v2401 = vmul.f32 %v1137, %v2361
    %v2402 = vmul.f32 %v1137, %v2362
    %v2403 = vmul.f32 %v1137, %v2363
    %v2404 = vmul.f32 %v1137, %v2364
    %v2405 = vmul.f32 %v1137, %v2365
    %v2406 = vmul.f32 %v1137, %v2366
    %v2407 = vmul.f32 %v1137, %v2367
    %v2408 = vmul.f32 %v1137, %v2368
    %v2409 = vmul.f32 %v1137, %v2369
    %v2410 = vmul.f32 %v1137, %v2370
    %v2411 = vmul.f32 %v1137, %v2371
    %v2412 = vmul.f32 %v1137, %v2372
    %v2413 = vmul.f32 %v1137, %v2373
    %v2414 = vmul.f32 %v1137, %v2374
    %v2415 = vmul.f32 %v1137, %v2375
    %v2416 = vmul.f32 %v1137, %v2376
    %v2417 = vmul.f32 %v1137, %v2377
    %v2418 = vmul.f32 %v1137, %v2378
    %v2419 = vmul.f32 %v1137, %v2379
    %v2420 = vmul.f32 %v1137, %v2380
    %v2421 = vmul.f32 %v1137, %v2381
    %v2422 = vmul.f32 %v1179, %v2352
    %v2423 = vmul.f32 %v1179, %v2353
    %v2424 = vmul.f32 %v1179, %v2354
    %v2425 = vmul.f32 %v1179, %v2355
    %v2426 = vmul.f32 %v1179, %v2356
    %v2427 = vmul.f32 %v1179, %v2357
    %v2428 = vmul.f32 %v1179, %v2358
    %v2429 = vmul.f32 %v1179, %v2359
    %v2430 = vmul.f32 %v1179, %v2360
    %v2431 = vmul.f32 %v1179, %v2361
    %v2432 = vmul.f32 %v1179, %v2362
    %v2433 = vmul.f32 %v1179, %v2363
    %v2434 = vmul.f32 %v1179, %v2364
    %v2435 = vmul.f32 %v1179, %v2365
    %v2436 = vmul.f32 %v1179, %v2366
    %v2437 = vmul.f32 %v1179, %v2367
    %v2438 = vmul.f32 %v1179, %v2368
    %v2439 = vmul.f32 %v1179, %v2369
    %v2440 = vmul.f32 %v1179, %v2370
    %v2441 = vmul.f32 %v1179, %v2371
    %v2442 = vmul.f32 %v1179, %v2372
    %v2443 = vmul.f32 %v1179, %v2373
    %v2444 = vmul.f32 %v1179, %v2374
    %v2445 = vmul.f32 %v1179, %v2375
    %v2446 = vmul.f32 %v1179, %v2376
    %v2447 = vmul.f32 %v1179, %v2377
    %v2448 = vmul.f32 %v1179, %v2378
    %v2449 = vmul.f32 %v1179, %v2379
    %v2450 = vmul.f32 %v1179, %v2380
    %v2451 = vmul.f32 %v1179, %v2381
    %v2452 = vmul.f32 %v1179, %v2382
    %v2453 = vmul.f32 %v1179, %v2383
    %v2454 = vadd.f32 %v2390, %v2422
    %v2455 = vadd.f32 %v2391, %v2423
    %v2456 = vadd.f32 %v2392, %v2424
    %v2457 = vadd.f32 %v2393, %v2425
    %v2458 = vadd.f32 %v2394, %v2426
    %v2459 = vadd.f32 %v2395, %v2427
    %v2460 = vadd.f32 %v2396, %v2428
    %v2461 = vadd.f32 %v2397, %v2429
    %v2462 = vadd.f32 %v2398, %v2430
    %v2463 = vadd.f32 %v2399, %v2431
    %v2464 = vadd.f32 %v2400, %v2432
    %v2465 = vadd.f32 %v2401, %v2433
    %v2466 = vadd.f32 %v2402, %v2434
    %v2467 = vadd.f32 %v2403, %v2435
    %v2468 = vadd.f32 %v2404, %v2436
    %v2469 = vadd.f32 %v2405, %v2437
    %v2470 = vadd.f32 %v2406, %v2438
    %v2471 = vadd.f32 %v2407, %v2439
    %v2472 = vadd.f32 %v2408, %v2440
    %v2473 = vadd.f32 %v2409, %v2441
    %v2474 = vadd.f32 %v2410, %v2442
    %v2475 = vadd.f32 %v2411, %v2443
    %v2476 = vadd.f32 %v2412, %v2444
    %v2477 = vadd.f32 %v2413, %v2445
    %v2478 = vadd.f32 %v2414, %v2446
    %v2479 = vadd.f32 %v2415, %v2447
    %v2480 = vadd.f32 %v2416, %v2448
    %v2481 = vadd.f32 %v2417, %v2449
    %v2482 = vadd.f32 %v2418, %v2450
    %v2483 = vadd.f32 %v2419, %v2451
    %v2484 = vadd.f32 %v2420, %v2452
    %v2485 = vadd.f32 %v2421, %v2453
    %v2486 = vmul.f32 %v1482, %v2354
    %v2487 = vmul.f32 %v1482, %v2355
    %v2488 = vmul.f32 %v1482, %v2356
    %v2489 = vmul.f32 %v1482, %v2357
    %v2490 = vmul.f32 %v1482, %v2358
    %v2491 = vmul.f32 %v1482, %v2359
    %v2492 = vmul.f32 %v1482, %v2360
    %v2493 = vmul.f32 %v1482, %v2361
    %v2494 = vmul.f32 %v1482, %v2362
    %v2495 = vmul.f32 %v1482, %v2363
    %v2496 = vmul.f32 %v1482, %v2364
    %v2497 = vmul.f32 %v1482, %v2365
    %v2498 = vmul.f32 %v1482, %v2366
    %v2499 = vmul.f32 %v1482, %v2367
    %v2500 = vmul.f32 %v1482, %v2368
    %v2501 = vmul.f32 %v1482, %v2369
    %v2502 = vmul.f32 %v1482, %v2370
    %v2503 = vmul.f32 %v1482, %v2371
    %v2504 = vmul.f32 %v1482, %v2372
    %v2505 = vmul.f32 %v1482, %v2373
    %v2506 = vmul.f32 %v1482, %v2374
    %v2507 = vmul.f32 %v1482, %v2375
    %v2508 = vmul.f32 %v1482, %v2376
    %v2509 = vmul.f32 %v1482, %v2377
    %v2510 = vmul.f32 %v1482, %v2378
    %v2511 = vmul.f32 %v1482, %v2379
    %v2512 = vmul.f32 %v1482, %v2380
    %v2513 = vmul.f32 %v1482, %v2381
    %v2514 = vmul.f32 %v1482, %v2382
    %v2515 = vmul.f32 %v1482, %v2383
    %v2516 = vmul.f32 %v1482, %v2384
    %v2517 = vmul.f32 %v1482, %v2385
    %v2518 = vadd.f32 %v2454, %v2486
    %v2519 = vadd.f32 %v2455, %v2487
    %v2520 = vadd.f32 %v2456, %v2488
    %v2521 = vadd.f32 %v2457, %v2489
    %v2522 = vadd.f32 %v2458, %v2490
    %v2523 = vadd.f32 %v2459, %v2491
    %v2524 = vadd.f32 %v2460, %v2492
    %v2525 = vadd.f32 %v2461, %v2493
    %v2526 = vadd.f32 %v2462, %v2494
    %v2527 = vadd.f32 %v2463, %v2495
    %v2528 = vadd.f32 %v2464, %v2496
    %v2529 = vadd.f32 %v2465, %v2497
    %v2530 = vadd.f32 %v2466, %v2498
    %v2531 = vadd.f32 %v2467, %v2499
    %v2532 = vadd.f32 %v2468, %v2500
    %v2533 = vadd.f32 %v2469, %v2501
    %v2534 = vadd.f32 %v2470, %v2502
    %v2535 = vadd.f32 %v2471, %v2503
    %v2536 = vadd.f32 %v2472, %v2504
    %v2537 = vadd.f32 %v2473, %v2505
    %v2538 = vadd.f32 %v2474, %v2506
    %v2539 = vadd.f32 %v2475, %v2507
    %v2540 = vadd.f32 %v2476, %v2508
    %v2541 = vadd.f32 %v2477, %v2509
    %v2542 = vadd.f32 %v2478, %v2510
    %v2543 = vadd.f32 %v2479, %v2511
    %v2544 = vadd.f32 %v2480, %v2512
    %v2545 = vadd.f32 %v2481, %v2513
    %v2546 = vadd.f32 %v2482, %v2514
    %v2547 = vadd.f32 %v2483, %v2515
    %v2548 = vadd.f32 %v2484, %v2516
    %v2549 = vadd.f32 %v2485, %v2517
    %v2550 = vmul.f32 %v1785, %v2356
    %v2551 = vmul.f32 %v1785, %v2357
    %v2552 = vmul.f32 %v1785, %v2358
    %v2553 = vmul.f32 %v1785, %v2359
    %v2554 = vmul.f32 %v1785, %v2360
    %v2555 = vmul.f32 %v1785, %v2361
    %v2556 = vmul.f32 %v1785, %v2362
    %v2557 = vmul.f32 %v1785, %v2363
    %v2558 = vmul.f32 %v1785, %v2364
    %v2559 = vmul.f32 %v1785, %v2365
    %v2560 = vmul.f32 %v1785, %v2366
    %v2561 = vmul.f32 %v1785, %v2367
    %v2562 = vmul.f32 %v1785, %v2368
    %v2563 = vmul.f32 %v1785, %v2369
    %v2564 = vmul.f32 %v1785, %v2370
    %v2565 = vmul.f32 %v1785, %v2371
    %v2566 = vmul.f32 %v1785, %v2372
    %v2567 = vmul.f32 %v1785, %v2373
    %v2568 = vmul.f32 %v1785, %v2374
    %v2569 = vmul.f32 %v1785, %v2375
    %v2570 = vmul.f32 %v1785, %v2376
    %v2571 = vmul.f32 %v1785, %v2377
    %v2572 = vmul.f32 %v1785, %v2378
    %v2573 = vmul.f32 %v1785, %v2379
    %v2574 = vmul.f32 %v1785, %v2380
    %v2575 = vmul.f32 %v1785, %v2381
    %v2576 = vmul.f32 %v1785, %v2382
    %v2577 = vmul.f32 %v1785, %v2383
    %v2578 = vmul.f32 %v1785, %v2384
    %v2579 = vmul.f32 %v1785, %v2385
    %v2580 = vmul.f32 %v1785, %v2386
    %v2581 = vmul.f32 %v1785, %v2387
    %v2582 = vadd.f32 %v2518, %v2550
    %v2583 = vadd.f32 %v2519, %v2551
    %v2584 = vadd.f32 %v2520, %v2552
    %v2585 = vadd.f32 %v2521, %v2553
    %v2586 = vadd.f32 %v2522, %v2554
    %v2587 = vadd.f32 %v2523, %v2555
    %v2588 = vadd.f32 %v2524, %v2556
    %v2589 = vadd.f32 %v2525, %v2557
    %v2590 = vadd.f32 %v2526, %v2558
    %v2591 = vadd.f32 %v2527, %v2559
    %v2592 = vadd.f32 %v2528, %v2560
    %v2593 = vadd.f32 %v2529, %v2561
    %v2594 = vadd.f32 %v2530, %v2562
    %v2595 = vadd.f32 %v2531, %v2563
    %v2596 = vadd.f32 %v2532, %v2564
    %v2597 = vadd.f32 %v2533, %v2565
    %v2598 = vadd.f32 %v2534, %v2566
    %v2599 = vadd.f32 %v2535, %v2567
    %v2600 = vadd.f32 %v2536, %v2568
    %v2601 = vadd.f32 %v2537, %v2569
    %v2602 = vadd.f32 %v2538, %v2570
    %v2603 = vadd.f32 %v2539, %v2571
    %v2604 = vadd.f32 %v2540, %v2572
    %v2605 = vadd.f32 %v2541, %v2573
    %v2606 = vadd.f32 %v2542, %v2574
    %v2607 = vadd.f32 %v2543, %v2575
    %v2608 = vadd.f32 %v2544, %v2576
    %v2609 = vadd.f32 %v2545, %v2577
    %v2610 = vadd.f32 %v2546, %v2578
    %v2611 = vadd.f32 %v2547, %v2579
    %v2612 = vadd.f32 %v2548, %v2580
    %v2613 = vadd.f32 %v2549, %v2581
    %v2614 = vmul.f32 %v2088, %v2358
    %v2615 = vmul.f32 %v2088, %v2359
    %v2616 = vmul.f32 %v2088, %v2360
    %v2617 = vmul.f32 %v2088, %v2361
    %v2618 = vmul.f32 %v2088, %v2362
    %v2619 = vmul.f32 %v2088, %v2363
    %v2620 = vmul.f32 %v2088, %v2364
    %v2621 = vmul.f32 %v2088, %v2365
    %v2622 = vmul.f32 %v2088, %v2366
    %v2623 = vmul.f32 %v2088, %v2367
    %v2624 = vmul.f32 %v2088, %v2368
    %v2625 = vmul.f32 %v2088, %v2369
    %v2626 = vmul.f32 %v2088, %v2370
    %v2627 = vmul.f32 %v2088, %v2371
    %v2628 = vmul.f32 %v2088, %v2372
    %v2629 = vmul.f32 %v2088, %v2373
    %v2630 = vmul.f32 %v2088, %v2374
    %v2631 = vmul.f32 %v2088, %v2375
    %v2632 = vmul.f32 %v2088, %v2376
    %v2633 = vmul.f32 %v2088, %v2377
    %v2634 = vmul.f32 %v2088, %v2378
    %v2635 = vmul.f32 %v2088, %v2379
    %v2636 = vmul.f32 %v2088, %v2380
    %v2637 = vmul.f32 %v2088, %v2381
    %v2638 = vmul.f32 %v2088, %v2382
    %v2639 = vmul.f32 %v2088, %v2383
    %v2640 = vmul.f32 %v2088, %v2384
    %v2641 = vmul.f32 %v2088, %v2385
    %v2642 = vmul.f32 %v2088, %v2386
    %v2643 = vmul.f32 %v2088, %v2387
    %v2644 = vmul.f32 %v2088, %v2388
    %v2645 = vmul.f32 %v2088, %v2389
    %v2646 = vadd.f32 %v2582, %v2614
    %v2647 = vadd.f32 %v2583, %v2615
    %v2648 = vadd.f32 %v2584, %v2616
    %v2649 = vadd.f32 %v2585, %v2617
    %v2650 = vadd.f32 %v2586, %v2618
    %v2651 = vadd.f32 %v2587, %v2619
    %v2652 = vadd.f32 %v2588, %v2620
    %v2653 = vadd.f32 %v2589, %v2621
    %v2654 = vadd.f32 %v2590, %v2622
    %v2655 = vadd.f32 %v2591, %v2623
    %v2656 = vadd.f32 %v2592, %v2624
    %v2657 = vadd.f32 %v2593, %v2625
    %v2658 = vadd.f32 %v2594, %v2626
    %v2659 = vadd.f32 %v2595, %v2627
    %v2660 = vadd.f32 %v2596, %v2628
    %v2661 = vadd.f32 %v2597, %v2629
    %v2662 = vadd.f32 %v2598, %v2630
    %v2663 = vadd.f32 %v2599, %v2631
    %v2664 = vadd.f32 %v2600, %v2632
    %v2665 = vadd.f32 %v2601, %v2633
    %v2666 = vadd.f32 %v2602, %v2634
    %v2667 = vadd.f32 %v2603, %v2635
    %v2668 = vadd.f32 %v2604, %v2636
    %v2669 = vadd.f32 %v2605, %v2637
    %v2670 = vadd.f32 %v2606, %v2638
    %v2671 = vadd.f32 %v2607, %v2639
    %v2672 = vadd.f32 %v2608, %v2640
    %v2673 = vadd.f32 %v2609, %v2641
    %v2674 = vadd.f32 %v2610, %v2642
    %v2675 = vadd.f32 %v2611, %v2643
    %v2676 = vadd.f32 %v2612, %v2644
    %v2677 = vadd.f32 %v2613, %v2645
    %s2678 = scalar_lea.vmem [#allocation2], 48
    %2679 = vst [vmem:[%s2678 + $0x2] sm:$0xff] %v2646
    %2680 = vst [vmem:[%s2678 + $0xa] sm:$0xff] %v2647
    %2681 = vst [vmem:[%s2678 + $0x1a] sm:$0xff] %v2648
    %2682 = vst [vmem:[%s2678 + $0x22] sm:$0xff] %v2649
    %2683 = vst [vmem:[%s2678 + $0x32] sm:$0xff] %v2650
    %2684 = vst [vmem:[%s2678 + $0x3a] sm:$0xff] %v2651
    %2685 = vst [vmem:[%s2678 + $0x4a] sm:$0xff] %v2652
    %2686 = vst [vmem:[%s2678 + $0x52] sm:$0xff] %v2653
    %2687 = vst [vmem:[%s2678 + $0x62] sm:$0xff] %v2654
    %2688 = vst [vmem:[%s2678 + $0x6a] sm:$0xff] %v2655
    %2689 = vst [vmem:[%s2678 + $0x7a] sm:$0xff] %v2656
    %2690 = vst [vmem:[%s2678 + $0x82] sm:$0xff] %v2657
    %2691 = vst [vmem:[%s2678 + $0x92] sm:$0xff] %v2658
    %2692 = vst [vmem:[%s2678 + $0x9a] sm:$0xff] %v2659
    %2693 = vst [vmem:[%s2678 + $0xaa] sm:$0xff] %v2660
    %2694 = vst [vmem:[%s2678 + $0xb2] sm:$0xff] %v2661
    %2695 = vst [vmem:[%s2678 + $0xc2] sm:$0xff] %v2662
    %2696 = vst [vmem:[%s2678 + $0xca] sm:$0xff] %v2663
    %2697 = vst [vmem:[%s2678 + $0xda] sm:$0xff] %v2664
    %2698 = vst [vmem:[%s2678 + $0xe2] sm:$0xff] %v2665
    %2699 = vst [vmem:[%s2678 + $0xf2] sm:$0xff] %v2666
    %2700 = vst [vmem:[%s2678 + $0xfa] sm:$0xff] %v2667
    %2701 = vst [vmem:[%s2678 + $0x10a] sm:$0xff] %v2668
    %2702 = vst [vmem:[%s2678 + $0x112] sm:$0xff] %v2669
    %2703 = vst [vmem:[%s2678 + $0x122] sm:$0xff] %v2670
    %2704 = vst [vmem:[%s2678 + $0x12a] sm:$0xff] %v2671
    %2705 = vst [vmem:[%s2678 + $0x13a] sm:$0xff] %v2672
    %2706 = vst [vmem:[%s2678 + $0x142] sm:$0xff] %v2673
    %2707 = vst [vmem:[%s2678 + $0x152] sm:$0xff] %v2674
    %2708 = vst [vmem:[%s2678 + $0x15a] sm:$0xff] %v2675
    %2709 = vst [vmem:[%s2678 + $0x16a] sm:$0xff] %v2676
    %2710 = vst [vmem:[%s2678 + $0x172] sm:$0xff] %v2677
    %s2711 = sld [smem:[#allocation6]]
    %v2712 = vld [vmem:[#allocation2] sm:$0xff]
    %v2713 = vld [vmem:[#allocation2 + $0x8] sm:$0xff]
    %v2714 = vld [vmem:[#allocation2 + $0x18] sm:$0xff]
    %v2715 = vld [vmem:[#allocation2 + $0x20] sm:$0xff]
    %v2716 = vld [vmem:[#allocation2 + $0x30] sm:$0xff]
    %v2717 = vld [vmem:[#allocation2 + $0x38] sm:$0xff]
    %v2718 = vld [vmem:[#allocation2 + $0x48] sm:$0xff]
    %v2719 = vld [vmem:[#allocation2 + $0x50] sm:$0xff]
    %v2720 = vld [vmem:[#allocation2 + $0x60] sm:$0xff]
    %v2721 = vld [vmem:[#allocation2 + $0x68] sm:$0xff]
    %v2722 = vld [vmem:[#allocation2 + $0x78] sm:$0xff]
    %v2723 = vld [vmem:[#allocation2 + $0x80] sm:$0xff]
    %v2724 = vld [vmem:[#allocation2 + $0x90] sm:$0xff]
    %v2725 = vld [vmem:[#allocation2 + $0x98] sm:$0xff]
    %v2726 = vld [vmem:[#allocation2 + $0xa8] sm:$0xff]
    %v2727 = vld [vmem:[#allocation2 + $0xb0] sm:$0xff]
    %v2728 = vld [vmem:[#allocation2 + $0xc0] sm:$0xff]
    %v2729 = vld [vmem:[#allocation2 + $0xc8] sm:$0xff]
    %v2730 = vld [vmem:[#allocation2 + $0xd8] sm:$0xff]
    %v2731 = vld [vmem:[#allocation2 + $0xe0] sm:$0xff]
    %v2732 = vld [vmem:[#allocation2 + $0xf0] sm:$0xff]
    %v2733 = vld [vmem:[#allocation2 + $0xf8] sm:$0xff]
    %v2734 = vld [vmem:[#allocation2 + $0x108] sm:$0xff]
    %v2735 = vld [vmem:[#allocation2 + $0x110] sm:$0xff]
    %v2736 = vld [vmem:[#allocation2 + $0x120] sm:$0xff]
    %v2737 = vld [vmem:[#allocation2 + $0x128] sm:$0xff]
    %v2738 = vld [vmem:[#allocation2 + $0x138] sm:$0xff]
    %v2739 = vld [vmem:[#allocation2 + $0x140] sm:$0xff]
    %v2740 = vld [vmem:[#allocation2 + $0x150] sm:$0xff]
    %v2741 = vld [vmem:[#allocation2 + $0x158] sm:$0xff]
    %v2742 = vld [vmem:[#allocation2 + $0x168] sm:$0xff]
    %v2743 = vld [vmem:[#allocation2 + $0x170] sm:$0xff]
    %v2744 = vstv %s2711
    %v2745 = vmul.f32 %v2744, %v2712
    %v2746 = vmul.f32 %v2744, %v2713
    %v2747 = vmul.f32 %v2744, %v2714
    %v2748 = vmul.f32 %v2744, %v2715
    %v2749 = vmul.f32 %v2744, %v2716
    %v2750 = vmul.f32 %v2744, %v2717
    %v2751 = vmul.f32 %v2744, %v2718
    %v2752 = vmul.f32 %v2744, %v2719
    %v2753 = vmul.f32 %v2744, %v2720
    %v2754 = vmul.f32 %v2744, %v2721
    %v2755 = vmul.f32 %v2744, %v2722
    %v2756 = vmul.f32 %v2744, %v2723
    %v2757 = vmul.f32 %v2744, %v2724
    %v2758 = vmul.f32 %v2744, %v2725
    %v2759 = vmul.f32 %v2744, %v2726
    %v2760 = vmul.f32 %v2744, %v2727
    %v2761 = vmul.f32 %v2744, %v2728
    %v2762 = vmul.f32 %v2744, %v2729
    %v2763 = vmul.f32 %v2744, %v2730
    %v2764 = vmul.f32 %v2744, %v2731
    %v2765 = vmul.f32 %v2744, %v2732
    %v2766 = vmul.f32 %v2744, %v2733
    %v2767 = vmul.f32 %v2744, %v2734
    %v2768 = vmul.f32 %v2744, %v2735
    %v2769 = vmul.f32 %v2744, %v2736
    %v2770 = vmul.f32 %v2744, %v2737
    %v2771 = vmul.f32 %v2744, %v2738
    %v2772 = vmul.f32 %v2744, %v2739
    %v2773 = vmul.f32 %v2744, %v2740
    %v2774 = vmul.f32 %v2744, %v2741
    %v2775 = vmul.f32 %v2744, %v2742
    %v2776 = vmul.f32 %v2744, %v2743
    %s2777 = sld [smem:[#allocation6 + $0x1]]
    %v2778 = vld [vmem:[#allocation2 + $0x1] sm:$0xff]
    %v2779 = vld [vmem:[#allocation2 + $0x9] sm:$0xff]
    %v2780 = vld [vmem:[#allocation2 + $0x19] sm:$0xff]
    %v2781 = vld [vmem:[#allocation2 + $0x21] sm:$0xff]
    %v2782 = vld [vmem:[#allocation2 + $0x31] sm:$0xff]
    %v2783 = vld [vmem:[#allocation2 + $0x39] sm:$0xff]
    %v2784 = vld [vmem:[#allocation2 + $0x49] sm:$0xff]
    %v2785 = vld [vmem:[#allocation2 + $0x51] sm:$0xff]
    %v2786 = vld [vmem:[#allocation2 + $0x61] sm:$0xff]
    %v2787 = vld [vmem:[#allocation2 + $0x69] sm:$0xff]
    %v2788 = vld [vmem:[#allocation2 + $0x79] sm:$0xff]
    %v2789 = vld [vmem:[#allocation2 + $0x81] sm:$0xff]
    %v2790 = vld [vmem:[#allocation2 + $0x91] sm:$0xff]
    %v2791 = vld [vmem:[#allocation2 + $0x99] sm:$0xff]
    %v2792 = vld [vmem:[#allocation2 + $0xa9] sm:$0xff]
    %v2793 = vld [vmem:[#allocation2 + $0xb1] sm:$0xff]
    %v2794 = vld [vmem:[#allocation2 + $0xc1] sm:$0xff]
    %v2795 = vld [vmem:[#allocation2 + $0xc9] sm:$0xff]
    %v2796 = vld [vmem:[#allocation2 + $0xd9] sm:$0xff]
    %v2797 = vld [vmem:[#allocation2 + $0xe1] sm:$0xff]
    %v2798 = vld [vmem:[#allocation2 + $0xf1] sm:$0xff]
    %v2799 = vld [vmem:[#allocation2 + $0xf9] sm:$0xff]
    %v2800 = vld [vmem:[#allocation2 + $0x109] sm:$0xff]
    %v2801 = vld [vmem:[#allocation2 + $0x111] sm:$0xff]
    %v2802 = vld [vmem:[#allocation2 + $0x121] sm:$0xff]
    %v2803 = vld [vmem:[#allocation2 + $0x129] sm:$0xff]
    %v2804 = vld [vmem:[#allocation2 + $0x139] sm:$0xff]
    %v2805 = vld [vmem:[#allocation2 + $0x141] sm:$0xff]
    %v2806 = vld [vmem:[#allocation2 + $0x151] sm:$0xff]
    %v2807 = vld [vmem:[#allocation2 + $0x159] sm:$0xff]
    %v2808 = vld [vmem:[#allocation2 + $0x169] sm:$0xff]
    %v2809 = vld [vmem:[#allocation2 + $0x171] sm:$0xff]
    %v2810 = vstv %s2777
    %v2811 = vmul.f32 %v2810, %v2778
    %v2812 = vmul.f32 %v2810, %v2779
    %v2813 = vmul.f32 %v2810, %v2780
    %v2814 = vmul.f32 %v2810, %v2781
    %v2815 = vmul.f32 %v2810, %v2782
    %v2816 = vmul.f32 %v2810, %v2783
    %v2817 = vmul.f32 %v2810, %v2784
    %v2818 = vmul.f32 %v2810, %v2785
    %v2819 = vmul.f32 %v2810, %v2786
    %v2820 = vmul.f32 %v2810, %v2787
    %v2821 = vmul.f32 %v2810, %v2788
    %v2822 = vmul.f32 %v2810, %v2789
    %v2823 = vmul.f32 %v2810, %v2790
    %v2824 = vmul.f32 %v2810, %v2791
    %v2825 = vmul.f32 %v2810, %v2792
    %v2826 = vmul.f32 %v2810, %v2793
    %v2827 = vmul.f32 %v2810, %v2794
    %v2828 = vmul.f32 %v2810, %v2795
    %v2829 = vmul.f32 %v2810, %v2796
    %v2830 = vmul.f32 %v2810, %v2797
    %v2831 = vmul.f32 %v2810, %v2798
    %v2832 = vmul.f32 %v2810, %v2799
    %v2833 = vmul.f32 %v2810, %v2800
    %v2834 = vmul.f32 %v2810, %v2801
    %v2835 = vmul.f32 %v2810, %v2802
    %v2836 = vmul.f32 %v2810, %v2803
    %v2837 = vmul.f32 %v2810, %v2804
    %v2838 = vmul.f32 %v2810, %v2805
    %v2839 = vmul.f32 %v2810, %v2806
    %v2840 = vmul.f32 %v2810, %v2807
    %v2841 = vmul.f32 %v2810, %v2808
    %v2842 = vmul.f32 %v2810, %v2809
    %v2843 = vadd.f32 %v2745, %v2811
    %v2844 = vadd.f32 %v2746, %v2812
    %v2845 = vadd.f32 %v2747, %v2813
    %v2846 = vadd.f32 %v2748, %v2814
    %v2847 = vadd.f32 %v2749, %v2815
    %v2848 = vadd.f32 %v2750, %v2816
    %v2849 = vadd.f32 %v2751, %v2817
    %v2850 = vadd.f32 %v2752, %v2818
    %v2851 = vadd.f32 %v2753, %v2819
    %v2852 = vadd.f32 %v2754, %v2820
    %v2853 = vadd.f32 %v2755, %v2821
    %v2854 = vadd.f32 %v2756, %v2822
    %v2855 = vadd.f32 %v2757, %v2823
    %v2856 = vadd.f32 %v2758, %v2824
    %v2857 = vadd.f32 %v2759, %v2825
    %v2858 = vadd.f32 %v2760, %v2826
    %v2859 = vadd.f32 %v2761, %v2827
    %v2860 = vadd.f32 %v2762, %v2828
    %v2861 = vadd.f32 %v2763, %v2829
    %v2862 = vadd.f32 %v2764, %v2830
    %v2863 = vadd.f32 %v2765, %v2831
    %v2864 = vadd.f32 %v2766, %v2832
    %v2865 = vadd.f32 %v2767, %v2833
    %v2866 = vadd.f32 %v2768, %v2834
    %v2867 = vadd.f32 %v2769, %v2835
    %v2868 = vadd.f32 %v2770, %v2836
    %v2869 = vadd.f32 %v2771, %v2837
    %v2870 = vadd.f32 %v2772, %v2838
    %v2871 = vadd.f32 %v2773, %v2839
    %v2872 = vadd.f32 %v2774, %v2840
    %v2873 = vadd.f32 %v2775, %v2841
    %v2874 = vadd.f32 %v2776, %v2842
    %s2875 = sld [smem:[#allocation6 + $0x2]]
    %v2876 = vld [vmem:[#allocation2 + $0x2] sm:$0xff]
    %v2877 = vld [vmem:[#allocation2 + $0xa] sm:$0xff]
    %v2878 = vld [vmem:[#allocation2 + $0x1a] sm:$0xff]
    %v2879 = vld [vmem:[#allocation2 + $0x22] sm:$0xff]
    %v2880 = vld [vmem:[#allocation2 + $0x32] sm:$0xff]
    %v2881 = vld [vmem:[#allocation2 + $0x3a] sm:$0xff]
    %v2882 = vld [vmem:[#allocation2 + $0x4a] sm:$0xff]
    %v2883 = vld [vmem:[#allocation2 + $0x52] sm:$0xff]
    %v2884 = vld [vmem:[#allocation2 + $0x62] sm:$0xff]
    %v2885 = vld [vmem:[#allocation2 + $0x6a] sm:$0xff]
    %v2886 = vld [vmem:[#allocation2 + $0x7a] sm:$0xff]
    %v2887 = vld [vmem:[#allocation2 + $0x82] sm:$0xff]
    %v2888 = vld [vmem:[#allocation2 + $0x92] sm:$0xff]
    %v2889 = vld [vmem:[#allocation2 + $0x9a] sm:$0xff]
    %v2890 = vld [vmem:[#allocation2 + $0xaa] sm:$0xff]
    %v2891 = vld [vmem:[#allocation2 + $0xb2] sm:$0xff]
    %v2892 = vld [vmem:[#allocation2 + $0xc2] sm:$0xff]
    %v2893 = vld [vmem:[#allocation2 + $0xca] sm:$0xff]
    %v2894 = vld [vmem:[#allocation2 + $0xda] sm:$0xff]
    %v2895 = vld [vmem:[#allocation2 + $0xe2] sm:$0xff]
    %v2896 = vld [vmem:[#allocation2 + $0xf2] sm:$0xff]
    %v2897 = vld [vmem:[#allocation2 + $0xfa] sm:$0xff]
    %v2898 = vld [vmem:[#allocation2 + $0x10a] sm:$0xff]
    %v2899 = vld [vmem:[#allocation2 + $0x112] sm:$0xff]
    %v2900 = vld [vmem:[#allocation2 + $0x122] sm:$0xff]
    %v2901 = vld [vmem:[#allocation2 + $0x12a] sm:$0xff]
    %v2902 = vld [vmem:[#allocation2 + $0x13a] sm:$0xff]
    %v2903 = vld [vmem:[#allocation2 + $0x142] sm:$0xff]
    %v2904 = vld [vmem:[#allocation2 + $0x152] sm:$0xff]
    %v2905 = vld [vmem:[#allocation2 + $0x15a] sm:$0xff]
    %v2906 = vld [vmem:[#allocation2 + $0x16a] sm:$0xff]
    %v2907 = vld [vmem:[#allocation2 + $0x172] sm:$0xff]
    %v2908 = vstv %s2875
    %v2909 = vmul.f32 %v2908, %v2876
    %v2910 = vmul.f32 %v2908, %v2877
    %v2911 = vmul.f32 %v2908, %v2878
    %v2912 = vmul.f32 %v2908, %v2879
    %v2913 = vmul.f32 %v2908, %v2880
    %v2914 = vmul.f32 %v2908, %v2881
    %v2915 = vmul.f32 %v2908, %v2882
    %v2916 = vmul.f32 %v2908, %v2883
    %v2917 = vmul.f32 %v2908, %v2884
    %v2918 = vmul.f32 %v2908, %v2885
    %v2919 = vmul.f32 %v2908, %v2886
    %v2920 = vmul.f32 %v2908, %v2887
    %v2921 = vmul.f32 %v2908, %v2888
    %v2922 = vmul.f32 %v2908, %v2889
    %v2923 = vmul.f32 %v2908, %v2890
    %v2924 = vmul.f32 %v2908, %v2891
    %v2925 = vmul.f32 %v2908, %v2892
    %v2926 = vmul.f32 %v2908, %v2893
    %v2927 = vmul.f32 %v2908, %v2894
    %v2928 = vmul.f32 %v2908, %v2895
    %v2929 = vmul.f32 %v2908, %v2896
    %v2930 = vmul.f32 %v2908, %v2897
    %v2931 = vmul.f32 %v2908, %v2898
    %v2932 = vmul.f32 %v2908, %v2899
    %v2933 = vmul.f32 %v2908, %v2900
    %v2934 = vmul.f32 %v2908, %v2901
    %v2935 = vmul.f32 %v2908, %v2902
    %v2936 = vmul.f32 %v2908, %v2903
    %v2937 = vmul.f32 %v2908, %v2904
    %v2938 = vmul.f32 %v2908, %v2905
    %v2939 = vmul.f32 %v2908, %v2906
    %v2940 = vmul.f32 %v2908, %v2907
    %v2941 = vadd.f32 %v2843, %v2909
    %v2942 = vadd.f32 %v2844, %v2910
    %v2943 = vadd.f32 %v2845, %v2911
    %v2944 = vadd.f32 %v2846, %v2912
    %v2945 = vadd.f32 %v2847, %v2913
    %v2946 = vadd.f32 %v2848, %v2914
    %v2947 = vadd.f32 %v2849, %v2915
    %v2948 = vadd.f32 %v2850, %v2916
    %v2949 = vadd.f32 %v2851, %v2917
    %v2950 = vadd.f32 %v2852, %v2918
    %v2951 = vadd.f32 %v2853, %v2919
    %v2952 = vadd.f32 %v2854, %v2920
    %v2953 = vadd.f32 %v2855, %v2921
    %v2954 = vadd.f32 %v2856, %v2922
    %v2955 = vadd.f32 %v2857, %v2923
    %v2956 = vadd.f32 %v2858, %v2924
    %v2957 = vadd.f32 %v2859, %v2925
    %v2958 = vadd.f32 %v2860, %v2926
    %v2959 = vadd.f32 %v2861, %v2927
    %v2960 = vadd.f32 %v2862, %v2928
    %v2961 = vadd.f32 %v2863, %v2929
    %v2962 = vadd.f32 %v2864, %v2930
    %v2963 = vadd.f32 %v2865, %v2931
    %v2964 = vadd.f32 %v2866, %v2932
    %v2965 = vadd.f32 %v2867, %v2933
    %v2966 = vadd.f32 %v2868, %v2934
    %v2967 = vadd.f32 %v2869, %v2935
    %v2968 = vadd.f32 %v2870, %v2936
    %v2969 = vadd.f32 %v2871, %v2937
    %v2970 = vadd.f32 %v2872, %v2938
    %v2971 = vadd.f32 %v2873, %v2939
    %v2972 = vadd.f32 %v2874, %v2940
    %s2973 = sld [smem:[#allocation6 + $0x3]]
    %v2974 = vld [vmem:[#allocation2 + $0x3] sm:$0xff]
    %v2975 = vld [vmem:[#allocation2 + $0xb] sm:$0xff]
    %v2976 = vld [vmem:[#allocation2 + $0x1b] sm:$0xff]
    %v2977 = vld [vmem:[#allocation2 + $0x23] sm:$0xff]
    %v2978 = vld [vmem:[#allocation2 + $0x33] sm:$0xff]
    %v2979 = vld [vmem:[#allocation2 + $0x3b] sm:$0xff]
    %v2980 = vld [vmem:[#allocation2 + $0x4b] sm:$0xff]
    %v2981 = vld [vmem:[#allocation2 + $0x53] sm:$0xff]
    %v2982 = vld [vmem:[#allocation2 + $0x63] sm:$0xff]
    %v2983 = vld [vmem:[#allocation2 + $0x6b] sm:$0xff]
    %v2984 = vld [vmem:[#allocation2 + $0x7b] sm:$0xff]
    %v2985 = vld [vmem:[#allocation2 + $0x83] sm:$0xff]
    %v2986 = vld [vmem:[#allocation2 + $0x93] sm:$0xff]
    %v2987 = vld [vmem:[#allocation2 + $0x9b] sm:$0xff]
    %v2988 = vld [vmem:[#allocation2 + $0xab] sm:$0xff]
    %v2989 = vld [vmem:[#allocation2 + $0xb3] sm:$0xff]
    %v2990 = vld [vmem:[#allocation2 + $0xc3] sm:$0xff]
    %v2991 = vld [vmem:[#allocation2 + $0xcb] sm:$0xff]
    %v2992 = vld [vmem:[#allocation2 + $0xdb] sm:$0xff]
    %v2993 = vld [vmem:[#allocation2 + $0xe3] sm:$0xff]
    %v2994 = vld [vmem:[#allocation2 + $0xf3] sm:$0xff]
    %v2995 = vld [vmem:[#allocation2 + $0xfb] sm:$0xff]
    %v2996 = vld [vmem:[#allocation2 + $0x10b] sm:$0xff]
    %v2997 = vld [vmem:[#allocation2 + $0x113] sm:$0xff]
    %v2998 = vld [vmem:[#allocation2 + $0x123] sm:$0xff]
    %v2999 = vld [vmem:[#allocation2 + $0x12b] sm:$0xff]
    %v3000 = vld [vmem:[#allocation2 + $0x13b] sm:$0xff]
    %v3001 = vld [vmem:[#allocation2 + $0x143] sm:$0xff]
    %v3002 = vld [vmem:[#allocation2 + $0x153] sm:$0xff]
    %v3003 = vld [vmem:[#allocation2 + $0x15b] sm:$0xff]
    %v3004 = vld [vmem:[#allocation2 + $0x16b] sm:$0xff]
    %v3005 = vld [vmem:[#allocation2 + $0x173] sm:$0xff]
    %v3006 = vstv %s2973
    %v3007 = vmul.f32 %v3006, %v2974
    %v3008 = vmul.f32 %v3006, %v2975
    %v3009 = vmul.f32 %v3006, %v2976
    %v3010 = vmul.f32 %v3006, %v2977
    %v3011 = vmul.f32 %v3006, %v2978
    %v3012 = vmul.f32 %v3006, %v2979
    %v3013 = vmul.f32 %v3006, %v2980
    %v3014 = vmul.f32 %v3006, %v2981
    %v3015 = vmul.f32 %v3006, %v2982
    %v3016 = vmul.f32 %v3006, %v2983
    %v3017 = vmul.f32 %v3006, %v2984
    %v3018 = vmul.f32 %v3006, %v2985
    %v3019 = vmul.f32 %v3006, %v2986
    %v3020 = vmul.f32 %v3006, %v2987
    %v3021 = vmul.f32 %v3006, %v2988
    %v3022 = vmul.f32 %v3006, %v2989
    %v3023 = vmul.f32 %v3006, %v2990
    %v3024 = vmul.f32 %v3006, %v2991
    %v3025 = vmul.f32 %v3006, %v2992
    %v3026 = vmul.f32 %v3006, %v2993
    %v3027 = vmul.f32 %v3006, %v2994
    %v3028 = vmul.f32 %v3006, %v2995
    %v3029 = vmul.f32 %v3006, %v2996
    %v3030 = vmul.f32 %v3006, %v2997
    %v3031 = vmul.f32 %v3006, %v2998
    %v3032 = vmul.f32 %v3006, %v2999
    %v3033 = vmul.f32 %v3006, %v3000
    %v3034 = vmul.f32 %v3006, %v3001
    %v3035 = vmul.f32 %v3006, %v3002
    %v3036 = vmul.f32 %v3006, %v3003
    %v3037 = vmul.f32 %v3006, %v3004
    %v3038 = vmul.f32 %v3006, %v3005
    %v3039 = vadd.f32 %v2941, %v3007
    %v3040 = vadd.f32 %v2942, %v3008
    %v3041 = vadd.f32 %v2943, %v3009
    %v3042 = vadd.f32 %v2944, %v3010
    %v3043 = vadd.f32 %v2945, %v3011
    %v3044 = vadd.f32 %v2946, %v3012
    %v3045 = vadd.f32 %v2947, %v3013
    %v3046 = vadd.f32 %v2948, %v3014
    %v3047 = vadd.f32 %v2949, %v3015
    %v3048 = vadd.f32 %v2950, %v3016
    %v3049 = vadd.f32 %v2951, %v3017
    %v3050 = vadd.f32 %v2952, %v3018
    %v3051 = vadd.f32 %v2953, %v3019
    %v3052 = vadd.f32 %v2954, %v3020
    %v3053 = vadd.f32 %v2955, %v3021
    %v3054 = vadd.f32 %v2956, %v3022
    %v3055 = vadd.f32 %v2957, %v3023
    %v3056 = vadd.f32 %v2958, %v3024
    %v3057 = vadd.f32 %v2959, %v3025
    %v3058 = vadd.f32 %v2960, %v3026
    %v3059 = vadd.f32 %v2961, %v3027
    %v3060 = vadd.f32 %v2962, %v3028
    %v3061 = vadd.f32 %v2963, %v3029
    %v3062 = vadd.f32 %v2964, %v3030
    %v3063 = vadd.f32 %v2965, %v3031
    %v3064 = vadd.f32 %v2966, %v3032
    %v3065 = vadd.f32 %v2967, %v3033
    %v3066 = vadd.f32 %v2968, %v3034
    %v3067 = vadd.f32 %v2969, %v3035
    %v3068 = vadd.f32 %v2970, %v3036
    %v3069 = vadd.f32 %v2971, %v3037
    %v3070 = vadd.f32 %v2972, %v3038
    %s3071 = sld [smem:[#allocation6 + $0x4]]
    %v3072 = vld [vmem:[#allocation2 + $0x4] sm:$0xff]
    %v3073 = vld [vmem:[#allocation2 + $0xc] sm:$0xff]
    %v3074 = vld [vmem:[#allocation2 + $0x1c] sm:$0xff]
    %v3075 = vld [vmem:[#allocation2 + $0x24] sm:$0xff]
    %v3076 = vld [vmem:[#allocation2 + $0x34] sm:$0xff]
    %v3077 = vld [vmem:[#allocation2 + $0x3c] sm:$0xff]
    %v3078 = vld [vmem:[#allocation2 + $0x4c] sm:$0xff]
    %v3079 = vld [vmem:[#allocation2 + $0x54] sm:$0xff]
    %v3080 = vld [vmem:[#allocation2 + $0x64] sm:$0xff]
    %v3081 = vld [vmem:[#allocation2 + $0x6c] sm:$0xff]
    %v3082 = vld [vmem:[#allocation2 + $0x7c] sm:$0xff]
    %v3083 = vld [vmem:[#allocation2 + $0x84] sm:$0xff]
    %v3084 = vld [vmem:[#allocation2 + $0x94] sm:$0xff]
    %v3085 = vld [vmem:[#allocation2 + $0x9c] sm:$0xff]
    %v3086 = vld [vmem:[#allocation2 + $0xac] sm:$0xff]
    %v3087 = vld [vmem:[#allocation2 + $0xb4] sm:$0xff]
    %v3088 = vld [vmem:[#allocation2 + $0xc4] sm:$0xff]
    %v3089 = vld [vmem:[#allocation2 + $0xcc] sm:$0xff]
    %v3090 = vld [vmem:[#allocation2 + $0xdc] sm:$0xff]
    %v3091 = vld [vmem:[#allocation2 + $0xe4] sm:$0xff]
    %v3092 = vld [vmem:[#allocation2 + $0xf4] sm:$0xff]
    %v3093 = vld [vmem:[#allocation2 + $0xfc] sm:$0xff]
    %v3094 = vld [vmem:[#allocation2 + $0x10c] sm:$0xff]
    %v3095 = vld [vmem:[#allocation2 + $0x114] sm:$0xff]
    %v3096 = vld [vmem:[#allocation2 + $0x124] sm:$0xff]
    %v3097 = vld [vmem:[#allocation2 + $0x12c] sm:$0xff]
    %v3098 = vld [vmem:[#allocation2 + $0x13c] sm:$0xff]
    %v3099 = vld [vmem:[#allocation2 + $0x144] sm:$0xff]
    %v3100 = vld [vmem:[#allocation2 + $0x154] sm:$0xff]
    %v3101 = vld [vmem:[#allocation2 + $0x15c] sm:$0xff]
    %v3102 = vld [vmem:[#allocation2 + $0x16c] sm:$0xff]
    %v3103 = vld [vmem:[#allocation2 + $0x174] sm:$0xff]
    %v3104 = vstv %s3071
    %v3105 = vmul.f32 %v3104, %v3072
    %v3106 = vmul.f32 %v3104, %v3073
    %v3107 = vmul.f32 %v3104, %v3074
    %v3108 = vmul.f32 %v3104, %v3075
    %v3109 = vmul.f32 %v3104, %v3076
    %v3110 = vmul.f32 %v3104, %v3077
    %v3111 = vmul.f32 %v3104, %v3078
    %v3112 = vmul.f32 %v3104, %v3079
    %v3113 = vmul.f32 %v3104, %v3080
    %v3114 = vmul.f32 %v3104, %v3081
    %v3115 = vmul.f32 %v3104, %v3082
    %v3116 = vmul.f32 %v3104, %v3083
    %v3117 = vmul.f32 %v3104, %v3084
    %v3118 = vmul.f32 %v3104, %v3085
    %v3119 = vmul.f32 %v3104, %v3086
    %v3120 = vmul.f32 %v3104, %v3087
    %v3121 = vmul.f32 %v3104, %v3088
    %v3122 = vmul.f32 %v3104, %v3089
    %v3123 = vmul.f32 %v3104, %v3090
    %v3124 = vmul.f32 %v3104, %v3091
    %v3125 = vmul.f32 %v3104, %v3092
    %v3126 = vmul.f32 %v3104, %v3093
    %v3127 = vmul.f32 %v3104, %v3094
    %v3128 = vmul.f32 %v3104, %v3095
    %v3129 = vmul.f32 %v3104, %v3096
    %v3130 = vmul.f32 %v3104, %v3097
    %v3131 = vmul.f32 %v3104, %v3098
    %v3132 = vmul.f32 %v3104, %v3099
    %v3133 = vmul.f32 %v3104, %v3100
    %v3134 = vmul.f32 %v3104, %v3101
    %v3135 = vmul.f32 %v3104, %v3102
    %v3136 = vmul.f32 %v3104, %v3103
    %v3137 = vadd.f32 %v3039, %v3105
    %v3138 = vadd.f32 %v3040, %v3106
    %v3139 = vadd.f32 %v3041, %v3107
    %v3140 = vadd.f32 %v3042, %v3108
    %v3141 = vadd.f32 %v3043, %v3109
    %v3142 = vadd.f32 %v3044, %v3110
    %v3143 = vadd.f32 %v3045, %v3111
    %v3144 = vadd.f32 %v3046, %v3112
    %v3145 = vadd.f32 %v3047, %v3113
    %v3146 = vadd.f32 %v3048, %v3114
    %v3147 = vadd.f32 %v3049, %v3115
    %v3148 = vadd.f32 %v3050, %v3116
    %v3149 = vadd.f32 %v3051, %v3117
    %v3150 = vadd.f32 %v3052, %v3118
    %v3151 = vadd.f32 %v3053, %v3119
    %v3152 = vadd.f32 %v3054, %v3120
    %v3153 = vadd.f32 %v3055, %v3121
    %v3154 = vadd.f32 %v3056, %v3122
    %v3155 = vadd.f32 %v3057, %v3123
    %v3156 = vadd.f32 %v3058, %v3124
    %v3157 = vadd.f32 %v3059, %v3125
    %v3158 = vadd.f32 %v3060, %v3126
    %v3159 = vadd.f32 %v3061, %v3127
    %v3160 = vadd.f32 %v3062, %v3128
    %v3161 = vadd.f32 %v3063, %v3129
    %v3162 = vadd.f32 %v3064, %v3130
    %v3163 = vadd.f32 %v3065, %v3131
    %v3164 = vadd.f32 %v3066, %v3132
    %v3165 = vadd.f32 %v3067, %v3133
    %v3166 = vadd.f32 %v3068, %v3134
    %v3167 = vadd.f32 %v3069, %v3135
    %v3168 = vadd.f32 %v3070, %v3136
    %s3169 = sld [smem:[#allocation6 + $0x5]]
    %s3170 = scalar_lea.vmem [#allocation2], 24
    %v3171 = vld [vmem:[%s3170] sm:$0xff]
    %v3172 = vld [vmem:[%s3170 + $0x8] sm:$0xff]
    %v3173 = vld [vmem:[%s3170 + $0x18] sm:$0xff]
    %v3174 = vld [vmem:[%s3170 + $0x20] sm:$0xff]
    %v3175 = vld [vmem:[%s3170 + $0x30] sm:$0xff]
    %v3176 = vld [vmem:[%s3170 + $0x38] sm:$0xff]
    %v3177 = vld [vmem:[%s3170 + $0x48] sm:$0xff]
    %v3178 = vld [vmem:[%s3170 + $0x50] sm:$0xff]
    %v3179 = vld [vmem:[%s3170 + $0x60] sm:$0xff]
    %v3180 = vld [vmem:[%s3170 + $0x68] sm:$0xff]
    %v3181 = vld [vmem:[%s3170 + $0x78] sm:$0xff]
    %v3182 = vld [vmem:[%s3170 + $0x80] sm:$0xff]
    %v3183 = vld [vmem:[%s3170 + $0x90] sm:$0xff]
    %v3184 = vld [vmem:[%s3170 + $0x98] sm:$0xff]
    %v3185 = vld [vmem:[%s3170 + $0xa8] sm:$0xff]
    %v3186 = vld [vmem:[%s3170 + $0xb0] sm:$0xff]
    %v3187 = vld [vmem:[%s3170 + $0xc0] sm:$0xff]
    %v3188 = vld [vmem:[%s3170 + $0xc8] sm:$0xff]
    %v3189 = vld [vmem:[%s3170 + $0xd8] sm:$0xff]
    %v3190 = vld [vmem:[%s3170 + $0xe0] sm:$0xff]
    %v3191 = vld [vmem:[%s3170 + $0xf0] sm:$0xff]
    %v3192 = vld [vmem:[%s3170 + $0xf8] sm:$0xff]
    %v3193 = vld [vmem:[%s3170 + $0x108] sm:$0xff]
    %v3194 = vld [vmem:[%s3170 + $0x110] sm:$0xff]
    %v3195 = vld [vmem:[%s3170 + $0x120] sm:$0xff]
    %v3196 = vld [vmem:[%s3170 + $0x128] sm:$0xff]
    %v3197 = vld [vmem:[%s3170 + $0x138] sm:$0xff]
    %v3198 = vld [vmem:[%s3170 + $0x140] sm:$0xff]
    %v3199 = vld [vmem:[%s3170 + $0x150] sm:$0xff]
    %v3200 = vld [vmem:[%s3170 + $0x158] sm:$0xff]
    %v3201 = vld [vmem:[%s3170 + $0x168] sm:$0xff]
    %v3202 = vld [vmem:[%s3170 + $0x170] sm:$0xff]
    %v3203 = vstv %s3169
    %v3204 = vmul.f32 %v3203, %v3171
    %v3205 = vmul.f32 %v3203, %v3172
    %v3206 = vmul.f32 %v3203, %v3173
    %v3207 = vmul.f32 %v3203, %v3174
    %v3208 = vmul.f32 %v3203, %v3175
    %v3209 = vmul.f32 %v3203, %v3176
    %v3210 = vmul.f32 %v3203, %v3177
    %v3211 = vmul.f32 %v3203, %v3178
    %v3212 = vmul.f32 %v3203, %v3179
    %v3213 = vmul.f32 %v3203, %v3180
    %v3214 = vmul.f32 %v3203, %v3181
    %v3215 = vmul.f32 %v3203, %v3182
    %v3216 = vmul.f32 %v3203, %v3183
    %v3217 = vmul.f32 %v3203, %v3184
    %v3218 = vmul.f32 %v3203, %v3185
    %v3219 = vmul.f32 %v3203, %v3186
    %v3220 = vmul.f32 %v3203, %v3187
    %v3221 = vmul.f32 %v3203, %v3188
    %v3222 = vmul.f32 %v3203, %v3189
    %v3223 = vmul.f32 %v3203, %v3190
    %v3224 = vmul.f32 %v3203, %v3191
    %v3225 = vmul.f32 %v3203, %v3192
    %v3226 = vmul.f32 %v3203, %v3193
    %v3227 = vmul.f32 %v3203, %v3194
    %v3228 = vmul.f32 %v3203, %v3195
    %v3229 = vmul.f32 %v3203, %v3196
    %v3230 = vmul.f32 %v3203, %v3197
    %v3231 = vmul.f32 %v3203, %v3198
    %v3232 = vmul.f32 %v3203, %v3199
    %v3233 = vmul.f32 %v3203, %v3200
    %v3234 = vmul.f32 %v3203, %v3201
    %v3235 = vmul.f32 %v3203, %v3202
    %v3236 = vadd.f32 %v3137, %v3204
    %v3237 = vadd.f32 %v3138, %v3205
    %v3238 = vadd.f32 %v3139, %v3206
    %v3239 = vadd.f32 %v3140, %v3207
    %v3240 = vadd.f32 %v3141, %v3208
    %v3241 = vadd.f32 %v3142, %v3209
    %v3242 = vadd.f32 %v3143, %v3210
    %v3243 = vadd.f32 %v3144, %v3211
    %v3244 = vadd.f32 %v3145, %v3212
    %v3245 = vadd.f32 %v3146, %v3213
    %v3246 = vadd.f32 %v3147, %v3214
    %v3247 = vadd.f32 %v3148, %v3215
    %v3248 = vadd.f32 %v3149, %v3216
    %v3249 = vadd.f32 %v3150, %v3217
    %v3250 = vadd.f32 %v3151, %v3218
    %v3251 = vadd.f32 %v3152, %v3219
    %v3252 = vadd.f32 %v3153, %v3220
    %v3253 = vadd.f32 %v3154, %v3221
    %v3254 = vadd.f32 %v3155, %v3222
    %v3255 = vadd.f32 %v3156, %v3223
    %v3256 = vadd.f32 %v3157, %v3224
    %v3257 = vadd.f32 %v3158, %v3225
    %v3258 = vadd.f32 %v3159, %v3226
    %v3259 = vadd.f32 %v3160, %v3227
    %v3260 = vadd.f32 %v3161, %v3228
    %v3261 = vadd.f32 %v3162, %v3229
    %v3262 = vadd.f32 %v3163, %v3230
    %v3263 = vadd.f32 %v3164, %v3231
    %v3264 = vadd.f32 %v3165, %v3232
    %v3265 = vadd.f32 %v3166, %v3233
    %v3266 = vadd.f32 %v3167, %v3234
    %v3267 = vadd.f32 %v3168, %v3235
    %s3268 = sld [smem:[#allocation6 + $0x6]]
    %v3269 = vld [vmem:[%s3170 + $0x1] sm:$0xff]
    %v3270 = vld [vmem:[%s3170 + $0x9] sm:$0xff]
    %v3271 = vld [vmem:[%s3170 + $0x19] sm:$0xff]
    %v3272 = vld [vmem:[%s3170 + $0x21] sm:$0xff]
    %v3273 = vld [vmem:[%s3170 + $0x31] sm:$0xff]
    %v3274 = vld [vmem:[%s3170 + $0x39] sm:$0xff]
    %v3275 = vld [vmem:[%s3170 + $0x49] sm:$0xff]
    %v3276 = vld [vmem:[%s3170 + $0x51] sm:$0xff]
    %v3277 = vld [vmem:[%s3170 + $0x61] sm:$0xff]
    %v3278 = vld [vmem:[%s3170 + $0x69] sm:$0xff]
    %v3279 = vld [vmem:[%s3170 + $0x79] sm:$0xff]
    %v3280 = vld [vmem:[%s3170 + $0x81] sm:$0xff]
    %v3281 = vld [vmem:[%s3170 + $0x91] sm:$0xff]
    %v3282 = vld [vmem:[%s3170 + $0x99] sm:$0xff]
    %v3283 = vld [vmem:[%s3170 + $0xa9] sm:$0xff]
    %v3284 = vld [vmem:[%s3170 + $0xb1] sm:$0xff]
    %v3285 = vld [vmem:[%s3170 + $0xc1] sm:$0xff]
    %v3286 = vld [vmem:[%s3170 + $0xc9] sm:$0xff]
    %v3287 = vld [vmem:[%s3170 + $0xd9] sm:$0xff]
    %v3288 = vld [vmem:[%s3170 + $0xe1] sm:$0xff]
    %v3289 = vld [vmem:[%s3170 + $0xf1] sm:$0xff]
    %v3290 = vld [vmem:[%s3170 + $0xf9] sm:$0xff]
    %v3291 = vld [vmem:[%s3170 + $0x109] sm:$0xff]
    %v3292 = vld [vmem:[%s3170 + $0x111] sm:$0xff]
    %v3293 = vld [vmem:[%s3170 + $0x121] sm:$0xff]
    %v3294 = vld [vmem:[%s3170 + $0x129] sm:$0xff]
    %v3295 = vld [vmem:[%s3170 + $0x139] sm:$0xff]
    %v3296 = vld [vmem:[%s3170 + $0x141] sm:$0xff]
    %v3297 = vld [vmem:[%s3170 + $0x151] sm:$0xff]
    %v3298 = vld [vmem:[%s3170 + $0x159] sm:$0xff]
    %v3299 = vld [vmem:[%s3170 + $0x169] sm:$0xff]
    %v3300 = vld [vmem:[%s3170 + $0x171] sm:$0xff]
    %v3301 = vstv %s3268
    %v3302 = vmul.f32 %v3301, %v3269
    %v3303 = vmul.f32 %v3301, %v3270
    %v3304 = vmul.f32 %v3301, %v3271
    %v3305 = vmul.f32 %v3301, %v3272
    %v3306 = vmul.f32 %v3301, %v3273
    %v3307 = vmul.f32 %v3301, %v3274
    %v3308 = vmul.f32 %v3301, %v3275
    %v3309 = vmul.f32 %v3301, %v3276
    %v3310 = vmul.f32 %v3301, %v3277
    %v3311 = vmul.f32 %v3301, %v3278
    %v3312 = vmul.f32 %v3301, %v3279
    %v3313 = vmul.f32 %v3301, %v3280
    %v3314 = vmul.f32 %v3301, %v3281
    %v3315 = vmul.f32 %v3301, %v3282
    %v3316 = vmul.f32 %v3301, %v3283
    %v3317 = vmul.f32 %v3301, %v3284
    %v3318 = vmul.f32 %v3301, %v3285
    %v3319 = vmul.f32 %v3301, %v3286
    %v3320 = vmul.f32 %v3301, %v3287
    %v3321 = vmul.f32 %v3301, %v3288
    %v3322 = vmul.f32 %v3301, %v3289
    %v3323 = vmul.f32 %v3301, %v3290
    %v3324 = vmul.f32 %v3301, %v3291
    %v3325 = vmul.f32 %v3301, %v3292
    %v3326 = vmul.f32 %v3301, %v3293
    %v3327 = vmul.f32 %v3301, %v3294
    %v3328 = vmul.f32 %v3301, %v3295
    %v3329 = vmul.f32 %v3301, %v3296
    %v3330 = vmul.f32 %v3301, %v3297
    %v3331 = vmul.f32 %v3301, %v3298
    %v3332 = vmul.f32 %v3301, %v3299
    %v3333 = vmul.f32 %v3301, %v3300
    %v3334 = vadd.f32 %v3236, %v3302
    %v3335 = vadd.f32 %v3237, %v3303
    %v3336 = vadd.f32 %v3238, %v3304
    %v3337 = vadd.f32 %v3239, %v3305
    %v3338 = vadd.f32 %v3240, %v3306
    %v3339 = vadd.f32 %v3241, %v3307
    %v3340 = vadd.f32 %v3242, %v3308
    %v3341 = vadd.f32 %v3243, %v3309
    %v3342 = vadd.f32 %v3244, %v3310
    %v3343 = vadd.f32 %v3245, %v3311
    %v3344 = vadd.f32 %v3246, %v3312
    %v3345 = vadd.f32 %v3247, %v3313
    %v3346 = vadd.f32 %v3248, %v3314
    %v3347 = vadd.f32 %v3249, %v3315
    %v3348 = vadd.f32 %v3250, %v3316
    %v3349 = vadd.f32 %v3251, %v3317
    %v3350 = vadd.f32 %v3252, %v3318
    %v3351 = vadd.f32 %v3253, %v3319
    %v3352 = vadd.f32 %v3254, %v3320
    %v3353 = vadd.f32 %v3255, %v3321
    %v3354 = vadd.f32 %v3256, %v3322
    %v3355 = vadd.f32 %v3257, %v3323
    %v3356 = vadd.f32 %v3258, %v3324
    %v3357 = vadd.f32 %v3259, %v3325
    %v3358 = vadd.f32 %v3260, %v3326
    %v3359 = vadd.f32 %v3261, %v3327
    %v3360 = vadd.f32 %v3262, %v3328
    %v3361 = vadd.f32 %v3263, %v3329
    %v3362 = vadd.f32 %v3264, %v3330
    %v3363 = vadd.f32 %v3265, %v3331
    %v3364 = vadd.f32 %v3266, %v3332
    %v3365 = vadd.f32 %v3267, %v3333
    %s3366 = sld [smem:[#allocation6 + $0x7]]
    %v3367 = vld [vmem:[%s3170 + $0x2] sm:$0xff]
    %v3368 = vld [vmem:[%s3170 + $0xa] sm:$0xff]
    %v3369 = vld [vmem:[%s3170 + $0x1a] sm:$0xff]
    %v3370 = vld [vmem:[%s3170 + $0x22] sm:$0xff]
    %v3371 = vld [vmem:[%s3170 + $0x32] sm:$0xff]
    %v3372 = vld [vmem:[%s3170 + $0x3a] sm:$0xff]
    %v3373 = vld [vmem:[%s3170 + $0x4a] sm:$0xff]
    %v3374 = vld [vmem:[%s3170 + $0x52] sm:$0xff]
    %v3375 = vld [vmem:[%s3170 + $0x62] sm:$0xff]
    %v3376 = vld [vmem:[%s3170 + $0x6a] sm:$0xff]
    %v3377 = vld [vmem:[%s3170 + $0x7a] sm:$0xff]
    %v3378 = vld [vmem:[%s3170 + $0x82] sm:$0xff]
    %v3379 = vld [vmem:[%s3170 + $0x92] sm:$0xff]
    %v3380 = vld [vmem:[%s3170 + $0x9a] sm:$0xff]
    %v3381 = vld [vmem:[%s3170 + $0xaa] sm:$0xff]
    %v3382 = vld [vmem:[%s3170 + $0xb2] sm:$0xff]
    %v3383 = vld [vmem:[%s3170 + $0xc2] sm:$0xff]
    %v3384 = vld [vmem:[%s3170 + $0xca] sm:$0xff]
    %v3385 = vld [vmem:[%s3170 + $0xda] sm:$0xff]
    %v3386 = vld [vmem:[%s3170 + $0xe2] sm:$0xff]
    %v3387 = vld [vmem:[%s3170 + $0xf2] sm:$0xff]
    %v3388 = vld [vmem:[%s3170 + $0xfa] sm:$0xff]
    %v3389 = vld [vmem:[%s3170 + $0x10a] sm:$0xff]
    %v3390 = vld [vmem:[%s3170 + $0x112] sm:$0xff]
    %v3391 = vld [vmem:[%s3170 + $0x122] sm:$0xff]
    %v3392 = vld [vmem:[%s3170 + $0x12a] sm:$0xff]
    %v3393 = vld [vmem:[%s3170 + $0x13a] sm:$0xff]
    %v3394 = vld [vmem:[%s3170 + $0x142] sm:$0xff]
    %v3395 = vld [vmem:[%s3170 + $0x152] sm:$0xff]
    %v3396 = vld [vmem:[%s3170 + $0x15a] sm:$0xff]
    %v3397 = vld [vmem:[%s3170 + $0x16a] sm:$0xff]
    %v3398 = vld [vmem:[%s3170 + $0x172] sm:$0xff]
    %v3399 = vstv %s3366
    %v3400 = vmul.f32 %v3399, %v3367
    %v3401 = vmul.f32 %v3399, %v3368
    %v3402 = vmul.f32 %v3399, %v3369
    %v3403 = vmul.f32 %v3399, %v3370
    %v3404 = vmul.f32 %v3399, %v3371
    %v3405 = vmul.f32 %v3399, %v3372
    %v3406 = vmul.f32 %v3399, %v3373
    %v3407 = vmul.f32 %v3399, %v3374
    %v3408 = vmul.f32 %v3399, %v3375
    %v3409 = vmul.f32 %v3399, %v3376
    %v3410 = vmul.f32 %v3399, %v3377
    %v3411 = vmul.f32 %v3399, %v3378
    %v3412 = vmul.f32 %v3399, %v3379
    %v3413 = vmul.f32 %v3399, %v3380
    %v3414 = vmul.f32 %v3399, %v3381
    %v3415 = vmul.f32 %v3399, %v3382
    %v3416 = vmul.f32 %v3399, %v3383
    %v3417 = vmul.f32 %v3399, %v3384
    %v3418 = vmul.f32 %v3399, %v3385
    %v3419 = vmul.f32 %v3399, %v3386
    %v3420 = vmul.f32 %v3399, %v3387
    %v3421 = vmul.f32 %v3399, %v3388
    %v3422 = vmul.f32 %v3399, %v3389
    %v3423 = vmul.f32 %v3399, %v3390
    %v3424 = vmul.f32 %v3399, %v3391
    %v3425 = vmul.f32 %v3399, %v3392
    %v3426 = vmul.f32 %v3399, %v3393
    %v3427 = vmul.f32 %v3399, %v3394
    %v3428 = vmul.f32 %v3399, %v3395
    %v3429 = vmul.f32 %v3399, %v3396
    %v3430 = vmul.f32 %v3399, %v3397
    %v3431 = vmul.f32 %v3399, %v3398
    %v3432 = vadd.f32 %v3334, %v3400
    %v3433 = vadd.f32 %v3335, %v3401
    %v3434 = vadd.f32 %v3336, %v3402
    %v3435 = vadd.f32 %v3337, %v3403
    %v3436 = vadd.f32 %v3338, %v3404
    %v3437 = vadd.f32 %v3339, %v3405
    %v3438 = vadd.f32 %v3340, %v3406
    %v3439 = vadd.f32 %v3341, %v3407
    %v3440 = vadd.f32 %v3342, %v3408
    %v3441 = vadd.f32 %v3343, %v3409
    %v3442 = vadd.f32 %v3344, %v3410
    %v3443 = vadd.f32 %v3345, %v3411
    %v3444 = vadd.f32 %v3346, %v3412
    %v3445 = vadd.f32 %v3347, %v3413
    %v3446 = vadd.f32 %v3348, %v3414
    %v3447 = vadd.f32 %v3349, %v3415
    %v3448 = vadd.f32 %v3350, %v3416
    %v3449 = vadd.f32 %v3351, %v3417
    %v3450 = vadd.f32 %v3352, %v3418
    %v3451 = vadd.f32 %v3353, %v3419
    %v3452 = vadd.f32 %v3354, %v3420
    %v3453 = vadd.f32 %v3355, %v3421
    %v3454 = vadd.f32 %v3356, %v3422
    %v3455 = vadd.f32 %v3357, %v3423
    %v3456 = vadd.f32 %v3358, %v3424
    %v3457 = vadd.f32 %v3359, %v3425
    %v3458 = vadd.f32 %v3360, %v3426
    %v3459 = vadd.f32 %v3361, %v3427
    %v3460 = vadd.f32 %v3362, %v3428
    %v3461 = vadd.f32 %v3363, %v3429
    %v3462 = vadd.f32 %v3364, %v3430
    %v3463 = vadd.f32 %v3365, %v3431
    %s3464 = sld [smem:[#allocation6 + $0x8]]
    %v3465 = vld [vmem:[%s3170 + $0x3] sm:$0xff]
    %v3466 = vld [vmem:[%s3170 + $0xb] sm:$0xff]
    %v3467 = vld [vmem:[%s3170 + $0x1b] sm:$0xff]
    %v3468 = vld [vmem:[%s3170 + $0x23] sm:$0xff]
    %v3469 = vld [vmem:[%s3170 + $0x33] sm:$0xff]
    %v3470 = vld [vmem:[%s3170 + $0x3b] sm:$0xff]
    %v3471 = vld [vmem:[%s3170 + $0x4b] sm:$0xff]
    %v3472 = vld [vmem:[%s3170 + $0x53] sm:$0xff]
    %v3473 = vld [vmem:[%s3170 + $0x63] sm:$0xff]
    %v3474 = vld [vmem:[%s3170 + $0x6b] sm:$0xff]
    %v3475 = vld [vmem:[%s3170 + $0x7b] sm:$0xff]
    %v3476 = vld [vmem:[%s3170 + $0x83] sm:$0xff]
    %v3477 = vld [vmem:[%s3170 + $0x93] sm:$0xff]
    %v3478 = vld [vmem:[%s3170 + $0x9b] sm:$0xff]
    %v3479 = vld [vmem:[%s3170 + $0xab] sm:$0xff]
    %v3480 = vld [vmem:[%s3170 + $0xb3] sm:$0xff]
    %v3481 = vld [vmem:[%s3170 + $0xc3] sm:$0xff]
    %v3482 = vld [vmem:[%s3170 + $0xcb] sm:$0xff]
    %v3483 = vld [vmem:[%s3170 + $0xdb] sm:$0xff]
    %v3484 = vld [vmem:[%s3170 + $0xe3] sm:$0xff]
    %v3485 = vld [vmem:[%s3170 + $0xf3] sm:$0xff]
    %v3486 = vld [vmem:[%s3170 + $0xfb] sm:$0xff]
    %v3487 = vld [vmem:[%s3170 + $0x10b] sm:$0xff]
    %v3488 = vld [vmem:[%s3170 + $0x113] sm:$0xff]
    %v3489 = vld [vmem:[%s3170 + $0x123] sm:$0xff]
    %v3490 = vld [vmem:[%s3170 + $0x12b] sm:$0xff]
    %v3491 = vld [vmem:[%s3170 + $0x13b] sm:$0xff]
    %v3492 = vld [vmem:[%s3170 + $0x143] sm:$0xff]
    %v3493 = vld [vmem:[%s3170 + $0x153] sm:$0xff]
    %v3494 = vld [vmem:[%s3170 + $0x15b] sm:$0xff]
    %v3495 = vld [vmem:[%s3170 + $0x16b] sm:$0xff]
    %v3496 = vld [vmem:[%s3170 + $0x173] sm:$0xff]
    %v3497 = vstv %s3464
    %v3498 = vmul.f32 %v3497, %v3465
    %v3499 = vmul.f32 %v3497, %v3466
    %v3500 = vmul.f32 %v3497, %v3467
    %v3501 = vmul.f32 %v3497, %v3468
    %v3502 = vmul.f32 %v3497, %v3469
    %v3503 = vmul.f32 %v3497, %v3470
    %v3504 = vmul.f32 %v3497, %v3471
    %v3505 = vmul.f32 %v3497, %v3472
    %v3506 = vmul.f32 %v3497, %v3473
    %v3507 = vmul.f32 %v3497, %v3474
    %v3508 = vmul.f32 %v3497, %v3475
    %v3509 = vmul.f32 %v3497, %v3476
    %v3510 = vmul.f32 %v3497, %v3477
    %v3511 = vmul.f32 %v3497, %v3478
    %v3512 = vmul.f32 %v3497, %v3479
    %v3513 = vmul.f32 %v3497, %v3480
    %v3514 = vmul.f32 %v3497, %v3481
    %v3515 = vmul.f32 %v3497, %v3482
    %v3516 = vmul.f32 %v3497, %v3483
    %v3517 = vmul.f32 %v3497, %v3484
    %v3518 = vmul.f32 %v3497, %v3485
    %v3519 = vmul.f32 %v3497, %v3486
    %v3520 = vmul.f32 %v3497, %v3487
    %v3521 = vmul.f32 %v3497, %v3488
    %v3522 = vmul.f32 %v3497, %v3489
    %v3523 = vmul.f32 %v3497, %v3490
    %v3524 = vmul.f32 %v3497, %v3491
    %v3525 = vmul.f32 %v3497, %v3492
    %v3526 = vmul.f32 %v3497, %v3493
    %v3527 = vmul.f32 %v3497, %v3494
    %v3528 = vmul.f32 %v3497, %v3495
    %v3529 = vmul.f32 %v3497, %v3496
    %v3530 = vadd.f32 %v3432, %v3498
    %v3531 = vadd.f32 %v3433, %v3499
    %v3532 = vadd.f32 %v3434, %v3500
    %v3533 = vadd.f32 %v3435, %v3501
    %v3534 = vadd.f32 %v3436, %v3502
    %v3535 = vadd.f32 %v3437, %v3503
    %v3536 = vadd.f32 %v3438, %v3504
    %v3537 = vadd.f32 %v3439, %v3505
    %v3538 = vadd.f32 %v3440, %v3506
    %v3539 = vadd.f32 %v3441, %v3507
    %v3540 = vadd.f32 %v3442, %v3508
    %v3541 = vadd.f32 %v3443, %v3509
    %v3542 = vadd.f32 %v3444, %v3510
    %v3543 = vadd.f32 %v3445, %v3511
    %v3544 = vadd.f32 %v3446, %v3512
    %v3545 = vadd.f32 %v3447, %v3513
    %v3546 = vadd.f32 %v3448, %v3514
    %v3547 = vadd.f32 %v3449, %v3515
    %v3548 = vadd.f32 %v3450, %v3516
    %v3549 = vadd.f32 %v3451, %v3517
    %v3550 = vadd.f32 %v3452, %v3518
    %v3551 = vadd.f32 %v3453, %v3519
    %v3552 = vadd.f32 %v3454, %v3520
    %v3553 = vadd.f32 %v3455, %v3521
    %v3554 = vadd.f32 %v3456, %v3522
    %v3555 = vadd.f32 %v3457, %v3523
    %v3556 = vadd.f32 %v3458, %v3524
    %v3557 = vadd.f32 %v3459, %v3525
    %v3558 = vadd.f32 %v3460, %v3526
    %v3559 = vadd.f32 %v3461, %v3527
    %v3560 = vadd.f32 %v3462, %v3528
    %v3561 = vadd.f32 %v3463, %v3529
    %s3562 = sld [smem:[#allocation6 + $0x9]]
    %v3563 = vld [vmem:[%s3170 + $0x4] sm:$0xff]
    %v3564 = vld [vmem:[%s3170 + $0xc] sm:$0xff]
    %v3565 = vld [vmem:[%s3170 + $0x1c] sm:$0xff]
    %v3566 = vld [vmem:[%s3170 + $0x24] sm:$0xff]
    %v3567 = vld [vmem:[%s3170 + $0x34] sm:$0xff]
    %v3568 = vld [vmem:[%s3170 + $0x3c] sm:$0xff]
    %v3569 = vld [vmem:[%s3170 + $0x4c] sm:$0xff]
    %v3570 = vld [vmem:[%s3170 + $0x54] sm:$0xff]
    %v3571 = vld [vmem:[%s3170 + $0x64] sm:$0xff]
    %v3572 = vld [vmem:[%s3170 + $0x6c] sm:$0xff]
    %v3573 = vld [vmem:[%s3170 + $0x7c] sm:$0xff]
    %v3574 = vld [vmem:[%s3170 + $0x84] sm:$0xff]
    %v3575 = vld [vmem:[%s3170 + $0x94] sm:$0xff]
    %v3576 = vld [vmem:[%s3170 + $0x9c] sm:$0xff]
    %v3577 = vld [vmem:[%s3170 + $0xac] sm:$0xff]
    %v3578 = vld [vmem:[%s3170 + $0xb4] sm:$0xff]
    %v3579 = vld [vmem:[%s3170 + $0xc4] sm:$0xff]
    %v3580 = vld [vmem:[%s3170 + $0xcc] sm:$0xff]
    %v3581 = vld [vmem:[%s3170 + $0xdc] sm:$0xff]
    %v3582 = vld [vmem:[%s3170 + $0xe4] sm:$0xff]
    %v3583 = vld [vmem:[%s3170 + $0xf4] sm:$0xff]
    %v3584 = vld [vmem:[%s3170 + $0xfc] sm:$0xff]
    %v3585 = vld [vmem:[%s3170 + $0x10c] sm:$0xff]
    %v3586 = vld [vmem:[%s3170 + $0x114] sm:$0xff]
    %v3587 = vld [vmem:[%s3170 + $0x124] sm:$0xff]
    %v3588 = vld [vmem:[%s3170 + $0x12c] sm:$0xff]
    %v3589 = vld [vmem:[%s3170 + $0x13c] sm:$0xff]
    %v3590 = vld [vmem:[%s3170 + $0x144] sm:$0xff]
    %v3591 = vld [vmem:[%s3170 + $0x154] sm:$0xff]
    %v3592 = vld [vmem:[%s3170 + $0x15c] sm:$0xff]
    %v3593 = vld [vmem:[%s3170 + $0x16c] sm:$0xff]
    %v3594 = vld [vmem:[%s3170 + $0x174] sm:$0xff]
    %v3595 = vstv %s3562
    %v3596 = vmul.f32 %v3595, %v3563
    %v3597 = vmul.f32 %v3595, %v3564
    %v3598 = vmul.f32 %v3595, %v3565
    %v3599 = vmul.f32 %v3595, %v3566
    %v3600 = vmul.f32 %v3595, %v3567
    %v3601 = vmul.f32 %v3595, %v3568
    %v3602 = vmul.f32 %v3595, %v3569
    %v3603 = vmul.f32 %v3595, %v3570
    %v3604 = vmul.f32 %v3595, %v3571
    %v3605 = vmul.f32 %v3595, %v3572
    %v3606 = vmul.f32 %v3595, %v3573
    %v3607 = vmul.f32 %v3595, %v3574
    %v3608 = vmul.f32 %v3595, %v3575
    %v3609 = vmul.f32 %v3595, %v3576
    %v3610 = vmul.f32 %v3595, %v3577
    %v3611 = vmul.f32 %v3595, %v3578
    %v3612 = vmul.f32 %v3595, %v3579
    %v3613 = vmul.f32 %v3595, %v3580
    %v3614 = vmul.f32 %v3595, %v3581
    %v3615 = vmul.f32 %v3595, %v3582
    %v3616 = vmul.f32 %v3595, %v3583
    %v3617 = vmul.f32 %v3595, %v3584
    %v3618 = vmul.f32 %v3595, %v3585
    %v3619 = vmul.f32 %v3595, %v3586
    %v3620 = vmul.f32 %v3595, %v3587
    %v3621 = vmul.f32 %v3595, %v3588
    %v3622 = vmul.f32 %v3595, %v3589
    %v3623 = vmul.f32 %v3595, %v3590
    %v3624 = vmul.f32 %v3595, %v3591
    %v3625 = vmul.f32 %v3595, %v3592
    %v3626 = vmul.f32 %v3595, %v3593
    %v3627 = vmul.f32 %v3595, %v3594
    %v3628 = vadd.f32 %v3530, %v3596
    %v3629 = vadd.f32 %v3531, %v3597
    %v3630 = vadd.f32 %v3532, %v3598
    %v3631 = vadd.f32 %v3533, %v3599
    %v3632 = vadd.f32 %v3534, %v3600
    %v3633 = vadd.f32 %v3535, %v3601
    %v3634 = vadd.f32 %v3536, %v3602
    %v3635 = vadd.f32 %v3537, %v3603
    %v3636 = vadd.f32 %v3538, %v3604
    %v3637 = vadd.f32 %v3539, %v3605
    %v3638 = vadd.f32 %v3540, %v3606
    %v3639 = vadd.f32 %v3541, %v3607
    %v3640 = vadd.f32 %v3542, %v3608
    %v3641 = vadd.f32 %v3543, %v3609
    %v3642 = vadd.f32 %v3544, %v3610
    %v3643 = vadd.f32 %v3545, %v3611
    %v3644 = vadd.f32 %v3546, %v3612
    %v3645 = vadd.f32 %v3547, %v3613
    %v3646 = vadd.f32 %v3548, %v3614
    %v3647 = vadd.f32 %v3549, %v3615
    %v3648 = vadd.f32 %v3550, %v3616
    %v3649 = vadd.f32 %v3551, %v3617
    %v3650 = vadd.f32 %v3552, %v3618
    %v3651 = vadd.f32 %v3553, %v3619
    %v3652 = vadd.f32 %v3554, %v3620
    %v3653 = vadd.f32 %v3555, %v3621
    %v3654 = vadd.f32 %v3556, %v3622
    %v3655 = vadd.f32 %v3557, %v3623
    %v3656 = vadd.f32 %v3558, %v3624
    %v3657 = vadd.f32 %v3559, %v3625
    %v3658 = vadd.f32 %v3560, %v3626
    %v3659 = vadd.f32 %v3561, %v3627
    %s3660 = sld [smem:[#allocation6 + $0xa]]
    %v3661 = vld [vmem:[%s2678] sm:$0xff]
    %v3662 = vld [vmem:[%s2678 + $0x8] sm:$0xff]
    %v3663 = vld [vmem:[%s2678 + $0x18] sm:$0xff]
    %v3664 = vld [vmem:[%s2678 + $0x20] sm:$0xff]
    %v3665 = vld [vmem:[%s2678 + $0x30] sm:$0xff]
    %v3666 = vld [vmem:[%s2678 + $0x38] sm:$0xff]
    %v3667 = vld [vmem:[%s2678 + $0x48] sm:$0xff]
    %v3668 = vld [vmem:[%s2678 + $0x50] sm:$0xff]
    %v3669 = vld [vmem:[%s2678 + $0x60] sm:$0xff]
    %v3670 = vld [vmem:[%s2678 + $0x68] sm:$0xff]
    %v3671 = vld [vmem:[%s2678 + $0x78] sm:$0xff]
    %v3672 = vld [vmem:[%s2678 + $0x80] sm:$0xff]
    %v3673 = vld [vmem:[%s2678 + $0x90] sm:$0xff]
    %v3674 = vld [vmem:[%s2678 + $0x98] sm:$0xff]
    %v3675 = vld [vmem:[%s2678 + $0xa8] sm:$0xff]
    %v3676 = vld [vmem:[%s2678 + $0xb0] sm:$0xff]
    %v3677 = vld [vmem:[%s2678 + $0xc0] sm:$0xff]
    %v3678 = vld [vmem:[%s2678 + $0xc8] sm:$0xff]
    %v3679 = vld [vmem:[%s2678 + $0xd8] sm:$0xff]
    %v3680 = vld [vmem:[%s2678 + $0xe0] sm:$0xff]
    %v3681 = vld [vmem:[%s2678 + $0xf0] sm:$0xff]
    %v3682 = vld [vmem:[%s2678 + $0xf8] sm:$0xff]
    %v3683 = vld [vmem:[%s2678 + $0x108] sm:$0xff]
    %v3684 = vld [vmem:[%s2678 + $0x110] sm:$0xff]
    %v3685 = vld [vmem:[%s2678 + $0x120] sm:$0xff]
    %v3686 = vld [vmem:[%s2678 + $0x128] sm:$0xff]
    %v3687 = vld [vmem:[%s2678 + $0x138] sm:$0xff]
    %v3688 = vld [vmem:[%s2678 + $0x140] sm:$0xff]
    %v3689 = vld [vmem:[%s2678 + $0x150] sm:$0xff]
    %v3690 = vld [vmem:[%s2678 + $0x158] sm:$0xff]
    %v3691 = vld [vmem:[%s2678 + $0x168] sm:$0xff]
    %v3692 = vld [vmem:[%s2678 + $0x170] sm:$0xff]
    %v3693 = vstv %s3660
    %v3694 = vmul.f32 %v3693, %v3661
    %v3695 = vmul.f32 %v3693, %v3662
    %v3696 = vmul.f32 %v3693, %v3663
    %v3697 = vmul.f32 %v3693, %v3664
    %v3698 = vmul.f32 %v3693, %v3665
    %v3699 = vmul.f32 %v3693, %v3666
    %v3700 = vmul.f32 %v3693, %v3667
    %v3701 = vmul.f32 %v3693, %v3668
    %v3702 = vmul.f32 %v3693, %v3669
    %v3703 = vmul.f32 %v3693, %v3670
    %v3704 = vmul.f32 %v3693, %v3671
    %v3705 = vmul.f32 %v3693, %v3672
    %v3706 = vmul.f32 %v3693, %v3673
    %v3707 = vmul.f32 %v3693, %v3674
    %v3708 = vmul.f32 %v3693, %v3675
    %v3709 = vmul.f32 %v3693, %v3676
    %v3710 = vmul.f32 %v3693, %v3677
    %v3711 = vmul.f32 %v3693, %v3678
    %v3712 = vmul.f32 %v3693, %v3679
    %v3713 = vmul.f32 %v3693, %v3680
    %v3714 = vmul.f32 %v3693, %v3681
    %v3715 = vmul.f32 %v3693, %v3682
    %v3716 = vmul.f32 %v3693, %v3683
    %v3717 = vmul.f32 %v3693, %v3684
    %v3718 = vmul.f32 %v3693, %v3685
    %v3719 = vmul.f32 %v3693, %v3686
    %v3720 = vmul.f32 %v3693, %v3687
    %v3721 = vmul.f32 %v3693, %v3688
    %v3722 = vmul.f32 %v3693, %v3689
    %v3723 = vmul.f32 %v3693, %v3690
    %v3724 = vmul.f32 %v3693, %v3691
    %v3725 = vmul.f32 %v3693, %v3692
    %v3726 = vadd.f32 %v3628, %v3694
    %v3727 = vadd.f32 %v3629, %v3695
    %v3728 = vadd.f32 %v3630, %v3696
    %v3729 = vadd.f32 %v3631, %v3697
    %v3730 = vadd.f32 %v3632, %v3698
    %v3731 = vadd.f32 %v3633, %v3699
    %v3732 = vadd.f32 %v3634, %v3700
    %v3733 = vadd.f32 %v3635, %v3701
    %v3734 = vadd.f32 %v3636, %v3702
    %v3735 = vadd.f32 %v3637, %v3703
    %v3736 = vadd.f32 %v3638, %v3704
    %v3737 = vadd.f32 %v3639, %v3705
    %v3738 = vadd.f32 %v3640, %v3706
    %v3739 = vadd.f32 %v3641, %v3707
    %v3740 = vadd.f32 %v3642, %v3708
    %v3741 = vadd.f32 %v3643, %v3709
    %v3742 = vadd.f32 %v3644, %v3710
    %v3743 = vadd.f32 %v3645, %v3711
    %v3744 = vadd.f32 %v3646, %v3712
    %v3745 = vadd.f32 %v3647, %v3713
    %v3746 = vadd.f32 %v3648, %v3714
    %v3747 = vadd.f32 %v3649, %v3715
    %v3748 = vadd.f32 %v3650, %v3716
    %v3749 = vadd.f32 %v3651, %v3717
    %v3750 = vadd.f32 %v3652, %v3718
    %v3751 = vadd.f32 %v3653, %v3719
    %v3752 = vadd.f32 %v3654, %v3720
    %v3753 = vadd.f32 %v3655, %v3721
    %v3754 = vadd.f32 %v3656, %v3722
    %v3755 = vadd.f32 %v3657, %v3723
    %v3756 = vadd.f32 %v3658, %v3724
    %v3757 = vadd.f32 %v3659, %v3725
    %s3758 = sld [smem:[#allocation6 + $0xb]]
    %v3759 = vld [vmem:[%s2678 + $0x1] sm:$0xff]
    %v3760 = vld [vmem:[%s2678 + $0x9] sm:$0xff]
    %v3761 = vld [vmem:[%s2678 + $0x19] sm:$0xff]
    %v3762 = vld [vmem:[%s2678 + $0x21] sm:$0xff]
    %v3763 = vld [vmem:[%s2678 + $0x31] sm:$0xff]
    %v3764 = vld [vmem:[%s2678 + $0x39] sm:$0xff]
    %v3765 = vld [vmem:[%s2678 + $0x49] sm:$0xff]
    %v3766 = vld [vmem:[%s2678 + $0x51] sm:$0xff]
    %v3767 = vld [vmem:[%s2678 + $0x61] sm:$0xff]
    %v3768 = vld [vmem:[%s2678 + $0x69] sm:$0xff]
    %v3769 = vld [vmem:[%s2678 + $0x79] sm:$0xff]
    %v3770 = vld [vmem:[%s2678 + $0x81] sm:$0xff]
    %v3771 = vld [vmem:[%s2678 + $0x91] sm:$0xff]
    %v3772 = vld [vmem:[%s2678 + $0x99] sm:$0xff]
    %v3773 = vld [vmem:[%s2678 + $0xa9] sm:$0xff]
    %v3774 = vld [vmem:[%s2678 + $0xb1] sm:$0xff]
    %v3775 = vld [vmem:[%s2678 + $0xc1] sm:$0xff]
    %v3776 = vld [vmem:[%s2678 + $0xc9] sm:$0xff]
    %v3777 = vld [vmem:[%s2678 + $0xd9] sm:$0xff]
    %v3778 = vld [vmem:[%s2678 + $0xe1] sm:$0xff]
    %v3779 = vld [vmem:[%s2678 + $0xf1] sm:$0xff]
    %v3780 = vld [vmem:[%s2678 + $0xf9] sm:$0xff]
    %v3781 = vld [vmem:[%s2678 + $0x109] sm:$0xff]
    %v3782 = vld [vmem:[%s2678 + $0x111] sm:$0xff]
    %v3783 = vld [vmem:[%s2678 + $0x121] sm:$0xff]
    %v3784 = vld [vmem:[%s2678 + $0x129] sm:$0xff]
    %v3785 = vld [vmem:[%s2678 + $0x139] sm:$0xff]
    %v3786 = vld [vmem:[%s2678 + $0x141] sm:$0xff]
    %v3787 = vld [vmem:[%s2678 + $0x151] sm:$0xff]
    %v3788 = vld [vmem:[%s2678 + $0x159] sm:$0xff]
    %v3789 = vld [vmem:[%s2678 + $0x169] sm:$0xff]
    %v3790 = vld [vmem:[%s2678 + $0x171] sm:$0xff]
    %v3791 = vstv %s3758
    %v3792 = vmul.f32 %v3791, %v3759
    %v3793 = vmul.f32 %v3791, %v3760
    %v3794 = vmul.f32 %v3791, %v3761
    %v3795 = vmul.f32 %v3791, %v3762
    %v3796 = vmul.f32 %v3791, %v3763
    %v3797 = vmul.f32 %v3791, %v3764
    %v3798 = vmul.f32 %v3791, %v3765
    %v3799 = vmul.f32 %v3791, %v3766
    %v3800 = vmul.f32 %v3791, %v3767
    %v3801 = vmul.f32 %v3791, %v3768
    %v3802 = vmul.f32 %v3791, %v3769
    %v3803 = vmul.f32 %v3791, %v3770
    %v3804 = vmul.f32 %v3791, %v3771
    %v3805 = vmul.f32 %v3791, %v3772
    %v3806 = vmul.f32 %v3791, %v3773
    %v3807 = vmul.f32 %v3791, %v3774
    %v3808 = vmul.f32 %v3791, %v3775
    %v3809 = vmul.f32 %v3791, %v3776
    %v3810 = vmul.f32 %v3791, %v3777
    %v3811 = vmul.f32 %v3791, %v3778
    %v3812 = vmul.f32 %v3791, %v3779
    %v3813 = vmul.f32 %v3791, %v3780
    %v3814 = vmul.f32 %v3791, %v3781
    %v3815 = vmul.f32 %v3791, %v3782
    %v3816 = vmul.f32 %v3791, %v3783
    %v3817 = vmul.f32 %v3791, %v3784
    %v3818 = vmul.f32 %v3791, %v3785
    %v3819 = vmul.f32 %v3791, %v3786
    %v3820 = vmul.f32 %v3791, %v3787
    %v3821 = vmul.f32 %v3791, %v3788
    %v3822 = vmul.f32 %v3791, %v3789
    %v3823 = vmul.f32 %v3791, %v3790
    %v3824 = vadd.f32 %v3726, %v3792
    %v3825 = vadd.f32 %v3727, %v3793
    %v3826 = vadd.f32 %v3728, %v3794
    %v3827 = vadd.f32 %v3729, %v3795
    %v3828 = vadd.f32 %v3730, %v3796
    %v3829 = vadd.f32 %v3731, %v3797
    %v3830 = vadd.f32 %v3732, %v3798
    %v3831 = vadd.f32 %v3733, %v3799
    %v3832 = vadd.f32 %v3734, %v3800
    %v3833 = vadd.f32 %v3735, %v3801
    %v3834 = vadd.f32 %v3736, %v3802
    %v3835 = vadd.f32 %v3737, %v3803
    %v3836 = vadd.f32 %v3738, %v3804
    %v3837 = vadd.f32 %v3739, %v3805
    %v3838 = vadd.f32 %v3740, %v3806
    %v3839 = vadd.f32 %v3741, %v3807
    %v3840 = vadd.f32 %v3742, %v3808
    %v3841 = vadd.f32 %v3743, %v3809
    %v3842 = vadd.f32 %v3744, %v3810
    %v3843 = vadd.f32 %v3745, %v3811
    %v3844 = vadd.f32 %v3746, %v3812
    %v3845 = vadd.f32 %v3747, %v3813
    %v3846 = vadd.f32 %v3748, %v3814
    %v3847 = vadd.f32 %v3749, %v3815
    %v3848 = vadd.f32 %v3750, %v3816
    %v3849 = vadd.f32 %v3751, %v3817
    %v3850 = vadd.f32 %v3752, %v3818
    %v3851 = vadd.f32 %v3753, %v3819
    %v3852 = vadd.f32 %v3754, %v3820
    %v3853 = vadd.f32 %v3755, %v3821
    %v3854 = vadd.f32 %v3756, %v3822
    %v3855 = vadd.f32 %v3757, %v3823
    %s3856 = sld [smem:[#allocation6 + $0xc]]
    %v3857 = vld [vmem:[%s2678 + $0x2] sm:$0xff]
    %v3858 = vld [vmem:[%s2678 + $0xa] sm:$0xff]
    %v3859 = vld [vmem:[%s2678 + $0x1a] sm:$0xff]
    %v3860 = vld [vmem:[%s2678 + $0x22] sm:$0xff]
    %v3861 = vld [vmem:[%s2678 + $0x32] sm:$0xff]
    %v3862 = vld [vmem:[%s2678 + $0x3a] sm:$0xff]
    %v3863 = vld [vmem:[%s2678 + $0x4a] sm:$0xff]
    %v3864 = vld [vmem:[%s2678 + $0x52] sm:$0xff]
    %v3865 = vld [vmem:[%s2678 + $0x62] sm:$0xff]
    %v3866 = vld [vmem:[%s2678 + $0x6a] sm:$0xff]
    %v3867 = vld [vmem:[%s2678 + $0x7a] sm:$0xff]
    %v3868 = vld [vmem:[%s2678 + $0x82] sm:$0xff]
    %v3869 = vld [vmem:[%s2678 + $0x92] sm:$0xff]
    %v3870 = vld [vmem:[%s2678 + $0x9a] sm:$0xff]
    %v3871 = vld [vmem:[%s2678 + $0xaa] sm:$0xff]
    %v3872 = vld [vmem:[%s2678 + $0xb2] sm:$0xff]
    %v3873 = vld [vmem:[%s2678 + $0xc2] sm:$0xff]
    %v3874 = vld [vmem:[%s2678 + $0xca] sm:$0xff]
    %v3875 = vld [vmem:[%s2678 + $0xda] sm:$0xff]
    %v3876 = vld [vmem:[%s2678 + $0xe2] sm:$0xff]
    %v3877 = vld [vmem:[%s2678 + $0xf2] sm:$0xff]
    %v3878 = vld [vmem:[%s2678 + $0xfa] sm:$0xff]
    %v3879 = vld [vmem:[%s2678 + $0x10a] sm:$0xff]
    %v3880 = vld [vmem:[%s2678 + $0x112] sm:$0xff]
    %v3881 = vld [vmem:[%s2678 + $0x122] sm:$0xff]
    %v3882 = vld [vmem:[%s2678 + $0x12a] sm:$0xff]
    %v3883 = vld [vmem:[%s2678 + $0x13a] sm:$0xff]
    %v3884 = vld [vmem:[%s2678 + $0x142] sm:$0xff]
    %v3885 = vld [vmem:[%s2678 + $0x152] sm:$0xff]
    %v3886 = vld [vmem:[%s2678 + $0x15a] sm:$0xff]
    %v3887 = vld [vmem:[%s2678 + $0x16a] sm:$0xff]
    %v3888 = vld [vmem:[%s2678 + $0x172] sm:$0xff]
    %v3889 = vstv %s3856
    %v3890 = vmul.f32 %v3889, %v3857
    %v3891 = vmul.f32 %v3889, %v3858
    %v3892 = vmul.f32 %v3889, %v3859
    %v3893 = vmul.f32 %v3889, %v3860
    %v3894 = vmul.f32 %v3889, %v3861
    %v3895 = vmul.f32 %v3889, %v3862
    %v3896 = vmul.f32 %v3889, %v3863
    %v3897 = vmul.f32 %v3889, %v3864
    %v3898 = vmul.f32 %v3889, %v3865
    %v3899 = vmul.f32 %v3889, %v3866
    %v3900 = vmul.f32 %v3889, %v3867
    %v3901 = vmul.f32 %v3889, %v3868
    %v3902 = vmul.f32 %v3889, %v3869
    %v3903 = vmul.f32 %v3889, %v3870
    %v3904 = vmul.f32 %v3889, %v3871
    %v3905 = vmul.f32 %v3889, %v3872
    %v3906 = vmul.f32 %v3889, %v3873
    %v3907 = vmul.f32 %v3889, %v3874
    %v3908 = vmul.f32 %v3889, %v3875
    %v3909 = vmul.f32 %v3889, %v3876
    %v3910 = vmul.f32 %v3889, %v3877
    %v3911 = vmul.f32 %v3889, %v3878
    %v3912 = vmul.f32 %v3889, %v3879
    %v3913 = vmul.f32 %v3889, %v3880
    %v3914 = vmul.f32 %v3889, %v3881
    %v3915 = vmul.f32 %v3889, %v3882
    %v3916 = vmul.f32 %v3889, %v3883
    %v3917 = vmul.f32 %v3889, %v3884
    %v3918 = vmul.f32 %v3889, %v3885
    %v3919 = vmul.f32 %v3889, %v3886
    %v3920 = vmul.f32 %v3889, %v3887
    %v3921 = vmul.f32 %v3889, %v3888
    %v3922 = vadd.f32 %v3824, %v3890
    %v3923 = vadd.f32 %v3825, %v3891
    %v3924 = vadd.f32 %v3826, %v3892
    %v3925 = vadd.f32 %v3827, %v3893
    %v3926 = vadd.f32 %v3828, %v3894
    %v3927 = vadd.f32 %v3829, %v3895
    %v3928 = vadd.f32 %v3830, %v3896
    %v3929 = vadd.f32 %v3831, %v3897
    %v3930 = vadd.f32 %v3832, %v3898
    %v3931 = vadd.f32 %v3833, %v3899
    %v3932 = vadd.f32 %v3834, %v3900
    %v3933 = vadd.f32 %v3835, %v3901
    %v3934 = vadd.f32 %v3836, %v3902
    %v3935 = vadd.f32 %v3837, %v3903
    %v3936 = vadd.f32 %v3838, %v3904
    %v3937 = vadd.f32 %v3839, %v3905
    %v3938 = vadd.f32 %v3840, %v3906
    %v3939 = vadd.f32 %v3841, %v3907
    %v3940 = vadd.f32 %v3842, %v3908
    %v3941 = vadd.f32 %v3843, %v3909
    %v3942 = vadd.f32 %v3844, %v3910
    %v3943 = vadd.f32 %v3845, %v3911
    %v3944 = vadd.f32 %v3846, %v3912
    %v3945 = vadd.f32 %v3847, %v3913
    %v3946 = vadd.f32 %v3848, %v3914
    %v3947 = vadd.f32 %v3849, %v3915
    %v3948 = vadd.f32 %v3850, %v3916
    %v3949 = vadd.f32 %v3851, %v3917
    %v3950 = vadd.f32 %v3852, %v3918
    %v3951 = vadd.f32 %v3853, %v3919
    %v3952 = vadd.f32 %v3854, %v3920
    %v3953 = vadd.f32 %v3855, %v3921
    %s3954 = sld [smem:[#allocation6 + $0xd]]
    %v3955 = vld [vmem:[%s2678 + $0x3] sm:$0xff]
    %v3956 = vld [vmem:[%s2678 + $0xb] sm:$0xff]
    %v3957 = vld [vmem:[%s2678 + $0x1b] sm:$0xff]
    %v3958 = vld [vmem:[%s2678 + $0x23] sm:$0xff]
    %v3959 = vld [vmem:[%s2678 + $0x33] sm:$0xff]
    %v3960 = vld [vmem:[%s2678 + $0x3b] sm:$0xff]
    %v3961 = vld [vmem:[%s2678 + $0x4b] sm:$0xff]
    %v3962 = vld [vmem:[%s2678 + $0x53] sm:$0xff]
    %v3963 = vld [vmem:[%s2678 + $0x63] sm:$0xff]
    %v3964 = vld [vmem:[%s2678 + $0x6b] sm:$0xff]
    %v3965 = vld [vmem:[%s2678 + $0x7b] sm:$0xff]
    %v3966 = vld [vmem:[%s2678 + $0x83] sm:$0xff]
    %v3967 = vld [vmem:[%s2678 + $0x93] sm:$0xff]
    %v3968 = vld [vmem:[%s2678 + $0x9b] sm:$0xff]
    %v3969 = vld [vmem:[%s2678 + $0xab] sm:$0xff]
    %v3970 = vld [vmem:[%s2678 + $0xb3] sm:$0xff]
    %v3971 = vld [vmem:[%s2678 + $0xc3] sm:$0xff]
    %v3972 = vld [vmem:[%s2678 + $0xcb] sm:$0xff]
    %v3973 = vld [vmem:[%s2678 + $0xdb] sm:$0xff]
    %v3974 = vld [vmem:[%s2678 + $0xe3] sm:$0xff]
    %v3975 = vld [vmem:[%s2678 + $0xf3] sm:$0xff]
    %v3976 = vld [vmem:[%s2678 + $0xfb] sm:$0xff]
    %v3977 = vld [vmem:[%s2678 + $0x10b] sm:$0xff]
    %v3978 = vld [vmem:[%s2678 + $0x113] sm:$0xff]
    %v3979 = vld [vmem:[%s2678 + $0x123] sm:$0xff]
    %v3980 = vld [vmem:[%s2678 + $0x12b] sm:$0xff]
    %v3981 = vld [vmem:[%s2678 + $0x13b] sm:$0xff]
    %v3982 = vld [vmem:[%s2678 + $0x143] sm:$0xff]
    %v3983 = vld [vmem:[%s2678 + $0x153] sm:$0xff]
    %v3984 = vld [vmem:[%s2678 + $0x15b] sm:$0xff]
    %v3985 = vld [vmem:[%s2678 + $0x16b] sm:$0xff]
    %v3986 = vld [vmem:[%s2678 + $0x173] sm:$0xff]
    %v3987 = vstv %s3954
    %v3988 = vmul.f32 %v3987, %v3955
    %v3989 = vmul.f32 %v3987, %v3956
    %v3990 = vmul.f32 %v3987, %v3957
    %v3991 = vmul.f32 %v3987, %v3958
    %v3992 = vmul.f32 %v3987, %v3959
    %v3993 = vmul.f32 %v3987, %v3960
    %v3994 = vmul.f32 %v3987, %v3961
    %v3995 = vmul.f32 %v3987, %v3962
    %v3996 = vmul.f32 %v3987, %v3963
    %v3997 = vmul.f32 %v3987, %v3964
    %v3998 = vmul.f32 %v3987, %v3965
    %v3999 = vmul.f32 %v3987, %v3966
    %v4000 = vmul.f32 %v3987, %v3967
    %v4001 = vmul.f32 %v3987, %v3968
    %v4002 = vmul.f32 %v3987, %v3969
    %v4003 = vmul.f32 %v3987, %v3970
    %v4004 = vmul.f32 %v3987, %v3971
    %v4005 = vmul.f32 %v3987, %v3972
    %v4006 = vmul.f32 %v3987, %v3973
    %v4007 = vmul.f32 %v3987, %v3974
    %v4008 = vmul.f32 %v3987, %v3975
    %v4009 = vmul.f32 %v3987, %v3976
    %v4010 = vmul.f32 %v3987, %v3977
    %v4011 = vmul.f32 %v3987, %v3978
    %v4012 = vmul.f32 %v3987, %v3979
    %v4013 = vmul.f32 %v3987, %v3980
    %v4014 = vmul.f32 %v3987, %v3981
    %v4015 = vmul.f32 %v3987, %v3982
    %v4016 = vmul.f32 %v3987, %v3983
    %v4017 = vmul.f32 %v3987, %v3984
    %v4018 = vmul.f32 %v3987, %v3985
    %v4019 = vmul.f32 %v3987, %v3986
    %v4020 = vadd.f32 %v3922, %v3988
    %v4021 = vadd.f32 %v3923, %v3989
    %v4022 = vadd.f32 %v3924, %v3990
    %v4023 = vadd.f32 %v3925, %v3991
    %v4024 = vadd.f32 %v3926, %v3992
    %v4025 = vadd.f32 %v3927, %v3993
    %v4026 = vadd.f32 %v3928, %v3994
    %v4027 = vadd.f32 %v3929, %v3995
    %v4028 = vadd.f32 %v3930, %v3996
    %v4029 = vadd.f32 %v3931, %v3997
    %v4030 = vadd.f32 %v3932, %v3998
    %v4031 = vadd.f32 %v3933, %v3999
    %v4032 = vadd.f32 %v3934, %v4000
    %v4033 = vadd.f32 %v3935, %v4001
    %v4034 = vadd.f32 %v3936, %v4002
    %v4035 = vadd.f32 %v3937, %v4003
    %v4036 = vadd.f32 %v3938, %v4004
    %v4037 = vadd.f32 %v3939, %v4005
    %v4038 = vadd.f32 %v3940, %v4006
    %v4039 = vadd.f32 %v3941, %v4007
    %v4040 = vadd.f32 %v3942, %v4008
    %v4041 = vadd.f32 %v3943, %v4009
    %v4042 = vadd.f32 %v3944, %v4010
    %v4043 = vadd.f32 %v3945, %v4011
    %v4044 = vadd.f32 %v3946, %v4012
    %v4045 = vadd.f32 %v3947, %v4013
    %v4046 = vadd.f32 %v3948, %v4014
    %v4047 = vadd.f32 %v3949, %v4015
    %v4048 = vadd.f32 %v3950, %v4016
    %v4049 = vadd.f32 %v3951, %v4017
    %v4050 = vadd.f32 %v3952, %v4018
    %v4051 = vadd.f32 %v3953, %v4019
    %s4052 = sld [smem:[#allocation6 + $0xe]]
    %v4053 = vld [vmem:[%s2678 + $0x4] sm:$0xff]
    %v4054 = vld [vmem:[%s2678 + $0xc] sm:$0xff]
    %v4055 = vld [vmem:[%s2678 + $0x1c] sm:$0xff]
    %v4056 = vld [vmem:[%s2678 + $0x24] sm:$0xff]
    %v4057 = vld [vmem:[%s2678 + $0x34] sm:$0xff]
    %v4058 = vld [vmem:[%s2678 + $0x3c] sm:$0xff]
    %v4059 = vld [vmem:[%s2678 + $0x4c] sm:$0xff]
    %v4060 = vld [vmem:[%s2678 + $0x54] sm:$0xff]
    %v4061 = vld [vmem:[%s2678 + $0x64] sm:$0xff]
    %v4062 = vld [vmem:[%s2678 + $0x6c] sm:$0xff]
    %v4063 = vld [vmem:[%s2678 + $0x7c] sm:$0xff]
    %v4064 = vld [vmem:[%s2678 + $0x84] sm:$0xff]
    %v4065 = vld [vmem:[%s2678 + $0x94] sm:$0xff]
    %v4066 = vld [vmem:[%s2678 + $0x9c] sm:$0xff]
    %v4067 = vld [vmem:[%s2678 + $0xac] sm:$0xff]
    %v4068 = vld [vmem:[%s2678 + $0xb4] sm:$0xff]
    %v4069 = vld [vmem:[%s2678 + $0xc4] sm:$0xff]
    %v4070 = vld [vmem:[%s2678 + $0xcc] sm:$0xff]
    %v4071 = vld [vmem:[%s2678 + $0xdc] sm:$0xff]
    %v4072 = vld [vmem:[%s2678 + $0xe4] sm:$0xff]
    %v4073 = vld [vmem:[%s2678 + $0xf4] sm:$0xff]
    %v4074 = vld [vmem:[%s2678 + $0xfc] sm:$0xff]
    %v4075 = vld [vmem:[%s2678 + $0x10c] sm:$0xff]
    %v4076 = vld [vmem:[%s2678 + $0x114] sm:$0xff]
    %v4077 = vld [vmem:[%s2678 + $0x124] sm:$0xff]
    %v4078 = vld [vmem:[%s2678 + $0x12c] sm:$0xff]
    %v4079 = vld [vmem:[%s2678 + $0x13c] sm:$0xff]
    %v4080 = vld [vmem:[%s2678 + $0x144] sm:$0xff]
    %v4081 = vld [vmem:[%s2678 + $0x154] sm:$0xff]
    %v4082 = vld [vmem:[%s2678 + $0x15c] sm:$0xff]
    %v4083 = vld [vmem:[%s2678 + $0x16c] sm:$0xff]
    %v4084 = vld [vmem:[%s2678 + $0x174] sm:$0xff]
    %v4085 = vstv %s4052
    %v4086 = vmul.f32 %v4085, %v4053
    %v4087 = vmul.f32 %v4085, %v4054
    %v4088 = vmul.f32 %v4085, %v4055
    %v4089 = vmul.f32 %v4085, %v4056
    %v4090 = vmul.f32 %v4085, %v4057
    %v4091 = vmul.f32 %v4085, %v4058
    %v4092 = vmul.f32 %v4085, %v4059
    %v4093 = vmul.f32 %v4085, %v4060
    %v4094 = vmul.f32 %v4085, %v4061
    %v4095 = vmul.f32 %v4085, %v4062
    %v4096 = vmul.f32 %v4085, %v4063
    %v4097 = vmul.f32 %v4085, %v4064
    %v4098 = vmul.f32 %v4085, %v4065
    %v4099 = vmul.f32 %v4085, %v4066
    %v4100 = vmul.f32 %v4085, %v4067
    %v4101 = vmul.f32 %v4085, %v4068
    %v4102 = vmul.f32 %v4085, %v4069
    %v4103 = vmul.f32 %v4085, %v4070
    %v4104 = vmul.f32 %v4085, %v4071
    %v4105 = vmul.f32 %v4085, %v4072
    %v4106 = vmul.f32 %v4085, %v4073
    %v4107 = vmul.f32 %v4085, %v4074
    %v4108 = vmul.f32 %v4085, %v4075
    %v4109 = vmul.f32 %v4085, %v4076
    %v4110 = vmul.f32 %v4085, %v4077
    %v4111 = vmul.f32 %v4085, %v4078
    %v4112 = vmul.f32 %v4085, %v4079
    %v4113 = vmul.f32 %v4085, %v4080
    %v4114 = vmul.f32 %v4085, %v4081
    %v4115 = vmul.f32 %v4085, %v4082
    %v4116 = vmul.f32 %v4085, %v4083
    %v4117 = vmul.f32 %v4085, %v4084
    %v4118 = vadd.f32 %v4020, %v4086
    %v4119 = vadd.f32 %v4021, %v4087
    %v4120 = vadd.f32 %v4022, %v4088
    %v4121 = vadd.f32 %v4023, %v4089
    %v4122 = vadd.f32 %v4024, %v4090
    %v4123 = vadd.f32 %v4025, %v4091
    %v4124 = vadd.f32 %v4026, %v4092
    %v4125 = vadd.f32 %v4027, %v4093
    %v4126 = vadd.f32 %v4028, %v4094
    %v4127 = vadd.f32 %v4029, %v4095
    %v4128 = vadd.f32 %v4030, %v4096
    %v4129 = vadd.f32 %v4031, %v4097
    %v4130 = vadd.f32 %v4032, %v4098
    %v4131 = vadd.f32 %v4033, %v4099
    %v4132 = vadd.f32 %v4034, %v4100
    %v4133 = vadd.f32 %v4035, %v4101
    %v4134 = vadd.f32 %v4036, %v4102
    %v4135 = vadd.f32 %v4037, %v4103
    %v4136 = vadd.f32 %v4038, %v4104
    %v4137 = vadd.f32 %v4039, %v4105
    %v4138 = vadd.f32 %v4040, %v4106
    %v4139 = vadd.f32 %v4041, %v4107
    %v4140 = vadd.f32 %v4042, %v4108
    %v4141 = vadd.f32 %v4043, %v4109
    %v4142 = vadd.f32 %v4044, %v4110
    %v4143 = vadd.f32 %v4045, %v4111
    %v4144 = vadd.f32 %v4046, %v4112
    %v4145 = vadd.f32 %v4047, %v4113
    %v4146 = vadd.f32 %v4048, %v4114
    %v4147 = vadd.f32 %v4049, %v4115
    %v4148 = vadd.f32 %v4050, %v4116
    %v4149 = vadd.f32 %v4051, %v4117
    %s4150 = sld [smem:[#allocation6 + $0xf]]
    %s4151 = scalar_lea.vmem [#allocation2], 72
    %v4152 = vld [vmem:[%s4151] sm:$0xff]
    %v4153 = vld [vmem:[%s4151 + $0x8] sm:$0xff]
    %v4154 = vld [vmem:[%s4151 + $0x18] sm:$0xff]
    %v4155 = vld [vmem:[%s4151 + $0x20] sm:$0xff]
    %v4156 = vld [vmem:[%s4151 + $0x30] sm:$0xff]
    %v4157 = vld [vmem:[%s4151 + $0x38] sm:$0xff]
    %v4158 = vld [vmem:[%s4151 + $0x48] sm:$0xff]
    %v4159 = vld [vmem:[%s4151 + $0x50] sm:$0xff]
    %v4160 = vld [vmem:[%s4151 + $0x60] sm:$0xff]
    %v4161 = vld [vmem:[%s4151 + $0x68] sm:$0xff]
    %v4162 = vld [vmem:[%s4151 + $0x78] sm:$0xff]
    %v4163 = vld [vmem:[%s4151 + $0x80] sm:$0xff]
    %v4164 = vld [vmem:[%s4151 + $0x90] sm:$0xff]
    %v4165 = vld [vmem:[%s4151 + $0x98] sm:$0xff]
    %v4166 = vld [vmem:[%s4151 + $0xa8] sm:$0xff]
    %v4167 = vld [vmem:[%s4151 + $0xb0] sm:$0xff]
    %v4168 = vld [vmem:[%s4151 + $0xc0] sm:$0xff]
    %v4169 = vld [vmem:[%s4151 + $0xc8] sm:$0xff]
    %v4170 = vld [vmem:[%s4151 + $0xd8] sm:$0xff]
    %v4171 = vld [vmem:[%s4151 + $0xe0] sm:$0xff]
    %v4172 = vld [vmem:[%s4151 + $0xf0] sm:$0xff]
    %v4173 = vld [vmem:[%s4151 + $0xf8] sm:$0xff]
    %v4174 = vld [vmem:[%s4151 + $0x108] sm:$0xff]
    %v4175 = vld [vmem:[%s4151 + $0x110] sm:$0xff]
    %v4176 = vld [vmem:[%s4151 + $0x120] sm:$0xff]
    %v4177 = vld [vmem:[%s4151 + $0x128] sm:$0xff]
    %v4178 = vld [vmem:[%s4151 + $0x138] sm:$0xff]
    %v4179 = vld [vmem:[%s4151 + $0x140] sm:$0xff]
    %v4180 = vld [vmem:[%s4151 + $0x150] sm:$0xff]
    %v4181 = vld [vmem:[%s4151 + $0x158] sm:$0xff]
    %v4182 = vld [vmem:[%s4151 + $0x168] sm:$0xff]
    %v4183 = vld [vmem:[%s4151 + $0x170] sm:$0xff]
    %v4184 = vstv %s4150
    %v4185 = vmul.f32 %v4184, %v4152
    %v4186 = vmul.f32 %v4184, %v4153
    %v4187 = vmul.f32 %v4184, %v4154
    %v4188 = vmul.f32 %v4184, %v4155
    %v4189 = vmul.f32 %v4184, %v4156
    %v4190 = vmul.f32 %v4184, %v4157
    %v4191 = vmul.f32 %v4184, %v4158
    %v4192 = vmul.f32 %v4184, %v4159
    %v4193 = vmul.f32 %v4184, %v4160
    %v4194 = vmul.f32 %v4184, %v4161
    %v4195 = vmul.f32 %v4184, %v4162
    %v4196 = vmul.f32 %v4184, %v4163
    %v4197 = vmul.f32 %v4184, %v4164
    %v4198 = vmul.f32 %v4184, %v4165
    %v4199 = vmul.f32 %v4184, %v4166
    %v4200 = vmul.f32 %v4184, %v4167
    %v4201 = vmul.f32 %v4184, %v4168
    %v4202 = vmul.f32 %v4184, %v4169
    %v4203 = vmul.f32 %v4184, %v4170
    %v4204 = vmul.f32 %v4184, %v4171
    %v4205 = vmul.f32 %v4184, %v4172
    %v4206 = vmul.f32 %v4184, %v4173
    %v4207 = vmul.f32 %v4184, %v4174
    %v4208 = vmul.f32 %v4184, %v4175
    %v4209 = vmul.f32 %v4184, %v4176
    %v4210 = vmul.f32 %v4184, %v4177
    %v4211 = vmul.f32 %v4184, %v4178
    %v4212 = vmul.f32 %v4184, %v4179
    %v4213 = vmul.f32 %v4184, %v4180
    %v4214 = vmul.f32 %v4184, %v4181
    %v4215 = vmul.f32 %v4184, %v4182
    %v4216 = vmul.f32 %v4184, %v4183
    %v4217 = vadd.f32 %v4118, %v4185
    %v4218 = vadd.f32 %v4119, %v4186
    %v4219 = vadd.f32 %v4120, %v4187
    %v4220 = vadd.f32 %v4121, %v4188
    %v4221 = vadd.f32 %v4122, %v4189
    %v4222 = vadd.f32 %v4123, %v4190
    %v4223 = vadd.f32 %v4124, %v4191
    %v4224 = vadd.f32 %v4125, %v4192
    %v4225 = vadd.f32 %v4126, %v4193
    %v4226 = vadd.f32 %v4127, %v4194
    %v4227 = vadd.f32 %v4128, %v4195
    %v4228 = vadd.f32 %v4129, %v4196
    %v4229 = vadd.f32 %v4130, %v4197
    %v4230 = vadd.f32 %v4131, %v4198
    %v4231 = vadd.f32 %v4132, %v4199
    %v4232 = vadd.f32 %v4133, %v4200
    %v4233 = vadd.f32 %v4134, %v4201
    %v4234 = vadd.f32 %v4135, %v4202
    %v4235 = vadd.f32 %v4136, %v4203
    %v4236 = vadd.f32 %v4137, %v4204
    %v4237 = vadd.f32 %v4138, %v4205
    %v4238 = vadd.f32 %v4139, %v4206
    %v4239 = vadd.f32 %v4140, %v4207
    %v4240 = vadd.f32 %v4141, %v4208
    %v4241 = vadd.f32 %v4142, %v4209
    %v4242 = vadd.f32 %v4143, %v4210
    %v4243 = vadd.f32 %v4144, %v4211
    %v4244 = vadd.f32 %v4145, %v4212
    %v4245 = vadd.f32 %v4146, %v4213
    %v4246 = vadd.f32 %v4147, %v4214
    %v4247 = vadd.f32 %v4148, %v4215
    %v4248 = vadd.f32 %v4149, %v4216
    %s4249 = sld [smem:[#allocation6 + $0x10]]
    %v4250 = vld [vmem:[%s4151 + $0x1] sm:$0xff]
    %v4251 = vld [vmem:[%s4151 + $0x9] sm:$0xff]
    %v4252 = vld [vmem:[%s4151 + $0x19] sm:$0xff]
    %v4253 = vld [vmem:[%s4151 + $0x21] sm:$0xff]
    %v4254 = vld [vmem:[%s4151 + $0x31] sm:$0xff]
    %v4255 = vld [vmem:[%s4151 + $0x39] sm:$0xff]
    %v4256 = vld [vmem:[%s4151 + $0x49] sm:$0xff]
    %v4257 = vld [vmem:[%s4151 + $0x51] sm:$0xff]
    %v4258 = vld [vmem:[%s4151 + $0x61] sm:$0xff]
    %v4259 = vld [vmem:[%s4151 + $0x69] sm:$0xff]
    %v4260 = vld [vmem:[%s4151 + $0x79] sm:$0xff]
    %v4261 = vld [vmem:[%s4151 + $0x81] sm:$0xff]
    %v4262 = vld [vmem:[%s4151 + $0x91] sm:$0xff]
    %v4263 = vld [vmem:[%s4151 + $0x99] sm:$0xff]
    %v4264 = vld [vmem:[%s4151 + $0xa9] sm:$0xff]
    %v4265 = vld [vmem:[%s4151 + $0xb1] sm:$0xff]
    %v4266 = vld [vmem:[%s4151 + $0xc1] sm:$0xff]
    %v4267 = vld [vmem:[%s4151 + $0xc9] sm:$0xff]
    %v4268 = vld [vmem:[%s4151 + $0xd9] sm:$0xff]
    %v4269 = vld [vmem:[%s4151 + $0xe1] sm:$0xff]
    %v4270 = vld [vmem:[%s4151 + $0xf1] sm:$0xff]
    %v4271 = vld [vmem:[%s4151 + $0xf9] sm:$0xff]
    %v4272 = vld [vmem:[%s4151 + $0x109] sm:$0xff]
    %v4273 = vld [vmem:[%s4151 + $0x111] sm:$0xff]
    %v4274 = vld [vmem:[%s4151 + $0x121] sm:$0xff]
    %v4275 = vld [vmem:[%s4151 + $0x129] sm:$0xff]
    %v4276 = vld [vmem:[%s4151 + $0x139] sm:$0xff]
    %v4277 = vld [vmem:[%s4151 + $0x141] sm:$0xff]
    %v4278 = vld [vmem:[%s4151 + $0x151] sm:$0xff]
    %v4279 = vld [vmem:[%s4151 + $0x159] sm:$0xff]
    %v4280 = vld [vmem:[%s4151 + $0x169] sm:$0xff]
    %v4281 = vld [vmem:[%s4151 + $0x171] sm:$0xff]
    %v4282 = vstv %s4249
    %v4283 = vmul.f32 %v4282, %v4250
    %v4284 = vmul.f32 %v4282, %v4251
    %v4285 = vmul.f32 %v4282, %v4252
    %v4286 = vmul.f32 %v4282, %v4253
    %v4287 = vmul.f32 %v4282, %v4254
    %v4288 = vmul.f32 %v4282, %v4255
    %v4289 = vmul.f32 %v4282, %v4256
    %v4290 = vmul.f32 %v4282, %v4257
    %v4291 = vmul.f32 %v4282, %v4258
    %v4292 = vmul.f32 %v4282, %v4259
    %v4293 = vmul.f32 %v4282, %v4260
    %v4294 = vmul.f32 %v4282, %v4261
    %v4295 = vmul.f32 %v4282, %v4262
    %v4296 = vmul.f32 %v4282, %v4263
    %v4297 = vmul.f32 %v4282, %v4264
    %v4298 = vmul.f32 %v4282, %v4265
    %v4299 = vmul.f32 %v4282, %v4266
    %v4300 = vmul.f32 %v4282, %v4267
    %v4301 = vmul.f32 %v4282, %v4268
    %v4302 = vmul.f32 %v4282, %v4269
    %v4303 = vmul.f32 %v4282, %v4270
    %v4304 = vmul.f32 %v4282, %v4271
    %v4305 = vmul.f32 %v4282, %v4272
    %v4306 = vmul.f32 %v4282, %v4273
    %v4307 = vmul.f32 %v4282, %v4274
    %v4308 = vmul.f32 %v4282, %v4275
    %v4309 = vmul.f32 %v4282, %v4276
    %v4310 = vmul.f32 %v4282, %v4277
    %v4311 = vmul.f32 %v4282, %v4278
    %v4312 = vmul.f32 %v4282, %v4279
    %v4313 = vmul.f32 %v4282, %v4280
    %v4314 = vmul.f32 %v4282, %v4281
    %v4315 = vadd.f32 %v4217, %v4283
    %v4316 = vadd.f32 %v4218, %v4284
    %v4317 = vadd.f32 %v4219, %v4285
    %v4318 = vadd.f32 %v4220, %v4286
    %v4319 = vadd.f32 %v4221, %v4287
    %v4320 = vadd.f32 %v4222, %v4288
    %v4321 = vadd.f32 %v4223, %v4289
    %v4322 = vadd.f32 %v4224, %v4290
    %v4323 = vadd.f32 %v4225, %v4291
    %v4324 = vadd.f32 %v4226, %v4292
    %v4325 = vadd.f32 %v4227, %v4293
    %v4326 = vadd.f32 %v4228, %v4294
    %v4327 = vadd.f32 %v4229, %v4295
    %v4328 = vadd.f32 %v4230, %v4296
    %v4329 = vadd.f32 %v4231, %v4297
    %v4330 = vadd.f32 %v4232, %v4298
    %v4331 = vadd.f32 %v4233, %v4299
    %v4332 = vadd.f32 %v4234, %v4300
    %v4333 = vadd.f32 %v4235, %v4301
    %v4334 = vadd.f32 %v4236, %v4302
    %v4335 = vadd.f32 %v4237, %v4303
    %v4336 = vadd.f32 %v4238, %v4304
    %v4337 = vadd.f32 %v4239, %v4305
    %v4338 = vadd.f32 %v4240, %v4306
    %v4339 = vadd.f32 %v4241, %v4307
    %v4340 = vadd.f32 %v4242, %v4308
    %v4341 = vadd.f32 %v4243, %v4309
    %v4342 = vadd.f32 %v4244, %v4310
    %v4343 = vadd.f32 %v4245, %v4311
    %v4344 = vadd.f32 %v4246, %v4312
    %v4345 = vadd.f32 %v4247, %v4313
    %v4346 = vadd.f32 %v4248, %v4314
    %s4347 = sld [smem:[#allocation6 + $0x11]]
    %v4348 = vld [vmem:[%s4151 + $0x2] sm:$0xff]
    %v4349 = vld [vmem:[%s4151 + $0xa] sm:$0xff]
    %v4350 = vld [vmem:[%s4151 + $0x1a] sm:$0xff]
    %v4351 = vld [vmem:[%s4151 + $0x22] sm:$0xff]
    %v4352 = vld [vmem:[%s4151 + $0x32] sm:$0xff]
    %v4353 = vld [vmem:[%s4151 + $0x3a] sm:$0xff]
    %v4354 = vld [vmem:[%s4151 + $0x4a] sm:$0xff]
    %v4355 = vld [vmem:[%s4151 + $0x52] sm:$0xff]
    %v4356 = vld [vmem:[%s4151 + $0x62] sm:$0xff]
    %v4357 = vld [vmem:[%s4151 + $0x6a] sm:$0xff]
    %v4358 = vld [vmem:[%s4151 + $0x7a] sm:$0xff]
    %v4359 = vld [vmem:[%s4151 + $0x82] sm:$0xff]
    %v4360 = vld [vmem:[%s4151 + $0x92] sm:$0xff]
    %v4361 = vld [vmem:[%s4151 + $0x9a] sm:$0xff]
    %v4362 = vld [vmem:[%s4151 + $0xaa] sm:$0xff]
    %v4363 = vld [vmem:[%s4151 + $0xb2] sm:$0xff]
    %v4364 = vld [vmem:[%s4151 + $0xc2] sm:$0xff]
    %v4365 = vld [vmem:[%s4151 + $0xca] sm:$0xff]
    %v4366 = vld [vmem:[%s4151 + $0xda] sm:$0xff]
    %v4367 = vld [vmem:[%s4151 + $0xe2] sm:$0xff]
    %v4368 = vld [vmem:[%s4151 + $0xf2] sm:$0xff]
    %v4369 = vld [vmem:[%s4151 + $0xfa] sm:$0xff]
    %v4370 = vld [vmem:[%s4151 + $0x10a] sm:$0xff]
    %v4371 = vld [vmem:[%s4151 + $0x112] sm:$0xff]
    %v4372 = vld [vmem:[%s4151 + $0x122] sm:$0xff]
    %v4373 = vld [vmem:[%s4151 + $0x12a] sm:$0xff]
    %v4374 = vld [vmem:[%s4151 + $0x13a] sm:$0xff]
    %v4375 = vld [vmem:[%s4151 + $0x142] sm:$0xff]
    %v4376 = vld [vmem:[%s4151 + $0x152] sm:$0xff]
    %v4377 = vld [vmem:[%s4151 + $0x15a] sm:$0xff]
    %v4378 = vld [vmem:[%s4151 + $0x16a] sm:$0xff]
    %v4379 = vld [vmem:[%s4151 + $0x172] sm:$0xff]
    %v4380 = vstv %s4347
    %v4381 = vmul.f32 %v4380, %v4348
    %v4382 = vmul.f32 %v4380, %v4349
    %v4383 = vmul.f32 %v4380, %v4350
    %v4384 = vmul.f32 %v4380, %v4351
    %v4385 = vmul.f32 %v4380, %v4352
    %v4386 = vmul.f32 %v4380, %v4353
    %v4387 = vmul.f32 %v4380, %v4354
    %v4388 = vmul.f32 %v4380, %v4355
    %v4389 = vmul.f32 %v4380, %v4356
    %v4390 = vmul.f32 %v4380, %v4357
    %v4391 = vmul.f32 %v4380, %v4358
    %v4392 = vmul.f32 %v4380, %v4359
    %v4393 = vmul.f32 %v4380, %v4360
    %v4394 = vmul.f32 %v4380, %v4361
    %v4395 = vmul.f32 %v4380, %v4362
    %v4396 = vmul.f32 %v4380, %v4363
    %v4397 = vmul.f32 %v4380, %v4364
    %v4398 = vmul.f32 %v4380, %v4365
    %v4399 = vmul.f32 %v4380, %v4366
    %v4400 = vmul.f32 %v4380, %v4367
    %v4401 = vmul.f32 %v4380, %v4368
    %v4402 = vmul.f32 %v4380, %v4369
    %v4403 = vmul.f32 %v4380, %v4370
    %v4404 = vmul.f32 %v4380, %v4371
    %v4405 = vmul.f32 %v4380, %v4372
    %v4406 = vmul.f32 %v4380, %v4373
    %v4407 = vmul.f32 %v4380, %v4374
    %v4408 = vmul.f32 %v4380, %v4375
    %v4409 = vmul.f32 %v4380, %v4376
    %v4410 = vmul.f32 %v4380, %v4377
    %v4411 = vmul.f32 %v4380, %v4378
    %v4412 = vmul.f32 %v4380, %v4379
    %v4413 = vadd.f32 %v4315, %v4381
    %v4414 = vadd.f32 %v4316, %v4382
    %v4415 = vadd.f32 %v4317, %v4383
    %v4416 = vadd.f32 %v4318, %v4384
    %v4417 = vadd.f32 %v4319, %v4385
    %v4418 = vadd.f32 %v4320, %v4386
    %v4419 = vadd.f32 %v4321, %v4387
    %v4420 = vadd.f32 %v4322, %v4388
    %v4421 = vadd.f32 %v4323, %v4389
    %v4422 = vadd.f32 %v4324, %v4390
    %v4423 = vadd.f32 %v4325, %v4391
    %v4424 = vadd.f32 %v4326, %v4392
    %v4425 = vadd.f32 %v4327, %v4393
    %v4426 = vadd.f32 %v4328, %v4394
    %v4427 = vadd.f32 %v4329, %v4395
    %v4428 = vadd.f32 %v4330, %v4396
    %v4429 = vadd.f32 %v4331, %v4397
    %v4430 = vadd.f32 %v4332, %v4398
    %v4431 = vadd.f32 %v4333, %v4399
    %v4432 = vadd.f32 %v4334, %v4400
    %v4433 = vadd.f32 %v4335, %v4401
    %v4434 = vadd.f32 %v4336, %v4402
    %v4435 = vadd.f32 %v4337, %v4403
    %v4436 = vadd.f32 %v4338, %v4404
    %v4437 = vadd.f32 %v4339, %v4405
    %v4438 = vadd.f32 %v4340, %v4406
    %v4439 = vadd.f32 %v4341, %v4407
    %v4440 = vadd.f32 %v4342, %v4408
    %v4441 = vadd.f32 %v4343, %v4409
    %v4442 = vadd.f32 %v4344, %v4410
    %v4443 = vadd.f32 %v4345, %v4411
    %v4444 = vadd.f32 %v4346, %v4412
    %s4445 = sld [smem:[#allocation6 + $0x12]]
    %v4446 = vld [vmem:[%s4151 + $0x3] sm:$0xff]
    %v4447 = vld [vmem:[%s4151 + $0xb] sm:$0xff]
    %v4448 = vld [vmem:[%s4151 + $0x1b] sm:$0xff]
    %v4449 = vld [vmem:[%s4151 + $0x23] sm:$0xff]
    %v4450 = vld [vmem:[%s4151 + $0x33] sm:$0xff]
    %v4451 = vld [vmem:[%s4151 + $0x3b] sm:$0xff]
    %v4452 = vld [vmem:[%s4151 + $0x4b] sm:$0xff]
    %v4453 = vld [vmem:[%s4151 + $0x53] sm:$0xff]
    %v4454 = vld [vmem:[%s4151 + $0x63] sm:$0xff]
    %v4455 = vld [vmem:[%s4151 + $0x6b] sm:$0xff]
    %v4456 = vld [vmem:[%s4151 + $0x7b] sm:$0xff]
    %v4457 = vld [vmem:[%s4151 + $0x83] sm:$0xff]
    %v4458 = vld [vmem:[%s4151 + $0x93] sm:$0xff]
    %v4459 = vld [vmem:[%s4151 + $0x9b] sm:$0xff]
    %v4460 = vld [vmem:[%s4151 + $0xab] sm:$0xff]
    %v4461 = vld [vmem:[%s4151 + $0xb3] sm:$0xff]
    %v4462 = vld [vmem:[%s4151 + $0xc3] sm:$0xff]
    %v4463 = vld [vmem:[%s4151 + $0xcb] sm:$0xff]
    %v4464 = vld [vmem:[%s4151 + $0xdb] sm:$0xff]
    %v4465 = vld [vmem:[%s4151 + $0xe3] sm:$0xff]
    %v4466 = vld [vmem:[%s4151 + $0xf3] sm:$0xff]
    %v4467 = vld [vmem:[%s4151 + $0xfb] sm:$0xff]
    %v4468 = vld [vmem:[%s4151 + $0x10b] sm:$0xff]
    %v4469 = vld [vmem:[%s4151 + $0x113] sm:$0xff]
    %v4470 = vld [vmem:[%s4151 + $0x123] sm:$0xff]
    %v4471 = vld [vmem:[%s4151 + $0x12b] sm:$0xff]
    %v4472 = vld [vmem:[%s4151 + $0x13b] sm:$0xff]
    %v4473 = vld [vmem:[%s4151 + $0x143] sm:$0xff]
    %v4474 = vld [vmem:[%s4151 + $0x153] sm:$0xff]
    %v4475 = vld [vmem:[%s4151 + $0x15b] sm:$0xff]
    %v4476 = vld [vmem:[%s4151 + $0x16b] sm:$0xff]
    %v4477 = vld [vmem:[%s4151 + $0x173] sm:$0xff]
    %v4478 = vstv %s4445
    %v4479 = vmul.f32 %v4478, %v4446
    %v4480 = vmul.f32 %v4478, %v4447
    %v4481 = vmul.f32 %v4478, %v4448
    %v4482 = vmul.f32 %v4478, %v4449
    %v4483 = vmul.f32 %v4478, %v4450
    %v4484 = vmul.f32 %v4478, %v4451
    %v4485 = vmul.f32 %v4478, %v4452
    %v4486 = vmul.f32 %v4478, %v4453
    %v4487 = vmul.f32 %v4478, %v4454
    %v4488 = vmul.f32 %v4478, %v4455
    %v4489 = vmul.f32 %v4478, %v4456
    %v4490 = vmul.f32 %v4478, %v4457
    %v4491 = vmul.f32 %v4478, %v4458
    %v4492 = vmul.f32 %v4478, %v4459
    %v4493 = vmul.f32 %v4478, %v4460
    %v4494 = vmul.f32 %v4478, %v4461
    %v4495 = vmul.f32 %v4478, %v4462
    %v4496 = vmul.f32 %v4478, %v4463
    %v4497 = vmul.f32 %v4478, %v4464
    %v4498 = vmul.f32 %v4478, %v4465
    %v4499 = vmul.f32 %v4478, %v4466
    %v4500 = vmul.f32 %v4478, %v4467
    %v4501 = vmul.f32 %v4478, %v4468
    %v4502 = vmul.f32 %v4478, %v4469
    %v4503 = vmul.f32 %v4478, %v4470
    %v4504 = vmul.f32 %v4478, %v4471
    %v4505 = vmul.f32 %v4478, %v4472
    %v4506 = vmul.f32 %v4478, %v4473
    %v4507 = vmul.f32 %v4478, %v4474
    %v4508 = vmul.f32 %v4478, %v4475
    %v4509 = vmul.f32 %v4478, %v4476
    %v4510 = vmul.f32 %v4478, %v4477
    %v4511 = vadd.f32 %v4413, %v4479
    %v4512 = vadd.f32 %v4414, %v4480
    %v4513 = vadd.f32 %v4415, %v4481
    %v4514 = vadd.f32 %v4416, %v4482
    %v4515 = vadd.f32 %v4417, %v4483
    %v4516 = vadd.f32 %v4418, %v4484
    %v4517 = vadd.f32 %v4419, %v4485
    %v4518 = vadd.f32 %v4420, %v4486
    %v4519 = vadd.f32 %v4421, %v4487
    %v4520 = vadd.f32 %v4422, %v4488
    %v4521 = vadd.f32 %v4423, %v4489
    %v4522 = vadd.f32 %v4424, %v4490
    %v4523 = vadd.f32 %v4425, %v4491
    %v4524 = vadd.f32 %v4426, %v4492
    %v4525 = vadd.f32 %v4427, %v4493
    %v4526 = vadd.f32 %v4428, %v4494
    %v4527 = vadd.f32 %v4429, %v4495
    %v4528 = vadd.f32 %v4430, %v4496
    %v4529 = vadd.f32 %v4431, %v4497
    %v4530 = vadd.f32 %v4432, %v4498
    %v4531 = vadd.f32 %v4433, %v4499
    %v4532 = vadd.f32 %v4434, %v4500
    %v4533 = vadd.f32 %v4435, %v4501
    %v4534 = vadd.f32 %v4436, %v4502
    %v4535 = vadd.f32 %v4437, %v4503
    %v4536 = vadd.f32 %v4438, %v4504
    %v4537 = vadd.f32 %v4439, %v4505
    %v4538 = vadd.f32 %v4440, %v4506
    %v4539 = vadd.f32 %v4441, %v4507
    %v4540 = vadd.f32 %v4442, %v4508
    %v4541 = vadd.f32 %v4443, %v4509
    %v4542 = vadd.f32 %v4444, %v4510
    %s4543 = sld [smem:[#allocation6 + $0x13]]
    %v4544 = vld [vmem:[%s4151 + $0x4] sm:$0xff]
    %v4545 = vld [vmem:[%s4151 + $0xc] sm:$0xff]
    %v4546 = vld [vmem:[%s4151 + $0x1c] sm:$0xff]
    %v4547 = vld [vmem:[%s4151 + $0x24] sm:$0xff]
    %v4548 = vld [vmem:[%s4151 + $0x34] sm:$0xff]
    %v4549 = vld [vmem:[%s4151 + $0x3c] sm:$0xff]
    %v4550 = vld [vmem:[%s4151 + $0x4c] sm:$0xff]
    %v4551 = vld [vmem:[%s4151 + $0x54] sm:$0xff]
    %v4552 = vld [vmem:[%s4151 + $0x64] sm:$0xff]
    %v4553 = vld [vmem:[%s4151 + $0x6c] sm:$0xff]
    %v4554 = vld [vmem:[%s4151 + $0x7c] sm:$0xff]
    %v4555 = vld [vmem:[%s4151 + $0x84] sm:$0xff]
    %v4556 = vld [vmem:[%s4151 + $0x94] sm:$0xff]
    %v4557 = vld [vmem:[%s4151 + $0x9c] sm:$0xff]
    %v4558 = vld [vmem:[%s4151 + $0xac] sm:$0xff]
    %v4559 = vld [vmem:[%s4151 + $0xb4] sm:$0xff]
    %v4560 = vld [vmem:[%s4151 + $0xc4] sm:$0xff]
    %v4561 = vld [vmem:[%s4151 + $0xcc] sm:$0xff]
    %v4562 = vld [vmem:[%s4151 + $0xdc] sm:$0xff]
    %v4563 = vld [vmem:[%s4151 + $0xe4] sm:$0xff]
    %v4564 = vld [vmem:[%s4151 + $0xf4] sm:$0xff]
    %v4565 = vld [vmem:[%s4151 + $0xfc] sm:$0xff]
    %v4566 = vld [vmem:[%s4151 + $0x10c] sm:$0xff]
    %v4567 = vld [vmem:[%s4151 + $0x114] sm:$0xff]
    %v4568 = vld [vmem:[%s4151 + $0x124] sm:$0xff]
    %v4569 = vld [vmem:[%s4151 + $0x12c] sm:$0xff]
    %v4570 = vld [vmem:[%s4151 + $0x13c] sm:$0xff]
    %v4571 = vld [vmem:[%s4151 + $0x144] sm:$0xff]
    %v4572 = vld [vmem:[%s4151 + $0x154] sm:$0xff]
    %v4573 = vld [vmem:[%s4151 + $0x15c] sm:$0xff]
    %v4574 = vld [vmem:[%s4151 + $0x16c] sm:$0xff]
    %v4575 = vld [vmem:[%s4151 + $0x174] sm:$0xff]
    %v4576 = vstv %s4543
    %v4577 = vmul.f32 %v4576, %v4544
    %v4578 = vmul.f32 %v4576, %v4545
    %v4579 = vmul.f32 %v4576, %v4546
    %v4580 = vmul.f32 %v4576, %v4547
    %v4581 = vmul.f32 %v4576, %v4548
    %v4582 = vmul.f32 %v4576, %v4549
    %v4583 = vmul.f32 %v4576, %v4550
    %v4584 = vmul.f32 %v4576, %v4551
    %v4585 = vmul.f32 %v4576, %v4552
    %v4586 = vmul.f32 %v4576, %v4553
    %v4587 = vmul.f32 %v4576, %v4554
    %v4588 = vmul.f32 %v4576, %v4555
    %v4589 = vmul.f32 %v4576, %v4556
    %v4590 = vmul.f32 %v4576, %v4557
    %v4591 = vmul.f32 %v4576, %v4558
    %v4592 = vmul.f32 %v4576, %v4559
    %v4593 = vmul.f32 %v4576, %v4560
    %v4594 = vmul.f32 %v4576, %v4561
    %v4595 = vmul.f32 %v4576, %v4562
    %v4596 = vmul.f32 %v4576, %v4563
    %v4597 = vmul.f32 %v4576, %v4564
    %v4598 = vmul.f32 %v4576, %v4565
    %v4599 = vmul.f32 %v4576, %v4566
    %v4600 = vmul.f32 %v4576, %v4567
    %v4601 = vmul.f32 %v4576, %v4568
    %v4602 = vmul.f32 %v4576, %v4569
    %v4603 = vmul.f32 %v4576, %v4570
    %v4604 = vmul.f32 %v4576, %v4571
    %v4605 = vmul.f32 %v4576, %v4572
    %v4606 = vmul.f32 %v4576, %v4573
    %v4607 = vmul.f32 %v4576, %v4574
    %v4608 = vmul.f32 %v4576, %v4575
    %v4609 = vadd.f32 %v4511, %v4577
    %v4610 = vadd.f32 %v4512, %v4578
    %v4611 = vadd.f32 %v4513, %v4579
    %v4612 = vadd.f32 %v4514, %v4580
    %v4613 = vadd.f32 %v4515, %v4581
    %v4614 = vadd.f32 %v4516, %v4582
    %v4615 = vadd.f32 %v4517, %v4583
    %v4616 = vadd.f32 %v4518, %v4584
    %v4617 = vadd.f32 %v4519, %v4585
    %v4618 = vadd.f32 %v4520, %v4586
    %v4619 = vadd.f32 %v4521, %v4587
    %v4620 = vadd.f32 %v4522, %v4588
    %v4621 = vadd.f32 %v4523, %v4589
    %v4622 = vadd.f32 %v4524, %v4590
    %v4623 = vadd.f32 %v4525, %v4591
    %v4624 = vadd.f32 %v4526, %v4592
    %v4625 = vadd.f32 %v4527, %v4593
    %v4626 = vadd.f32 %v4528, %v4594
    %v4627 = vadd.f32 %v4529, %v4595
    %v4628 = vadd.f32 %v4530, %v4596
    %v4629 = vadd.f32 %v4531, %v4597
    %v4630 = vadd.f32 %v4532, %v4598
    %v4631 = vadd.f32 %v4533, %v4599
    %v4632 = vadd.f32 %v4534, %v4600
    %v4633 = vadd.f32 %v4535, %v4601
    %v4634 = vadd.f32 %v4536, %v4602
    %v4635 = vadd.f32 %v4537, %v4603
    %v4636 = vadd.f32 %v4538, %v4604
    %v4637 = vadd.f32 %v4539, %v4605
    %v4638 = vadd.f32 %v4540, %v4606
    %v4639 = vadd.f32 %v4541, %v4607
    %v4640 = vadd.f32 %v4542, %v4608
    %s4641 = sld [smem:[#allocation6 + $0x14]]
    %s4642 = scalar_lea.vmem [#allocation2], 96
    %v4643 = vld [vmem:[%s4642] sm:$0xff]
    %v4644 = vld [vmem:[%s4642 + $0x8] sm:$0xff]
    %v4645 = vld [vmem:[%s4642 + $0x18] sm:$0xff]
    %v4646 = vld [vmem:[%s4642 + $0x20] sm:$0xff]
    %v4647 = vld [vmem:[%s4642 + $0x30] sm:$0xff]
    %v4648 = vld [vmem:[%s4642 + $0x38] sm:$0xff]
    %v4649 = vld [vmem:[%s4642 + $0x48] sm:$0xff]
    %v4650 = vld [vmem:[%s4642 + $0x50] sm:$0xff]
    %v4651 = vld [vmem:[%s4642 + $0x60] sm:$0xff]
    %v4652 = vld [vmem:[%s4642 + $0x68] sm:$0xff]
    %v4653 = vld [vmem:[%s4642 + $0x78] sm:$0xff]
    %v4654 = vld [vmem:[%s4642 + $0x80] sm:$0xff]
    %v4655 = vld [vmem:[%s4642 + $0x90] sm:$0xff]
    %v4656 = vld [vmem:[%s4642 + $0x98] sm:$0xff]
    %v4657 = vld [vmem:[%s4642 + $0xa8] sm:$0xff]
    %v4658 = vld [vmem:[%s4642 + $0xb0] sm:$0xff]
    %v4659 = vld [vmem:[%s4642 + $0xc0] sm:$0xff]
    %v4660 = vld [vmem:[%s4642 + $0xc8] sm:$0xff]
    %v4661 = vld [vmem:[%s4642 + $0xd8] sm:$0xff]
    %v4662 = vld [vmem:[%s4642 + $0xe0] sm:$0xff]
    %v4663 = vld [vmem:[%s4642 + $0xf0] sm:$0xff]
    %v4664 = vld [vmem:[%s4642 + $0xf8] sm:$0xff]
    %v4665 = vld [vmem:[%s4642 + $0x108] sm:$0xff]
    %v4666 = vld [vmem:[%s4642 + $0x110] sm:$0xff]
    %v4667 = vld [vmem:[%s4642 + $0x120] sm:$0xff]
    %v4668 = vld [vmem:[%s4642 + $0x128] sm:$0xff]
    %v4669 = vld [vmem:[%s4642 + $0x138] sm:$0xff]
    %v4670 = vld [vmem:[%s4642 + $0x140] sm:$0xff]
    %v4671 = vld [vmem:[%s4642 + $0x150] sm:$0xff]
    %v4672 = vld [vmem:[%s4642 + $0x158] sm:$0xff]
    %v4673 = vld [vmem:[%s4642 + $0x168] sm:$0xff]
    %v4674 = vld [vmem:[%s4642 + $0x170] sm:$0xff]
    %v4675 = vstv %s4641
    %v4676 = vmul.f32 %v4675, %v4643
    %v4677 = vmul.f32 %v4675, %v4644
    %v4678 = vmul.f32 %v4675, %v4645
    %v4679 = vmul.f32 %v4675, %v4646
    %v4680 = vmul.f32 %v4675, %v4647
    %v4681 = vmul.f32 %v4675, %v4648
    %v4682 = vmul.f32 %v4675, %v4649
    %v4683 = vmul.f32 %v4675, %v4650
    %v4684 = vmul.f32 %v4675, %v4651
    %v4685 = vmul.f32 %v4675, %v4652
    %v4686 = vmul.f32 %v4675, %v4653
    %v4687 = vmul.f32 %v4675, %v4654
    %v4688 = vmul.f32 %v4675, %v4655
    %v4689 = vmul.f32 %v4675, %v4656
    %v4690 = vmul.f32 %v4675, %v4657
    %v4691 = vmul.f32 %v4675, %v4658
    %v4692 = vmul.f32 %v4675, %v4659
    %v4693 = vmul.f32 %v4675, %v4660
    %v4694 = vmul.f32 %v4675, %v4661
    %v4695 = vmul.f32 %v4675, %v4662
    %v4696 = vmul.f32 %v4675, %v4663
    %v4697 = vmul.f32 %v4675, %v4664
    %v4698 = vmul.f32 %v4675, %v4665
    %v4699 = vmul.f32 %v4675, %v4666
    %v4700 = vmul.f32 %v4675, %v4667
    %v4701 = vmul.f32 %v4675, %v4668
    %v4702 = vmul.f32 %v4675, %v4669
    %v4703 = vmul.f32 %v4675, %v4670
    %v4704 = vmul.f32 %v4675, %v4671
    %v4705 = vmul.f32 %v4675, %v4672
    %v4706 = vmul.f32 %v4675, %v4673
    %v4707 = vmul.f32 %v4675, %v4674
    %v4708 = vadd.f32 %v4609, %v4676
    %v4709 = vadd.f32 %v4610, %v4677
    %v4710 = vadd.f32 %v4611, %v4678
    %v4711 = vadd.f32 %v4612, %v4679
    %v4712 = vadd.f32 %v4613, %v4680
    %v4713 = vadd.f32 %v4614, %v4681
    %v4714 = vadd.f32 %v4615, %v4682
    %v4715 = vadd.f32 %v4616, %v4683
    %v4716 = vadd.f32 %v4617, %v4684
    %v4717 = vadd.f32 %v4618, %v4685
    %v4718 = vadd.f32 %v4619, %v4686
    %v4719 = vadd.f32 %v4620, %v4687
    %v4720 = vadd.f32 %v4621, %v4688
    %v4721 = vadd.f32 %v4622, %v4689
    %v4722 = vadd.f32 %v4623, %v4690
    %v4723 = vadd.f32 %v4624, %v4691
    %v4724 = vadd.f32 %v4625, %v4692
    %v4725 = vadd.f32 %v4626, %v4693
    %v4726 = vadd.f32 %v4627, %v4694
    %v4727 = vadd.f32 %v4628, %v4695
    %v4728 = vadd.f32 %v4629, %v4696
    %v4729 = vadd.f32 %v4630, %v4697
    %v4730 = vadd.f32 %v4631, %v4698
    %v4731 = vadd.f32 %v4632, %v4699
    %v4732 = vadd.f32 %v4633, %v4700
    %v4733 = vadd.f32 %v4634, %v4701
    %v4734 = vadd.f32 %v4635, %v4702
    %v4735 = vadd.f32 %v4636, %v4703
    %v4736 = vadd.f32 %v4637, %v4704
    %v4737 = vadd.f32 %v4638, %v4705
    %v4738 = vadd.f32 %v4639, %v4706
    %v4739 = vadd.f32 %v4640, %v4707
    %s4740 = sld [smem:[#allocation6 + $0x15]]
    %v4741 = vld [vmem:[%s4642 + $0x1] sm:$0xff]
    %v4742 = vld [vmem:[%s4642 + $0x9] sm:$0xff]
    %v4743 = vld [vmem:[%s4642 + $0x19] sm:$0xff]
    %v4744 = vld [vmem:[%s4642 + $0x21] sm:$0xff]
    %v4745 = vld [vmem:[%s4642 + $0x31] sm:$0xff]
    %v4746 = vld [vmem:[%s4642 + $0x39] sm:$0xff]
    %v4747 = vld [vmem:[%s4642 + $0x49] sm:$0xff]
    %v4748 = vld [vmem:[%s4642 + $0x51] sm:$0xff]
    %v4749 = vld [vmem:[%s4642 + $0x61] sm:$0xff]
    %v4750 = vld [vmem:[%s4642 + $0x69] sm:$0xff]
    %v4751 = vld [vmem:[%s4642 + $0x79] sm:$0xff]
    %v4752 = vld [vmem:[%s4642 + $0x81] sm:$0xff]
    %v4753 = vld [vmem:[%s4642 + $0x91] sm:$0xff]
    %v4754 = vld [vmem:[%s4642 + $0x99] sm:$0xff]
    %v4755 = vld [vmem:[%s4642 + $0xa9] sm:$0xff]
    %v4756 = vld [vmem:[%s4642 + $0xb1] sm:$0xff]
    %v4757 = vld [vmem:[%s4642 + $0xc1] sm:$0xff]
    %v4758 = vld [vmem:[%s4642 + $0xc9] sm:$0xff]
    %v4759 = vld [vmem:[%s4642 + $0xd9] sm:$0xff]
    %v4760 = vld [vmem:[%s4642 + $0xe1] sm:$0xff]
    %v4761 = vld [vmem:[%s4642 + $0xf1] sm:$0xff]
    %v4762 = vld [vmem:[%s4642 + $0xf9] sm:$0xff]
    %v4763 = vld [vmem:[%s4642 + $0x109] sm:$0xff]
    %v4764 = vld [vmem:[%s4642 + $0x111] sm:$0xff]
    %v4765 = vld [vmem:[%s4642 + $0x121] sm:$0xff]
    %v4766 = vld [vmem:[%s4642 + $0x129] sm:$0xff]
    %v4767 = vld [vmem:[%s4642 + $0x139] sm:$0xff]
    %v4768 = vld [vmem:[%s4642 + $0x141] sm:$0xff]
    %v4769 = vld [vmem:[%s4642 + $0x151] sm:$0xff]
    %v4770 = vld [vmem:[%s4642 + $0x159] sm:$0xff]
    %v4771 = vld [vmem:[%s4642 + $0x169] sm:$0xff]
    %v4772 = vld [vmem:[%s4642 + $0x171] sm:$0xff]
    %v4773 = vstv %s4740
    %v4774 = vmul.f32 %v4773, %v4741
    %v4775 = vmul.f32 %v4773, %v4742
    %v4776 = vmul.f32 %v4773, %v4743
    %v4777 = vmul.f32 %v4773, %v4744
    %v4778 = vmul.f32 %v4773, %v4745
    %v4779 = vmul.f32 %v4773, %v4746
    %v4780 = vmul.f32 %v4773, %v4747
    %v4781 = vmul.f32 %v4773, %v4748
    %v4782 = vmul.f32 %v4773, %v4749
    %v4783 = vmul.f32 %v4773, %v4750
    %v4784 = vmul.f32 %v4773, %v4751
    %v4785 = vmul.f32 %v4773, %v4752
    %v4786 = vmul.f32 %v4773, %v4753
    %v4787 = vmul.f32 %v4773, %v4754
    %v4788 = vmul.f32 %v4773, %v4755
    %v4789 = vmul.f32 %v4773, %v4756
    %v4790 = vmul.f32 %v4773, %v4757
    %v4791 = vmul.f32 %v4773, %v4758
    %v4792 = vmul.f32 %v4773, %v4759
    %v4793 = vmul.f32 %v4773, %v4760
    %v4794 = vmul.f32 %v4773, %v4761
    %v4795 = vmul.f32 %v4773, %v4762
    %v4796 = vmul.f32 %v4773, %v4763
    %v4797 = vmul.f32 %v4773, %v4764
    %v4798 = vmul.f32 %v4773, %v4765
    %v4799 = vmul.f32 %v4773, %v4766
    %v4800 = vmul.f32 %v4773, %v4767
    %v4801 = vmul.f32 %v4773, %v4768
    %v4802 = vmul.f32 %v4773, %v4769
    %v4803 = vmul.f32 %v4773, %v4770
    %v4804 = vmul.f32 %v4773, %v4771
    %v4805 = vmul.f32 %v4773, %v4772
    %v4806 = vadd.f32 %v4708, %v4774
    %v4807 = vadd.f32 %v4709, %v4775
    %v4808 = vadd.f32 %v4710, %v4776
    %v4809 = vadd.f32 %v4711, %v4777
    %v4810 = vadd.f32 %v4712, %v4778
    %v4811 = vadd.f32 %v4713, %v4779
    %v4812 = vadd.f32 %v4714, %v4780
    %v4813 = vadd.f32 %v4715, %v4781
    %v4814 = vadd.f32 %v4716, %v4782
    %v4815 = vadd.f32 %v4717, %v4783
    %v4816 = vadd.f32 %v4718, %v4784
    %v4817 = vadd.f32 %v4719, %v4785
    %v4818 = vadd.f32 %v4720, %v4786
    %v4819 = vadd.f32 %v4721, %v4787
    %v4820 = vadd.f32 %v4722, %v4788
    %v4821 = vadd.f32 %v4723, %v4789
    %v4822 = vadd.f32 %v4724, %v4790
    %v4823 = vadd.f32 %v4725, %v4791
    %v4824 = vadd.f32 %v4726, %v4792
    %v4825 = vadd.f32 %v4727, %v4793
    %v4826 = vadd.f32 %v4728, %v4794
    %v4827 = vadd.f32 %v4729, %v4795
    %v4828 = vadd.f32 %v4730, %v4796
    %v4829 = vadd.f32 %v4731, %v4797
    %v4830 = vadd.f32 %v4732, %v4798
    %v4831 = vadd.f32 %v4733, %v4799
    %v4832 = vadd.f32 %v4734, %v4800
    %v4833 = vadd.f32 %v4735, %v4801
    %v4834 = vadd.f32 %v4736, %v4802
    %v4835 = vadd.f32 %v4737, %v4803
    %v4836 = vadd.f32 %v4738, %v4804
    %v4837 = vadd.f32 %v4739, %v4805
    %s4838 = sld [smem:[#allocation6 + $0x16]]
    %v4839 = vld [vmem:[%s4642 + $0x2] sm:$0xff]
    %v4840 = vld [vmem:[%s4642 + $0xa] sm:$0xff]
    %v4841 = vld [vmem:[%s4642 + $0x1a] sm:$0xff]
    %v4842 = vld [vmem:[%s4642 + $0x22] sm:$0xff]
    %v4843 = vld [vmem:[%s4642 + $0x32] sm:$0xff]
    %v4844 = vld [vmem:[%s4642 + $0x3a] sm:$0xff]
    %v4845 = vld [vmem:[%s4642 + $0x4a] sm:$0xff]
    %v4846 = vld [vmem:[%s4642 + $0x52] sm:$0xff]
    %v4847 = vld [vmem:[%s4642 + $0x62] sm:$0xff]
    %v4848 = vld [vmem:[%s4642 + $0x6a] sm:$0xff]
    %v4849 = vld [vmem:[%s4642 + $0x7a] sm:$0xff]
    %v4850 = vld [vmem:[%s4642 + $0x82] sm:$0xff]
    %v4851 = vld [vmem:[%s4642 + $0x92] sm:$0xff]
    %v4852 = vld [vmem:[%s4642 + $0x9a] sm:$0xff]
    %v4853 = vld [vmem:[%s4642 + $0xaa] sm:$0xff]
    %v4854 = vld [vmem:[%s4642 + $0xb2] sm:$0xff]
    %v4855 = vld [vmem:[%s4642 + $0xc2] sm:$0xff]
    %v4856 = vld [vmem:[%s4642 + $0xca] sm:$0xff]
    %v4857 = vld [vmem:[%s4642 + $0xda] sm:$0xff]
    %v4858 = vld [vmem:[%s4642 + $0xe2] sm:$0xff]
    %v4859 = vld [vmem:[%s4642 + $0xf2] sm:$0xff]
    %v4860 = vld [vmem:[%s4642 + $0xfa] sm:$0xff]
    %v4861 = vld [vmem:[%s4642 + $0x10a] sm:$0xff]
    %v4862 = vld [vmem:[%s4642 + $0x112] sm:$0xff]
    %v4863 = vld [vmem:[%s4642 + $0x122] sm:$0xff]
    %v4864 = vld [vmem:[%s4642 + $0x12a] sm:$0xff]
    %v4865 = vld [vmem:[%s4642 + $0x13a] sm:$0xff]
    %v4866 = vld [vmem:[%s4642 + $0x142] sm:$0xff]
    %v4867 = vld [vmem:[%s4642 + $0x152] sm:$0xff]
    %v4868 = vld [vmem:[%s4642 + $0x15a] sm:$0xff]
    %v4869 = vld [vmem:[%s4642 + $0x16a] sm:$0xff]
    %v4870 = vld [vmem:[%s4642 + $0x172] sm:$0xff]
    %v4871 = vstv %s4838
    %v4872 = vmul.f32 %v4871, %v4839
    %v4873 = vmul.f32 %v4871, %v4840
    %v4874 = vmul.f32 %v4871, %v4841
    %v4875 = vmul.f32 %v4871, %v4842
    %v4876 = vmul.f32 %v4871, %v4843
    %v4877 = vmul.f32 %v4871, %v4844
    %v4878 = vmul.f32 %v4871, %v4845
    %v4879 = vmul.f32 %v4871, %v4846
    %v4880 = vmul.f32 %v4871, %v4847
    %v4881 = vmul.f32 %v4871, %v4848
    %v4882 = vmul.f32 %v4871, %v4849
    %v4883 = vmul.f32 %v4871, %v4850
    %v4884 = vmul.f32 %v4871, %v4851
    %v4885 = vmul.f32 %v4871, %v4852
    %v4886 = vmul.f32 %v4871, %v4853
    %v4887 = vmul.f32 %v4871, %v4854
    %v4888 = vmul.f32 %v4871, %v4855
    %v4889 = vmul.f32 %v4871, %v4856
    %v4890 = vmul.f32 %v4871, %v4857
    %v4891 = vmul.f32 %v4871, %v4858
    %v4892 = vmul.f32 %v4871, %v4859
    %v4893 = vmul.f32 %v4871, %v4860
    %v4894 = vmul.f32 %v4871, %v4861
    %v4895 = vmul.f32 %v4871, %v4862
    %v4896 = vmul.f32 %v4871, %v4863
    %v4897 = vmul.f32 %v4871, %v4864
    %v4898 = vmul.f32 %v4871, %v4865
    %v4899 = vmul.f32 %v4871, %v4866
    %v4900 = vmul.f32 %v4871, %v4867
    %v4901 = vmul.f32 %v4871, %v4868
    %v4902 = vmul.f32 %v4871, %v4869
    %v4903 = vmul.f32 %v4871, %v4870
    %v4904 = vadd.f32 %v4806, %v4872
    %v4905 = vadd.f32 %v4807, %v4873
    %v4906 = vadd.f32 %v4808, %v4874
    %v4907 = vadd.f32 %v4809, %v4875
    %v4908 = vadd.f32 %v4810, %v4876
    %v4909 = vadd.f32 %v4811, %v4877
    %v4910 = vadd.f32 %v4812, %v4878
    %v4911 = vadd.f32 %v4813, %v4879
    %v4912 = vadd.f32 %v4814, %v4880
    %v4913 = vadd.f32 %v4815, %v4881
    %v4914 = vadd.f32 %v4816, %v4882
    %v4915 = vadd.f32 %v4817, %v4883
    %v4916 = vadd.f32 %v4818, %v4884
    %v4917 = vadd.f32 %v4819, %v4885
    %v4918 = vadd.f32 %v4820, %v4886
    %v4919 = vadd.f32 %v4821, %v4887
    %v4920 = vadd.f32 %v4822, %v4888
    %v4921 = vadd.f32 %v4823, %v4889
    %v4922 = vadd.f32 %v4824, %v4890
    %v4923 = vadd.f32 %v4825, %v4891
    %v4924 = vadd.f32 %v4826, %v4892
    %v4925 = vadd.f32 %v4827, %v4893
    %v4926 = vadd.f32 %v4828, %v4894
    %v4927 = vadd.f32 %v4829, %v4895
    %v4928 = vadd.f32 %v4830, %v4896
    %v4929 = vadd.f32 %v4831, %v4897
    %v4930 = vadd.f32 %v4832, %v4898
    %v4931 = vadd.f32 %v4833, %v4899
    %v4932 = vadd.f32 %v4834, %v4900
    %v4933 = vadd.f32 %v4835, %v4901
    %v4934 = vadd.f32 %v4836, %v4902
    %v4935 = vadd.f32 %v4837, %v4903
    %s4936 = sld [smem:[#allocation6 + $0x17]]
    %v4937 = vld [vmem:[%s4642 + $0x3] sm:$0xff]
    %v4938 = vld [vmem:[%s4642 + $0xb] sm:$0xff]
    %v4939 = vld [vmem:[%s4642 + $0x1b] sm:$0xff]
    %v4940 = vld [vmem:[%s4642 + $0x23] sm:$0xff]
    %v4941 = vld [vmem:[%s4642 + $0x33] sm:$0xff]
    %v4942 = vld [vmem:[%s4642 + $0x3b] sm:$0xff]
    %v4943 = vld [vmem:[%s4642 + $0x4b] sm:$0xff]
    %v4944 = vld [vmem:[%s4642 + $0x53] sm:$0xff]
    %v4945 = vld [vmem:[%s4642 + $0x63] sm:$0xff]
    %v4946 = vld [vmem:[%s4642 + $0x6b] sm:$0xff]
    %v4947 = vld [vmem:[%s4642 + $0x7b] sm:$0xff]
    %v4948 = vld [vmem:[%s4642 + $0x83] sm:$0xff]
    %v4949 = vld [vmem:[%s4642 + $0x93] sm:$0xff]
    %v4950 = vld [vmem:[%s4642 + $0x9b] sm:$0xff]
    %v4951 = vld [vmem:[%s4642 + $0xab] sm:$0xff]
    %v4952 = vld [vmem:[%s4642 + $0xb3] sm:$0xff]
    %v4953 = vld [vmem:[%s4642 + $0xc3] sm:$0xff]
    %v4954 = vld [vmem:[%s4642 + $0xcb] sm:$0xff]
    %v4955 = vld [vmem:[%s4642 + $0xdb] sm:$0xff]
    %v4956 = vld [vmem:[%s4642 + $0xe3] sm:$0xff]
    %v4957 = vld [vmem:[%s4642 + $0xf3] sm:$0xff]
    %v4958 = vld [vmem:[%s4642 + $0xfb] sm:$0xff]
    %v4959 = vld [vmem:[%s4642 + $0x10b] sm:$0xff]
    %v4960 = vld [vmem:[%s4642 + $0x113] sm:$0xff]
    %v4961 = vld [vmem:[%s4642 + $0x123] sm:$0xff]
    %v4962 = vld [vmem:[%s4642 + $0x12b] sm:$0xff]
    %v4963 = vld [vmem:[%s4642 + $0x13b] sm:$0xff]
    %v4964 = vld [vmem:[%s4642 + $0x143] sm:$0xff]
    %v4965 = vld [vmem:[%s4642 + $0x153] sm:$0xff]
    %v4966 = vld [vmem:[%s4642 + $0x15b] sm:$0xff]
    %v4967 = vld [vmem:[%s4642 + $0x16b] sm:$0xff]
    %v4968 = vld [vmem:[%s4642 + $0x173] sm:$0xff]
    %v4969 = vstv %s4936
    %v4970 = vmul.f32 %v4969, %v4937
    %v4971 = vmul.f32 %v4969, %v4938
    %v4972 = vmul.f32 %v4969, %v4939
    %v4973 = vmul.f32 %v4969, %v4940
    %v4974 = vmul.f32 %v4969, %v4941
    %v4975 = vmul.f32 %v4969, %v4942
    %v4976 = vmul.f32 %v4969, %v4943
    %v4977 = vmul.f32 %v4969, %v4944
    %v4978 = vmul.f32 %v4969, %v4945
    %v4979 = vmul.f32 %v4969, %v4946
    %v4980 = vmul.f32 %v4969, %v4947
    %v4981 = vmul.f32 %v4969, %v4948
    %v4982 = vmul.f32 %v4969, %v4949
    %v4983 = vmul.f32 %v4969, %v4950
    %v4984 = vmul.f32 %v4969, %v4951
    %v4985 = vmul.f32 %v4969, %v4952
    %v4986 = vmul.f32 %v4969, %v4953
    %v4987 = vmul.f32 %v4969, %v4954
    %v4988 = vmul.f32 %v4969, %v4955
    %v4989 = vmul.f32 %v4969, %v4956
    %v4990 = vmul.f32 %v4969, %v4957
    %v4991 = vmul.f32 %v4969, %v4958
    %v4992 = vmul.f32 %v4969, %v4959
    %v4993 = vmul.f32 %v4969, %v4960
    %v4994 = vmul.f32 %v4969, %v4961
    %v4995 = vmul.f32 %v4969, %v4962
    %v4996 = vmul.f32 %v4969, %v4963
    %v4997 = vmul.f32 %v4969, %v4964
    %v4998 = vmul.f32 %v4969, %v4965
    %v4999 = vmul.f32 %v4969, %v4966
    %v5000 = vmul.f32 %v4969, %v4967
    %v5001 = vmul.f32 %v4969, %v4968
    %v5002 = vadd.f32 %v4904, %v4970
    %v5003 = vadd.f32 %v4905, %v4971
    %v5004 = vadd.f32 %v4906, %v4972
    %v5005 = vadd.f32 %v4907, %v4973
    %v5006 = vadd.f32 %v4908, %v4974
    %v5007 = vadd.f32 %v4909, %v4975
    %v5008 = vadd.f32 %v4910, %v4976
    %v5009 = vadd.f32 %v4911, %v4977
    %v5010 = vadd.f32 %v4912, %v4978
    %v5011 = vadd.f32 %v4913, %v4979
    %v5012 = vadd.f32 %v4914, %v4980
    %v5013 = vadd.f32 %v4915, %v4981
    %v5014 = vadd.f32 %v4916, %v4982
    %v5015 = vadd.f32 %v4917, %v4983
    %v5016 = vadd.f32 %v4918, %v4984
    %v5017 = vadd.f32 %v4919, %v4985
    %v5018 = vadd.f32 %v4920, %v4986
    %v5019 = vadd.f32 %v4921, %v4987
    %v5020 = vadd.f32 %v4922, %v4988
    %v5021 = vadd.f32 %v4923, %v4989
    %v5022 = vadd.f32 %v4924, %v4990
    %v5023 = vadd.f32 %v4925, %v4991
    %v5024 = vadd.f32 %v4926, %v4992
    %v5025 = vadd.f32 %v4927, %v4993
    %v5026 = vadd.f32 %v4928, %v4994
    %v5027 = vadd.f32 %v4929, %v4995
    %v5028 = vadd.f32 %v4930, %v4996
    %v5029 = vadd.f32 %v4931, %v4997
    %v5030 = vadd.f32 %v4932, %v4998
    %v5031 = vadd.f32 %v4933, %v4999
    %v5032 = vadd.f32 %v4934, %v5000
    %v5033 = vadd.f32 %v4935, %v5001
    %s5034 = sld [smem:[#allocation6 + $0x18]]
    %v5035 = vld [vmem:[%s4642 + $0x4] sm:$0xff]
    %v5036 = vld [vmem:[%s4642 + $0xc] sm:$0xff]
    %v5037 = vld [vmem:[%s4642 + $0x1c] sm:$0xff]
    %v5038 = vld [vmem:[%s4642 + $0x24] sm:$0xff]
    %v5039 = vld [vmem:[%s4642 + $0x34] sm:$0xff]
    %v5040 = vld [vmem:[%s4642 + $0x3c] sm:$0xff]
    %v5041 = vld [vmem:[%s4642 + $0x4c] sm:$0xff]
    %v5042 = vld [vmem:[%s4642 + $0x54] sm:$0xff]
    %v5043 = vld [vmem:[%s4642 + $0x64] sm:$0xff]
    %v5044 = vld [vmem:[%s4642 + $0x6c] sm:$0xff]
    %v5045 = vld [vmem:[%s4642 + $0x7c] sm:$0xff]
    %v5046 = vld [vmem:[%s4642 + $0x84] sm:$0xff]
    %v5047 = vld [vmem:[%s4642 + $0x94] sm:$0xff]
    %v5048 = vld [vmem:[%s4642 + $0x9c] sm:$0xff]
    %v5049 = vld [vmem:[%s4642 + $0xac] sm:$0xff]
    %v5050 = vld [vmem:[%s4642 + $0xb4] sm:$0xff]
    %v5051 = vld [vmem:[%s4642 + $0xc4] sm:$0xff]
    %v5052 = vld [vmem:[%s4642 + $0xcc] sm:$0xff]
    %v5053 = vld [vmem:[%s4642 + $0xdc] sm:$0xff]
    %v5054 = vld [vmem:[%s4642 + $0xe4] sm:$0xff]
    %v5055 = vld [vmem:[%s4642 + $0xf4] sm:$0xff]
    %v5056 = vld [vmem:[%s4642 + $0xfc] sm:$0xff]
    %v5057 = vld [vmem:[%s4642 + $0x10c] sm:$0xff]
    %v5058 = vld [vmem:[%s4642 + $0x114] sm:$0xff]
    %v5059 = vld [vmem:[%s4642 + $0x124] sm:$0xff]
    %v5060 = vld [vmem:[%s4642 + $0x12c] sm:$0xff]
    %v5061 = vld [vmem:[%s4642 + $0x13c] sm:$0xff]
    %v5062 = vld [vmem:[%s4642 + $0x144] sm:$0xff]
    %v5063 = vld [vmem:[%s4642 + $0x154] sm:$0xff]
    %v5064 = vld [vmem:[%s4642 + $0x15c] sm:$0xff]
    %v5065 = vld [vmem:[%s4642 + $0x16c] sm:$0xff]
    %v5066 = vld [vmem:[%s4642 + $0x174] sm:$0xff]
    %v5067 = vstv %s5034
    %v5068 = vmul.f32 %v5067, %v5035
    %v5069 = vmul.f32 %v5067, %v5036
    %v5070 = vmul.f32 %v5067, %v5037
    %v5071 = vmul.f32 %v5067, %v5038
    %v5072 = vmul.f32 %v5067, %v5039
    %v5073 = vmul.f32 %v5067, %v5040
    %v5074 = vmul.f32 %v5067, %v5041
    %v5075 = vmul.f32 %v5067, %v5042
    %v5076 = vmul.f32 %v5067, %v5043
    %v5077 = vmul.f32 %v5067, %v5044
    %v5078 = vmul.f32 %v5067, %v5045
    %v5079 = vmul.f32 %v5067, %v5046
    %v5080 = vmul.f32 %v5067, %v5047
    %v5081 = vmul.f32 %v5067, %v5048
    %v5082 = vmul.f32 %v5067, %v5049
    %v5083 = vmul.f32 %v5067, %v5050
    %v5084 = vmul.f32 %v5067, %v5051
    %v5085 = vmul.f32 %v5067, %v5052
    %v5086 = vmul.f32 %v5067, %v5053
    %v5087 = vmul.f32 %v5067, %v5054
    %v5088 = vmul.f32 %v5067, %v5055
    %v5089 = vmul.f32 %v5067, %v5056
    %v5090 = vmul.f32 %v5067, %v5057
    %v5091 = vmul.f32 %v5067, %v5058
    %v5092 = vmul.f32 %v5067, %v5059
    %v5093 = vmul.f32 %v5067, %v5060
    %v5094 = vmul.f32 %v5067, %v5061
    %v5095 = vmul.f32 %v5067, %v5062
    %v5096 = vmul.f32 %v5067, %v5063
    %v5097 = vmul.f32 %v5067, %v5064
    %v5098 = vmul.f32 %v5067, %v5065
    %v5099 = vmul.f32 %v5067, %v5066
    %v5100 = vadd.f32 %v5002, %v5068
    %v5101 = vadd.f32 %v5003, %v5069
    %v5102 = vadd.f32 %v5004, %v5070
    %v5103 = vadd.f32 %v5005, %v5071
    %v5104 = vadd.f32 %v5006, %v5072
    %v5105 = vadd.f32 %v5007, %v5073
    %v5106 = vadd.f32 %v5008, %v5074
    %v5107 = vadd.f32 %v5009, %v5075
    %v5108 = vadd.f32 %v5010, %v5076
    %v5109 = vadd.f32 %v5011, %v5077
    %v5110 = vadd.f32 %v5012, %v5078
    %v5111 = vadd.f32 %v5013, %v5079
    %v5112 = vadd.f32 %v5014, %v5080
    %v5113 = vadd.f32 %v5015, %v5081
    %v5114 = vadd.f32 %v5016, %v5082
    %v5115 = vadd.f32 %v5017, %v5083
    %v5116 = vadd.f32 %v5018, %v5084
    %v5117 = vadd.f32 %v5019, %v5085
    %v5118 = vadd.f32 %v5020, %v5086
    %v5119 = vadd.f32 %v5021, %v5087
    %v5120 = vadd.f32 %v5022, %v5088
    %v5121 = vadd.f32 %v5023, %v5089
    %v5122 = vadd.f32 %v5024, %v5090
    %v5123 = vadd.f32 %v5025, %v5091
    %v5124 = vadd.f32 %v5026, %v5092
    %v5125 = vadd.f32 %v5027, %v5093
    %v5126 = vadd.f32 %v5028, %v5094
    %v5127 = vadd.f32 %v5029, %v5095
    %v5128 = vadd.f32 %v5030, %v5096
    %v5129 = vadd.f32 %v5031, %v5097
    %v5130 = vadd.f32 %v5032, %v5098
    %v5131 = vadd.f32 %v5033, %v5099
    %v5132 = vld [vmem:[%s6] sm:$0xff]
    %v5133 = vld [vmem:[%s6 + $0x8] sm:$0xff]
    %v5134 = vld [vmem:[%s6 + $0x10] sm:$0xff]
    %v5135 = vld [vmem:[%s6 + $0x18] sm:$0xff]
    %v5136 = vld [vmem:[%s6 + $0x20] sm:$0xff]
    %v5137 = vld [vmem:[%s6 + $0x28] sm:$0xff]
    %v5138 = vld [vmem:[%s6 + $0x30] sm:$0xff]
    %v5139 = vld [vmem:[%s6 + $0x38] sm:$0xff]
    %v5140 = vld [vmem:[%s6 + $0x40] sm:$0xff]
    %v5141 = vld [vmem:[%s6 + $0x48] sm:$0xff]
    %v5142 = vld [vmem:[%s6 + $0x50] sm:$0xff]
    %v5143 = vld [vmem:[%s6 + $0x58] sm:$0xff]
    %v5144 = vld [vmem:[%s6 + $0x60] sm:$0xff]
    %v5145 = vld [vmem:[%s6 + $0x68] sm:$0xff]
    %v5146 = vld [vmem:[%s6 + $0x70] sm:$0xff]
    %v5147 = vld [vmem:[%s6 + $0x78] sm:$0xff]
    %v5148 = vld [vmem:[%s6 + $0x80] sm:$0xff]
    %v5149 = vld [vmem:[%s6 + $0x88] sm:$0xff]
    %v5150 = vld [vmem:[%s6 + $0x90] sm:$0xff]
    %v5151 = vld [vmem:[%s6 + $0x98] sm:$0xff]
    %v5152 = vld [vmem:[%s6 + $0xa0] sm:$0xff]
    %v5153 = vld [vmem:[%s6 + $0xa8] sm:$0xff]
    %v5154 = vld [vmem:[%s6 + $0xb0] sm:$0xff]
    %v5155 = vld [vmem:[%s6 + $0xb8] sm:$0xff]
    %v5156 = vld [vmem:[%s6 + $0xc0] sm:$0xff]
    %v5157 = vld [vmem:[%s6 + $0xc8] sm:$0xff]
    %v5158 = vld [vmem:[%s6 + $0xd0] sm:$0xff]
    %v5159 = vld [vmem:[%s6 + $0xd8] sm:$0xff]
    %v5160 = vld [vmem:[%s6 + $0xe0] sm:$0xff]
    %v5161 = vld [vmem:[%s6 + $0xe8] sm:$0xff]
    %v5162 = vld [vmem:[%s6 + $0xf0] sm:$0xff]
    %v5163 = vld [vmem:[%s6 + $0xf8] sm:$0xff]
    %v5164 = vsub.f32 1.0, %v5132
    %v5165 = vsub.f32 1.0, %v5133
    %v5166 = vsub.f32 1.0, %v5134
    %v5167 = vsub.f32 1.0, %v5135
    %v5168 = vsub.f32 1.0, %v5136
    %v5169 = vsub.f32 1.0, %v5137
    %v5170 = vsub.f32 1.0, %v5138
    %v5171 = vsub.f32 1.0, %v5139
    %v5172 = vsub.f32 1.0, %v5140
    %v5173 = vsub.f32 1.0, %v5141
    %v5174 = vsub.f32 1.0, %v5142
    %v5175 = vsub.f32 1.0, %v5143
    %v5176 = vsub.f32 1.0, %v5144
    %v5177 = vsub.f32 1.0, %v5145
    %v5178 = vsub.f32 1.0, %v5146
    %v5179 = vsub.f32 1.0, %v5147
    %v5180 = vsub.f32 1.0, %v5148
    %v5181 = vsub.f32 1.0, %v5149
    %v5182 = vsub.f32 1.0, %v5150
    %v5183 = vsub.f32 1.0, %v5151
    %v5184 = vsub.f32 1.0, %v5152
    %v5185 = vsub.f32 1.0, %v5153
    %v5186 = vsub.f32 1.0, %v5154
    %v5187 = vsub.f32 1.0, %v5155
    %v5188 = vsub.f32 1.0, %v5156
    %v5189 = vsub.f32 1.0, %v5157
    %v5190 = vsub.f32 1.0, %v5158
    %v5191 = vsub.f32 1.0, %v5159
    %v5192 = vsub.f32 1.0, %v5160
    %v5193 = vsub.f32 1.0, %v5161
    %v5194 = vsub.f32 1.0, %v5162
    %v5195 = vsub.f32 1.0, %v5163
    %5197 = vset.pattern.permute.xlu0 0
    %5198 = vperm.xlu0 %5197, %v5164
    %v5199 = vpop.permute.xlu0 %5198
    %5202 = vset.pattern.permute.xlu0 0
    %5203 = vperm.xlu0 %5202, %v5165
    %v5204 = vpop.permute.xlu0 %5203
    %5207 = vset.pattern.permute.xlu0 0
    %5208 = vperm.xlu0 %5207, %v5166
    %v5209 = vpop.permute.xlu0 %5208
    %5212 = vset.pattern.permute.xlu0 0
    %5213 = vperm.xlu0 %5212, %v5167
    %v5214 = vpop.permute.xlu0 %5213
    %5217 = vset.pattern.permute.xlu0 0
    %5218 = vperm.xlu0 %5217, %v5168
    %v5219 = vpop.permute.xlu0 %5218
    %5222 = vset.pattern.permute.xlu0 0
    %5223 = vperm.xlu0 %5222, %v5169
    %v5224 = vpop.permute.xlu0 %5223
    %5227 = vset.pattern.permute.xlu0 0
    %5228 = vperm.xlu0 %5227, %v5170
    %v5229 = vpop.permute.xlu0 %5228
    %5232 = vset.pattern.permute.xlu0 0
    %5233 = vperm.xlu0 %5232, %v5171
    %v5234 = vpop.permute.xlu0 %5233
    %5237 = vset.pattern.permute.xlu0 0
    %5238 = vperm.xlu0 %5237, %v5172
    %v5239 = vpop.permute.xlu0 %5238
    %5242 = vset.pattern.permute.xlu0 0
    %5243 = vperm.xlu0 %5242, %v5173
    %v5244 = vpop.permute.xlu0 %5243
    %5247 = vset.pattern.permute.xlu0 0
    %5248 = vperm.xlu0 %5247, %v5174
    %v5249 = vpop.permute.xlu0 %5248
    %5252 = vset.pattern.permute.xlu0 0
    %5253 = vperm.xlu0 %5252, %v5175
    %v5254 = vpop.permute.xlu0 %5253
    %5257 = vset.pattern.permute.xlu0 0
    %5258 = vperm.xlu0 %5257, %v5176
    %v5259 = vpop.permute.xlu0 %5258
    %5262 = vset.pattern.permute.xlu0 0
    %5263 = vperm.xlu0 %5262, %v5177
    %v5264 = vpop.permute.xlu0 %5263
    %5267 = vset.pattern.permute.xlu0 0
    %5268 = vperm.xlu0 %5267, %v5178
    %v5269 = vpop.permute.xlu0 %5268
    %5272 = vset.pattern.permute.xlu0 0
    %5273 = vperm.xlu0 %5272, %v5179
    %v5274 = vpop.permute.xlu0 %5273
    %5277 = vset.pattern.permute.xlu0 0
    %5278 = vperm.xlu0 %5277, %v5180
    %v5279 = vpop.permute.xlu0 %5278
    %5282 = vset.pattern.permute.xlu0 0
    %5283 = vperm.xlu0 %5282, %v5181
    %v5284 = vpop.permute.xlu0 %5283
    %5287 = vset.pattern.permute.xlu0 0
    %5288 = vperm.xlu0 %5287, %v5182
    %v5289 = vpop.permute.xlu0 %5288
    %5292 = vset.pattern.permute.xlu0 0
    %5293 = vperm.xlu0 %5292, %v5183
    %v5294 = vpop.permute.xlu0 %5293
    %5297 = vset.pattern.permute.xlu0 0
    %5298 = vperm.xlu0 %5297, %v5184
    %v5299 = vpop.permute.xlu0 %5298
    %5302 = vset.pattern.permute.xlu0 0
    %5303 = vperm.xlu0 %5302, %v5185
    %v5304 = vpop.permute.xlu0 %5303
    %5307 = vset.pattern.permute.xlu0 0
    %5308 = vperm.xlu0 %5307, %v5186
    %v5309 = vpop.permute.xlu0 %5308
    %5312 = vset.pattern.permute.xlu0 0
    %5313 = vperm.xlu0 %5312, %v5187
    %v5314 = vpop.permute.xlu0 %5313
    %5317 = vset.pattern.permute.xlu0 0
    %5318 = vperm.xlu0 %5317, %v5188
    %v5319 = vpop.permute.xlu0 %5318
    %5322 = vset.pattern.permute.xlu0 0
    %5323 = vperm.xlu0 %5322, %v5189
    %v5324 = vpop.permute.xlu0 %5323
    %5327 = vset.pattern.permute.xlu0 0
    %5328 = vperm.xlu0 %5327, %v5190
    %v5329 = vpop.permute.xlu0 %5328
    %5332 = vset.pattern.permute.xlu0 0
    %5333 = vperm.xlu0 %5332, %v5191
    %v5334 = vpop.permute.xlu0 %5333
    %5337 = vset.pattern.permute.xlu0 0
    %5338 = vperm.xlu0 %5337, %v5192
    %v5339 = vpop.permute.xlu0 %5338
    %5342 = vset.pattern.permute.xlu0 0
    %5343 = vperm.xlu0 %5342, %v5193
    %v5344 = vpop.permute.xlu0 %5343
    %5347 = vset.pattern.permute.xlu0 0
    %5348 = vperm.xlu0 %5347, %v5194
    %v5349 = vpop.permute.xlu0 %5348
    %5352 = vset.pattern.permute.xlu0 0
    %5353 = vperm.xlu0 %5352, %v5195
    %v5354 = vpop.permute.xlu0 %5353
    %v5356 = vmul.f32 %v5100, %v5199
    %v5357 = vmul.f32 %v5101, %v5204
    %v5358 = vmul.f32 %v5102, %v5209
    %v5359 = vmul.f32 %v5103, %v5214
    %v5360 = vmul.f32 %v5104, %v5219
    %v5361 = vmul.f32 %v5105, %v5224
    %v5362 = vmul.f32 %v5106, %v5229
    %v5363 = vmul.f32 %v5107, %v5234
    %v5364 = vmul.f32 %v5108, %v5239
    %v5365 = vmul.f32 %v5109, %v5244
    %v5366 = vmul.f32 %v5110, %v5249
    %v5367 = vmul.f32 %v5111, %v5254
    %v5368 = vmul.f32 %v5112, %v5259
    %v5369 = vmul.f32 %v5113, %v5264
    %v5370 = vmul.f32 %v5114, %v5269
    %v5371 = vmul.f32 %v5115, %v5274
    %v5372 = vmul.f32 %v5116, %v5279
    %v5373 = vmul.f32 %v5117, %v5284
    %v5374 = vmul.f32 %v5118, %v5289
    %v5375 = vmul.f32 %v5119, %v5294
    %v5376 = vmul.f32 %v5120, %v5299
    %v5377 = vmul.f32 %v5121, %v5304
    %v5378 = vmul.f32 %v5122, %v5309
    %v5379 = vmul.f32 %v5123, %v5314
    %v5380 = vmul.f32 %v5124, %v5319
    %v5381 = vmul.f32 %v5125, %v5324
    %v5382 = vmul.f32 %v5126, %v5329
    %v5383 = vmul.f32 %v5127, %v5334
    %v5384 = vmul.f32 %v5128, %v5339
    %v5385 = vmul.f32 %v5129, %v5344
    %v5386 = vmul.f32 %v5130, %v5349
    %v5387 = vmul.f32 %v5131, %v5354
    %s5388 = sld [smem:[#allocation3]]
    %v5389 = vstv %s5388
    %v5390 = vadd.f32 %v5356, %v5389
    %v5391 = vadd.f32 %v5357, %v5389
    %v5392 = vadd.f32 %v5358, %v5389
    %v5393 = vadd.f32 %v5359, %v5389
    %v5394 = vadd.f32 %v5360, %v5389
    %v5395 = vadd.f32 %v5361, %v5389
    %v5396 = vadd.f32 %v5362, %v5389
    %v5397 = vadd.f32 %v5363, %v5389
    %v5398 = vadd.f32 %v5364, %v5389
    %v5399 = vadd.f32 %v5365, %v5389
    %v5400 = vadd.f32 %v5366, %v5389
    %v5401 = vadd.f32 %v5367, %v5389
    %v5402 = vadd.f32 %v5368, %v5389
    %v5403 = vadd.f32 %v5369, %v5389
    %v5404 = vadd.f32 %v5370, %v5389
    %v5405 = vadd.f32 %v5371, %v5389
    %v5406 = vadd.f32 %v5372, %v5389
    %v5407 = vadd.f32 %v5373, %v5389
    %v5408 = vadd.f32 %v5374, %v5389
    %v5409 = vadd.f32 %v5375, %v5389
    %v5410 = vadd.f32 %v5376, %v5389
    %v5411 = vadd.f32 %v5377, %v5389
    %v5412 = vadd.f32 %v5378, %v5389
    %v5413 = vadd.f32 %v5379, %v5389
    %v5414 = vadd.f32 %v5380, %v5389
    %v5415 = vadd.f32 %v5381, %v5389
    %v5416 = vadd.f32 %v5382, %v5389
    %v5417 = vadd.f32 %v5383, %v5389
    %v5418 = vadd.f32 %v5384, %v5389
    %v5419 = vadd.f32 %v5385, %v5389
    %v5420 = vadd.f32 %v5386, %v5389
    %v5421 = vadd.f32 %v5387, %v5389
    %v5422 = vmax.f32 %v5390, 0.0
    %v5423 = vmax.f32 %v5391, 0.0
    %v5424 = vmax.f32 %v5392, 0.0
    %v5425 = vmax.f32 %v5393, 0.0
    %v5426 = vmax.f32 %v5394, 0.0
    %v5427 = vmax.f32 %v5395, 0.0
    %v5428 = vmax.f32 %v5396, 0.0
    %v5429 = vmax.f32 %v5397, 0.0
    %v5430 = vmax.f32 %v5398, 0.0
    %v5431 = vmax.f32 %v5399, 0.0
    %v5432 = vmax.f32 %v5400, 0.0
    %v5433 = vmax.f32 %v5401, 0.0
    %v5434 = vmax.f32 %v5402, 0.0
    %v5435 = vmax.f32 %v5403, 0.0
    %v5436 = vmax.f32 %v5404, 0.0
    %v5437 = vmax.f32 %v5405, 0.0
    %v5438 = vmax.f32 %v5406, 0.0
    %v5439 = vmax.f32 %v5407, 0.0
    %v5440 = vmax.f32 %v5408, 0.0
    %v5441 = vmax.f32 %v5409, 0.0
    %v5442 = vmax.f32 %v5410, 0.0
    %v5443 = vmax.f32 %v5411, 0.0
    %v5444 = vmax.f32 %v5412, 0.0
    %v5445 = vmax.f32 %v5413, 0.0
    %v5446 = vmax.f32 %v5414, 0.0
    %v5447 = vmax.f32 %v5415, 0.0
    %v5448 = vmax.f32 %v5416, 0.0
    %v5449 = vmax.f32 %v5417, 0.0
    %v5450 = vmax.f32 %v5418, 0.0
    %v5451 = vmax.f32 %v5419, 0.0
    %v5452 = vmax.f32 %v5420, 0.0
    %v5453 = vmax.f32 %v5421, 0.0
    %v5454 = vmin.f32 %v5422, 1.0
    %v5455 = vmin.f32 %v5423, 1.0
    %v5456 = vmin.f32 %v5424, 1.0
    %v5457 = vmin.f32 %v5425, 1.0
    %v5458 = vmin.f32 %v5426, 1.0
    %v5459 = vmin.f32 %v5427, 1.0
    %v5460 = vmin.f32 %v5428, 1.0
    %v5461 = vmin.f32 %v5429, 1.0
    %v5462 = vmin.f32 %v5430, 1.0
    %v5463 = vmin.f32 %v5431, 1.0
    %v5464 = vmin.f32 %v5432, 1.0
    %v5465 = vmin.f32 %v5433, 1.0
    %v5466 = vmin.f32 %v5434, 1.0
    %v5467 = vmin.f32 %v5435, 1.0
    %v5468 = vmin.f32 %v5436, 1.0
    %v5469 = vmin.f32 %v5437, 1.0
    %v5470 = vmin.f32 %v5438, 1.0
    %v5471 = vmin.f32 %v5439, 1.0
    %v5472 = vmin.f32 %v5440, 1.0
    %v5473 = vmin.f32 %v5441, 1.0
    %v5474 = vmin.f32 %v5442, 1.0
    %v5475 = vmin.f32 %v5443, 1.0
    %v5476 = vmin.f32 %v5444, 1.0
    %v5477 = vmin.f32 %v5445, 1.0
    %v5478 = vmin.f32 %v5446, 1.0
    %v5479 = vmin.f32 %v5447, 1.0
    %v5480 = vmin.f32 %v5448, 1.0
    %v5481 = vmin.f32 %v5449, 1.0
    %v5482 = vmin.f32 %v5450, 1.0
    %v5483 = vmin.f32 %v5451, 1.0
    %v5484 = vmin.f32 %v5452, 1.0
    %v5485 = vmin.f32 %v5453, 1.0
    %5486 = vst [vmem:[%s7] sm:$0xff] %v5454
    %5487 = vst [vmem:[%s7 + $0x8] sm:$0xff] %v5455
    %5488 = vst [vmem:[%s7 + $0x10] sm:$0xff] %v5456
    %5489 = vst [vmem:[%s7 + $0x18] sm:$0xff] %v5457
    %5490 = vst [vmem:[%s7 + $0x20] sm:$0xff] %v5458
    %5491 = vst [vmem:[%s7 + $0x28] sm:$0xff] %v5459
    %5492 = vst [vmem:[%s7 + $0x30] sm:$0xff] %v5460
    %5493 = vst [vmem:[%s7 + $0x38] sm:$0xff] %v5461
    %5494 = vst [vmem:[%s7 + $0x40] sm:$0xff] %v5462
    %5495 = vst [vmem:[%s7 + $0x48] sm:$0xff] %v5463
    %5496 = vst [vmem:[%s7 + $0x50] sm:$0xff] %v5464
    %5497 = vst [vmem:[%s7 + $0x58] sm:$0xff] %v5465
    %5498 = vst [vmem:[%s7 + $0x60] sm:$0xff] %v5466
    %5499 = vst [vmem:[%s7 + $0x68] sm:$0xff] %v5467
    %5500 = vst [vmem:[%s7 + $0x70] sm:$0xff] %v5468
    %5501 = vst [vmem:[%s7 + $0x78] sm:$0xff] %v5469
    %5502 = vst [vmem:[%s7 + $0x80] sm:$0xff] %v5470
    %5503 = vst [vmem:[%s7 + $0x88] sm:$0xff] %v5471
    %5504 = vst [vmem:[%s7 + $0x90] sm:$0xff] %v5472
    %5505 = vst [vmem:[%s7 + $0x98] sm:$0xff] %v5473
    %5506 = vst [vmem:[%s7 + $0xa0] sm:$0xff] %v5474
    %5507 = vst [vmem:[%s7 + $0xa8] sm:$0xff] %v5475
    %5508 = vst [vmem:[%s7 + $0xb0] sm:$0xff] %v5476
    %5509 = vst [vmem:[%s7 + $0xb8] sm:$0xff] %v5477
    %5510 = vst [vmem:[%s7 + $0xc0] sm:$0xff] %v5478
    %5511 = vst [vmem:[%s7 + $0xc8] sm:$0xff] %v5479
    %5512 = vst [vmem:[%s7 + $0xd0] sm:$0xff] %v5480
    %5513 = vst [vmem:[%s7 + $0xd8] sm:$0xff] %v5481
    %5514 = vst [vmem:[%s7 + $0xe0] sm:$0xff] %v5482
    %5515 = vst [vmem:[%s7 + $0xe8] sm:$0xff] %v5483
    %5516 = vst [vmem:[%s7 + $0xf0] sm:$0xff] %v5484
    %5517 = vst [vmem:[%s7 + $0xf8] sm:$0xff] %v5485
    // Predicated region
    $region42: #{_augment.1} parent=1 // pred_check
      _
    $region43: #{_augment.1} parent=1 // pred_check_branch
      %5519 = sbr.rel (0) target = $region45
    $region44: #{_augment.1} parent=1 // pred_region
      _
    $region45: #{_augment.1} parent=1 // pred_fallthru
      _
    // Predicated region
    $region46: #{_augment.1} parent=1 // pred_check
      _
    $region47: #{_augment.1} parent=1 // pred_check_branch
      %5521 = sbr.rel (0) target = $region49
    $region48: #{_augment.1} parent=1 // pred_region
      _
    $region49: #{_augment.1} parent=1 // pred_fallthru
      _
    %5522 = vsyncpa [#allocation5], 1
    %5523 = vsyncpa [#allocation7], 1

</llo_original>
